<compile_context>
chip_gen: v5e
topology: v5e:2x2
jax: 0.10.0
libtpu: 0.0.40
codegen_flags: <defaults>
</compile_context>

<pallas_src>
import functools
import math

import jax
import jax.numpy as jnp
from jax import lax
from jax.experimental import pallas as pl
from jax.experimental.pallas import tpu as pltpu


def _round_up(v, m):
    return (v + m - 1) // m * m


def _sigmoid(x):
    # logistic written in tanh form: a single EUP op, no VPU divide on the
    # serial critical path.
    return 0.5 * (jnp.tanh(0.5 * x) + 1.0)


def iterative_lstm_kernel(
    emb_ref, last_t_ref,
    w_ih_ref, w_hh_ref, b_ref,
    w1e_ref, w1h_ref, b1_ref, w2_ref, b2_ref,
    out_w_ref, out_b_ref,
    logits_ref,
    gx_ref, ep_ref, a_ref, sel_ref,
    *, B, T, BT, Ep, Hp, iterations, unroll):
    f32 = jnp.float32
    cdt = jnp.bfloat16

    # ---- hoisted precompute: two big bf16 MXU matmuls over all (t, b) rows --
    emb2d = emb_ref[...].reshape(T * BT, Ep)                          # bf16
    gx_ref[...] = (jnp.dot(emb2d, w_ih_ref[...], preferred_element_type=f32)
                   + b_ref[...]).reshape(T, BT, 4 * Hp)
    ep_ref[...] = jnp.dot(emb2d, w1e_ref[...],
                          preferred_element_type=f32).reshape(T, BT, Ep)

    # One-hot mask selecting the hidden state at the last non-pad position.
    # Rows with last_t == -1 (e.g. all-pad rows) select nothing -> zeros,
    # matching the PyTorch masked_fill_ + gather result (except the exotic
    # index -1 wrap of a fully padded row, which the reference never hits).
    t_iota = lax.broadcasted_iota(jnp.int32, (T, BT, Hp), 0)
    sel_ref[...] = (t_iota == last_t_ref[...][None, :, :]).astype(f32)

    def cell(gx, hx, cx):
        gates = gx + jnp.dot(hx.astype(cdt), w_hh_ref[...],
                             preferred_element_type=f32)              # (BT,4Hp)
        i = _sigmoid(gates[:, 0 * Hp:1 * Hp])
        f = _sigmoid(gates[:, 1 * Hp:2 * Hp])
        g = jnp.tanh(gates[:, 2 * Hp:3 * Hp])
        o = _sigmoid(gates[:, 3 * Hp:4 * Hp])
        cx_new = f * cx + i * g
        hx_new = o * jnp.tanh(cx_new)
        return hx_new, cx_new

    def step_plain(t, carry):
        hx, cx, last = carry
        hx, cx = cell(gx_ref[t], hx, cx)
        last = last + hx * sel_ref[t]
        return hx, cx, last

    def step_gated(t, carry):
        hx, cx, last = carry
        a = a_ref[t]                                                  # (BT, Hp)
        hx_new, cx_new = cell(gx_ref[t], hx, cx)
        hx = a * hx_new + (1.0 - a) * hx
        cx = a * cx_new + (1.0 - a) * cx
        last = last + hx * sel_ref[t]
        return hx, cx, last

    hx = jnp.zeros((BT, Hp), f32)
    cx = jnp.zeros((BT, Hp), f32)
    last = hx

    for iter_ind in range(iterations):          # static & small: keep unrolled
        if iter_ind > 0:
            # Attention scores from the start-of-iteration hidden state,
            # batched over all T positions (dropout = identity in eval mode).
            hx_proj = jnp.dot(hx.astype(cdt), w1h_ref[...],
                              preferred_element_type=f32)             # (BT, Ep)
            h1 = jnp.tanh(ep_ref[...] + hx_proj[None, :, :]
                          + b1_ref[...][None])                        # (T,BT,Ep)
            logit = (jnp.sum(h1 * w2_ref[...][None], axis=-1, keepdims=True)
                     + b2_ref[...][None])                             # (T,BT,1)
            a_ref[...] = jnp.broadcast_to(_sigmoid(logit), (T, BT, Hp))

        last = jnp.zeros((BT, Hp), f32)
        body = step_plain if iter_ind == 0 else step_gated
        hx, cx, last = lax.fori_loop(0, T, body, (hx, cx, last), unroll=unroll)
        if B == 1:
            last = hx                             # PyTorch B == 1 special case
        hx = last
        cx = jnp.zeros((BT, Hp), f32)

    # final projection (dropout = identity in eval mode), f32 for precision
    logits_ref[...] = (jnp.dot(last, out_w_ref[...], preferred_element_type=f32)
                       + out_b_ref[...])


def iterative_lstm_forward(x_tokens, params, *, iterations):
    f32 = jnp.float32
    bf16 = jnp.bfloat16

    B, T = x_tokens.shape
    E = params["embed"].shape[1]
    H = params["w_hh"].shape[0]
    O = params["out_w"].shape[1]

    # lane/sublane friendly padded sizes
    Ep = _round_up(E, 128)
    Hp = _round_up(H, 128)
    Op = _round_up(O, 128)
    Bp = _round_up(B, 16)             # 16: bf16 sublane packing
    BT = math.gcd(Bp, 64)             # batch tile (parallel grid axis)

    # ---- XLA glue: embedding lookup, padding, (B,T,E) -> (T,Bp,Ep) layout ---
    emb = jnp.take(params["embed"], x_tokens, axis=0).astype(f32)    # (B,T,E)
    emb = jnp.pad(emb, ((0, Bp - B), (0, 0), (0, Ep - E)))
    emb_tbe = jnp.transpose(emb, (1, 0, 2)).astype(bf16)             # (T,Bp,Ep)

    # last non-pad position per row (padding_idx == 1); -1 selects nothing
    non_pad = x_tokens != 1
    lengths = jnp.sum(non_pad, axis=1).astype(jnp.int32)             # (B,)
    idx = jnp.clip(lengths - 1, 0, T - 1)
    tok_at = jnp.take_along_axis(x_tokens, idx[:, None], axis=1)[:, 0]
    valid = (lengths > 0) & (tok_at != 1)
    last_t = jnp.where(valid, lengths - 1, -1).astype(jnp.int32)
    last_t = jnp.pad(last_t, (0, Bp - B), constant_values=-1)[:, None]  # (Bp,1)

    def pad2(a, r, c):
        return jnp.pad(a, ((0, r - a.shape[0]), (0, c - a.shape[1])))

    def pad_gate_cols(w, rows_to):    # (R, 4H) -> (rows_to, 4*Hp), per-gate pad
        R = w.shape[0]
        w4 = w.reshape(R, 4, H)
        w4 = jnp.pad(w4, ((0, rows_to - R), (0, 0), (0, Hp - H)))
        return w4.reshape(rows_to, 4 * Hp)

    w_ih = pad_gate_cols(params["w_ih"], Ep).astype(bf16)             # (Ep,4Hp)
    w_hh = pad_gate_cols(params["w_hh"], Hp).astype(bf16)             # (Hp,4Hp)
    b = pad_gate_cols(params["b_ih"] + params["b_hh"], 1).astype(f32)

    att_w1 = params["att_w1"]
    w1e = pad2(att_w1[:E, :], Ep, Ep).astype(bf16)
    w1h = pad2(att_w1[E:, :], Hp, Ep).astype(bf16)
    b1 = pad2(params["att_b1"], 1, Ep).astype(f32)
    w2 = pad2(params["att_w2"].T, 1, Ep).astype(f32)                  # (1, Ep)
    b2 = params["att_b2"].astype(f32)                                 # (1, 1)

    out_w = pad2(params["out_w"], Hp, Op).astype(f32)
    out_b = pad2(params["out_b"], 1, Op).astype(f32)

    kernel = functools.partial(
        iterative_lstm_kernel, B=B, T=T, BT=BT, Ep=Ep, Hp=Hp,
        iterations=iterations, unroll=bool(T <= 32))

    logits = pl.pallas_call(
        kernel,
        out_shape=jax.ShapeDtypeStruct((Bp, Op), f32),
        grid=(Bp // BT,),
        in_specs=[
            pl.BlockSpec((T, BT, Ep), lambda i: (0, i, 0)),    # emb (T,Bp,Ep)
            pl.BlockSpec((BT, 1), lambda i: (i, 0)),           # last_t
            pl.BlockSpec((Ep, 4 * Hp), lambda i: (0, 0)),      # w_ih
            pl.BlockSpec((Hp, 4 * Hp), lambda i: (0, 0)),      # w_hh
            pl.BlockSpec((1, 4 * Hp), lambda i: (0, 0)),       # lstm bias
            pl.BlockSpec((Ep, Ep), lambda i: (0, 0)),          # att fc1 (emb)
            pl.BlockSpec((Hp, Ep), lambda i: (0, 0)),          # att fc1 (hx)
            pl.BlockSpec((1, Ep), lambda i: (0, 0)),           # att b1
            pl.BlockSpec((1, Ep), lambda i: (0, 0)),           # att w2 (row)
            pl.BlockSpec((1, 1), lambda i: (0, 0)),            # att b2
            pl.BlockSpec((Hp, Op), lambda i: (0, 0)),          # out_w
            pl.BlockSpec((1, Op), lambda i: (0, 0)),           # out_b
        ],
        out_specs=pl.BlockSpec((BT, Op), lambda i: (i, 0)),
        scratch_shapes=[
            pltpu.VMEM((T, BT, 4 * Hp), f32),   # gates_x = emb @ W_ih + b
            pltpu.VMEM((T, BT, Ep), f32),       # emb @ att_W1[:E]
            pltpu.VMEM((T, BT, Hp), f32),       # broadcast attention scores
            pltpu.VMEM((T, BT, Hp), f32),       # last-position select mask
        ],
        compiler_params=pltpu.CompilerParams(
            dimension_semantics=("parallel",)),
        # TODO(synk): for very long T on v7x (64 MiB VMEM), stream emb/gates_x
        # over T with pltpu.emit_pipeline instead of keeping them fully resident.
    )(emb_tbe, last_t, w_ih, w_hh, b, w1e, w1h, b1, w2, b2, out_w, out_b)

    return logits[:B, :O]


def init_params(key, vocab_size, E, H, O):
    ks = jax.random.split(key, 10)

    def u(k, shape, scale):
        return jax.random.uniform(k, shape, jnp.float32, -scale, scale)

    stdv_lstm = 1.0 / math.sqrt(H)
    stdv_att = 1.0 / math.sqrt(E)      # attention hidden_dim == embedding_dim
    stdv_out = 1.0 / math.sqrt(H)

    embed = jax.random.normal(ks[0], (vocab_size, E), jnp.float32)
    embed = embed.at[1].set(0.0)       # padding_idx = 1

    return dict(
        embed=embed,
        w_ih=u(ks[1], (E, 4 * H), stdv_lstm),
        w_hh=u(ks[2], (H, 4 * H), stdv_lstm),
        b_ih=u(ks[3], (1, 4 * H), stdv_lstm),
        b_hh=u(ks[4], (1, 4 * H), stdv_lstm),
        att_w1=u(ks[5], (E + H, E), stdv_att),
        att_b1=u(ks[6], (1, E), stdv_att),
        att_w2=u(ks[7], (E, 1), stdv_att),
        att_b2=u(ks[8], (1, 1), stdv_att),
        out_w=u(ks[9], (H, O), stdv_out),
        out_b=jnp.zeros((1, O), jnp.float32),
    )


def reference_forward(x_tokens, params, *, iterations):
    """Pure-JAX f32 mirror of the PyTorch forward, for a correctness check."""
    B, T = x_tokens.shape
    H = params["w_hh"].shape[0]
    emb = jnp.take(params["embed"], x_tokens, axis=0)
    pad = (x_tokens == 1)
    bias = params["b_ih"] + params["b_hh"]

    def cell(x_t, hx, cx):
        gates = x_t @ params["w_ih"] + hx @ params["w_hh"] + bias
        i, f, g, o = jnp.split(gates, 4, axis=1)
        i, f, o = jax.nn.sigmoid(i), jax.nn.sigmoid(f), jax.nn.sigmoid(o)
        g = jnp.tanh(g)
        cx_new = f * cx + i * g
        hx_new = o * jnp.tanh(cx_new)
        return hx_new, cx_new

    hx = jnp.zeros((B, H), jnp.float32)
    cx = jnp.zeros((B, H), jnp.float32)
    lengths = jnp.sum(~pad, axis=1)
    last = hx
    for iter_ind in range(iterations):
        if iter_ind > 0:
            hx_exp = jnp.broadcast_to(hx[:, None, :], (B, T, H))
            att_in = jnp.concatenate([emb, hx_exp], axis=2).reshape(B * T, -1)
            h1 = jnp.tanh(att_in @ params["att_w1"] + params["att_b1"])
            scores = jax.nn.sigmoid(
                h1 @ params["att_w2"] + params["att_b2"]).reshape(B, T)
        outputs = []
        for t in range(T):
            hx_new, cx_new = cell(emb[:, t, :], hx, cx)
            if iter_ind == 0:
                hx, cx = hx_new, cx_new
            else:
                a = scores[:, t:t + 1]
                hx = a * hx_new + (1.0 - a) * hx
                cx = a * cx_new + (1.0 - a) * cx
            outputs.append(hx)
        if B == 1:
            last = hx
        else:
            outs = jnp.stack(outputs, axis=1)                      # (B, T, H)
            outs = jnp.where(pad[:, :, None], 0.0, outs)
            last = outs[jnp.arange(B), lengths - 1]
        hx = last
        cx = jnp.zeros((B, H), jnp.float32)
    return last @ params["out_w"] + params["out_b"]


if __name__ == "__main__":
    B, T, E, H, O = 2, 8, 32, 32, 4
    vocab_size, iterations = 16, 2

    key = jax.random.PRNGKey(0)
    pkey, xkey = jax.random.split(key)
    params = init_params(pkey, vocab_size, E, H, O)

    x = jax.random.randint(xkey, (B, T), 2, vocab_size, dtype=jnp.int32)
    x = x.at[0, 6:].set(1)   # trailing pad tokens (padding_idx == 1) in row 0

    logits = iterative_lstm_forward(x, params, iterations=iterations)
    logits = jax.block_until_ready(logits)

    ref = reference_forward(x, params, iterations=iterations)
    assert logits.shape == (B, O)
    # kernel feeds bf16 into the MXU (f32 accumulate); allow small drift vs f32 ref
    assert jnp.allclose(logits, ref, atol=2e-2, rtol=2e-2), (logits, ref)
    print("KERNEL_OK")
</pallas_src>

<mosaic_0001>
module attributes {stable_mosaic.version = 11 : i64} {
  func.func @iterative_lstm_kernel(%arg0: i32, %arg1: memref<8x16x128xbf16, #tpu.memory_space<vmem>>, %arg2: memref<16x1xi32, #tpu.memory_space<vmem>>, %arg3: memref<128x512xbf16, #tpu.memory_space<vmem>>, %arg4: memref<128x512xbf16, #tpu.memory_space<vmem>>, %arg5: memref<1x512xf32, #tpu.memory_space<vmem>>, %arg6: memref<128x128xbf16, #tpu.memory_space<vmem>>, %arg7: memref<128x128xbf16, #tpu.memory_space<vmem>>, %arg8: memref<1x128xf32, #tpu.memory_space<vmem>>, %arg9: memref<1x128xf32, #tpu.memory_space<vmem>>, %arg10: memref<1x1xf32, #tpu.memory_space<vmem>>, %arg11: memref<128x128xf32, #tpu.memory_space<vmem>>, %arg12: memref<1x128xf32, #tpu.memory_space<vmem>>, %arg13: memref<16x128xf32, #tpu.memory_space<vmem>>, %arg14: memref<8x16x512xf32, #tpu.memory_space<vmem>>, %arg15: memref<8x16x128xf32, #tpu.memory_space<vmem>>, %arg16: memref<8x16x128xf32, #tpu.memory_space<vmem>>, %arg17: memref<8x16x128xf32, #tpu.memory_space<vmem>>) attributes {dimension_semantics = [#tpu.dimension_semantics<parallel>], iteration_bounds = array<i64: 1>, scalar_prefetch = 0 : i64, scratch_operands = 4 : i64, tpu.core_type = #tpu.core_type<tc>, window_params = [{transform_indices = @transform_0, window_bounds = array<i64: 8, 16, 128>}, {transform_indices = @transform_1, window_bounds = array<i64: 16, 1>}, {pipeline_mode = #tpu.pipeline_mode<synchronous>, transform_indices = @transform_2, window_bounds = array<i64: 128, 512>}, {pipeline_mode = #tpu.pipeline_mode<synchronous>, transform_indices = @transform_3, window_bounds = array<i64: 128, 512>}, {pipeline_mode = #tpu.pipeline_mode<synchronous>, transform_indices = @transform_4, window_bounds = array<i64: 1, 512>}, {pipeline_mode = #tpu.pipeline_mode<synchronous>, transform_indices = @transform_5, window_bounds = array<i64: 128, 128>}, {pipeline_mode = #tpu.pipeline_mode<synchronous>, transform_indices = @transform_6, window_bounds = array<i64: 128, 128>}, {pipeline_mode = #tpu.pipeline_mode<synchronous>, transform_indices = @transform_7, window_bounds = array<i64: 1, 128>}, {pipeline_mode = #tpu.pipeline_mode<synchronous>, transform_indices = @transform_8, window_bounds = array<i64: 1, 128>}, {pipeline_mode = #tpu.pipeline_mode<synchronous>, transform_indices = @transform_9, window_bounds = array<i64: 1, 1>}, {pipeline_mode = #tpu.pipeline_mode<synchronous>, transform_indices = @transform_10, window_bounds = array<i64: 128, 128>}, {pipeline_mode = #tpu.pipeline_mode<synchronous>, transform_indices = @transform_11, window_bounds = array<i64: 1, 128>}, {transform_indices = @transform_12, window_bounds = array<i64: 16, 128>}]} {
    %c0 = arith.constant 0 : index
    %c0_0 = arith.constant 0 : index
    %c0_1 = arith.constant 0 : index
    %0 = vector.load %arg1[%c0, %c0_0, %c0_1] : memref<8x16x128xbf16, #tpu.memory_space<vmem>>, vector<8x16x128xbf16>
    %1 = vector.shape_cast %0 : vector<8x16x128xbf16> to vector<128x128xbf16>
    %c0_2 = arith.constant 0 : index
    %c0_3 = arith.constant 0 : index
    %2 = vector.load %arg3[%c0_2, %c0_3] : memref<128x512xbf16, #tpu.memory_space<vmem>>, vector<128x512xbf16>
    %cst = arith.constant dense<0.000000e+00> : vector<128x512xf32>
    %3 = tpu.matmul %1, %2, %cst {dimension_numbers = #tpu.dot_dimension_numbers<[1], [0], [0], [1], [0, 0, 1, 1], [], []>} : vector<128x128xbf16>, vector<128x512xbf16>, vector<128x512xf32> -> vector<128x512xf32>
    %c0_4 = arith.constant 0 : index
    %c0_5 = arith.constant 0 : index
    %4 = vector.load %arg5[%c0_4, %c0_5] : memref<1x512xf32, #tpu.memory_space<vmem>>, vector<1x512xf32>
    %5 = vector.broadcast %4 : vector<1x512xf32> to vector<128x512xf32>
    %6 = arith.addf %3, %5 : vector<128x512xf32>
    %7 = vector.shape_cast %6 : vector<128x512xf32> to vector<8x16x512xf32>
    %c0_6 = arith.constant 0 : index
    %c0_7 = arith.constant 0 : index
    %c0_8 = arith.constant 0 : index
    %8 = vector.load %arg14[%c0_6, %c0_7, %c0_8] : memref<8x16x512xf32, #tpu.memory_space<vmem>>, vector<8x16x512xf32>
    tpu.vector_store %arg14[%c0_6, %c0_7, %c0_8], %7 {strides = array<i32>} : memref<8x16x512xf32, #tpu.memory_space<vmem>>, vector<8x16x512xf32>,
    %c0_9 = arith.constant 0 : index
    %c0_10 = arith.constant 0 : index
    %9 = vector.load %arg6[%c0_9, %c0_10] : memref<128x128xbf16, #tpu.memory_space<vmem>>, vector<128x128xbf16>
    %cst_11 = arith.constant dense<0.000000e+00> : vector<128x128xf32>
    %10 = tpu.matmul %1, %9, %cst_11 {dimension_numbers = #tpu.dot_dimension_numbers<[1], [0], [0], [1], [0, 0, 1, 1], [], []>} : vector<128x128xbf16>, vector<128x128xbf16>, vector<128x128xf32> -> vector<128x128xf32>
    %11 = vector.shape_cast %10 : vector<128x128xf32> to vector<8x16x128xf32>
    %c0_12 = arith.constant 0 : index
    %c0_13 = arith.constant 0 : index
    %c0_14 = arith.constant 0 : index
    %12 = vector.load %arg15[%c0_12, %c0_13, %c0_14] : memref<8x16x128xf32, #tpu.memory_space<vmem>>, vector<8x16x128xf32>
    tpu.vector_store %arg15[%c0_12, %c0_13, %c0_14], %11 {strides = array<i32>} : memref<8x16x128xf32, #tpu.memory_space<vmem>>, vector<8x16x128xf32>,
    %13 = tpu.iota {dimensions = array<i32: 0>} : vector<8x16x128xi32>
    %c0_15 = arith.constant 0 : index
    %c0_16 = arith.constant 0 : index
    %14 = vector.load %arg2[%c0_15, %c0_16] : memref<16x1xi32, #tpu.memory_space<vmem>>, vector<16x1xi32>
    %15 = vector.shape_cast %14 : vector<16x1xi32> to vector<1x16x1xi32>
    %16 = vector.broadcast %15 : vector<1x16x1xi32> to vector<8x16x128xi32>
    %17 = arith.cmpi eq, %13, %16 : vector<8x16x128xi32>
    %18 = arith.extui %17 : vector<8x16x128xi1> to vector<8x16x128xi32>
    %19 = arith.sitofp %18 : vector<8x16x128xi32> to vector<8x16x128xf32>
    %c0_17 = arith.constant 0 : index
    %c0_18 = arith.constant 0 : index
    %c0_19 = arith.constant 0 : index
    %20 = vector.load %arg17[%c0_17, %c0_18, %c0_19] : memref<8x16x128xf32, #tpu.memory_space<vmem>>, vector<8x16x128xf32>
    tpu.vector_store %arg17[%c0_17, %c0_18, %c0_19], %19 {strides = array<i32>} : memref<8x16x128xf32, #tpu.memory_space<vmem>>, vector<8x16x128xf32>,
    %cst_20 = arith.constant 0.000000e+00 : f32
    %21 = vector.broadcast %cst_20 : f32 to vector<16x128xf32>
    %cst_21 = arith.constant 0.000000e+00 : f32
    %22 = vector.broadcast %cst_21 : f32 to vector<16x128xf32>
    %cst_22 = arith.constant 0.000000e+00 : f32
    %23 = vector.broadcast %cst_22 : f32 to vector<16x128xf32>
    %c0_i32 = arith.constant 0 : i32
    %24 = arith.index_cast %c0_i32 : i32 to index
    %c0_23 = arith.constant 0 : index
    %c0_24 = arith.constant 0 : index
    %25 = vector.load %arg14[%24, %c0_23, %c0_24] : memref<8x16x512xf32, #tpu.memory_space<vmem>>, vector<1x16x512xf32>
    %26 = vector.shape_cast %25 : vector<1x16x512xf32> to vector<16x512xf32>
    %27 = arith.truncf %21 : vector<16x128xf32> to vector<16x128xbf16>
    %c0_25 = arith.constant 0 : index
    %c0_26 = arith.constant 0 : index
    %28 = vector.load %arg4[%c0_25, %c0_26] : memref<128x512xbf16, #tpu.memory_space<vmem>>, vector<128x512xbf16>
    %cst_27 = arith.constant dense<0.000000e+00> : vector<16x512xf32>
    %29 = tpu.matmul %27, %28, %cst_27 {dimension_numbers = #tpu.dot_dimension_numbers<[1], [0], [0], [1], [0, 0, 1, 1], [], []>} : vector<16x128xbf16>, vector<128x512xbf16>, vector<16x512xf32> -> vector<16x512xf32>
    %30 = arith.addf %26, %29 : vector<16x512xf32>
    %31 = vector.extract_strided_slice %30 {offsets = [0, 0], sizes = [16, 128], strides = [1, 1]} : vector<16x512xf32> to vector<16x128xf32>
    %cst_28 = arith.constant 5.000000e-01 : f32
    %32 = vector.broadcast %cst_28 : f32 to vector<16x128xf32>
    %33 = arith.mulf %32, %31 : vector<16x128xf32>
    %34 = math.tanh %33 : vector<16x128xf32>
    %cst_29 = arith.constant 1.000000e+00 : f32
    %35 = vector.broadcast %cst_29 : f32 to vector<16x128xf32>
    %36 = arith.addf %34, %35 : vector<16x128xf32>
    %cst_30 = arith.constant 5.000000e-01 : f32
    %37 = vector.broadcast %cst_30 : f32 to vector<16x128xf32>
    %38 = arith.mulf %37, %36 : vector<16x128xf32>
    %39 = vector.extract_strided_slice %30 {offsets = [0, 128], sizes = [16, 128], strides = [1, 1]} : vector<16x512xf32> to vector<16x128xf32>
    %cst_31 = arith.constant 5.000000e-01 : f32
    %40 = vector.broadcast %cst_31 : f32 to vector<16x128xf32>
    %41 = arith.mulf %40, %39 : vector<16x128xf32>
    %42 = math.tanh %41 : vector<16x128xf32>
    %cst_32 = arith.constant 1.000000e+00 : f32
    %43 = vector.broadcast %cst_32 : f32 to vector<16x128xf32>
    %44 = arith.addf %42, %43 : vector<16x128xf32>
    %cst_33 = arith.constant 5.000000e-01 : f32
    %45 = vector.broadcast %cst_33 : f32 to vector<16x128xf32>
    %46 = arith.mulf %45, %44 : vector<16x128xf32>
    %47 = vector.extract_strided_slice %30 {offsets = [0, 256], sizes = [16, 128], strides = [1, 1]} : vector<16x512xf32> to vector<16x128xf32>
    %48 = math.tanh %47 : vector<16x128xf32>
    %49 = vector.extract_strided_slice %30 {offsets = [0, 384], sizes = [16, 128], strides = [1, 1]} : vector<16x512xf32> to vector<16x128xf32>
    %cst_34 = arith.constant 5.000000e-01 : f32
    %50 = vector.broadcast %cst_34 : f32 to vector<16x128xf32>
    %51 = arith.mulf %50, %49 : vector<16x128xf32>
    %52 = math.tanh %51 : vector<16x128xf32>
    %cst_35 = arith.constant 1.000000e+00 : f32
    %53 = vector.broadcast %cst_35 : f32 to vector<16x128xf32>
    %54 = arith.addf %52, %53 : vector<16x128xf32>
    %cst_36 = arith.constant 5.000000e-01 : f32
    %55 = vector.broadcast %cst_36 : f32 to vector<16x128xf32>
    %56 = arith.mulf %55, %54 : vector<16x128xf32>
    %57 = arith.mulf %46, %22 : vector<16x128xf32>
    %58 = arith.mulf %38, %48 : vector<16x128xf32>
    %59 = arith.addf %57, %58 : vector<16x128xf32>
    %60 = math.tanh %59 : vector<16x128xf32>
    %61 = arith.mulf %56, %60 : vector<16x128xf32>
    %62 = arith.index_cast %c0_i32 : i32 to index
    %c0_37 = arith.constant 0 : index
    %c0_38 = arith.constant 0 : index
    %63 = vector.load %arg17[%62, %c0_37, %c0_38] : memref<8x16x128xf32, #tpu.memory_space<vmem>>, vector<1x16x128xf32>
    %64 = vector.shape_cast %63 : vector<1x16x128xf32> to vector<16x128xf32>
    %65 = arith.mulf %61, %64 : vector<16x128xf32>
    %66 = arith.addf %23, %65 : vector<16x128xf32>
    %c1_i32 = arith.constant 1 : i32
    %67 = arith.index_cast %c1_i32 : i32 to index
    %c0_39 = arith.constant 0 : index
    %c0_40 = arith.constant 0 : index
    %68 = vector.load %arg14[%67, %c0_39, %c0_40] : memref<8x16x512xf32, #tpu.memory_space<vmem>>, vector<1x16x512xf32>
    %69 = vector.shape_cast %68 : vector<1x16x512xf32> to vector<16x512xf32>
    %70 = arith.truncf %61 : vector<16x128xf32> to vector<16x128xbf16>
    %c0_41 = arith.constant 0 : index
    %c0_42 = arith.constant 0 : index
    %71 = vector.load %arg4[%c0_41, %c0_42] : memref<128x512xbf16, #tpu.memory_space<vmem>>, vector<128x512xbf16>
    %cst_43 = arith.constant dense<0.000000e+00> : vector<16x512xf32>
    %72 = tpu.matmul %70, %71, %cst_43 {dimension_numbers = #tpu.dot_dimension_numbers<[1], [0], [0], [1], [0, 0, 1, 1], [], []>} : vector<16x128xbf16>, vector<128x512xbf16>, vector<16x512xf32> -> vector<16x512xf32>
    %73 = arith.addf %69, %72 : vector<16x512xf32>
    %74 = vector.extract_strided_slice %73 {offsets = [0, 0], sizes = [16, 128], strides = [1, 1]} : vector<16x512xf32> to vector<16x128xf32>
    %cst_44 = arith.constant 5.000000e-01 : f32
    %75 = vector.broadcast %cst_44 : f32 to vector<16x128xf32>
    %76 = arith.mulf %75, %74 : vector<16x128xf32>
    %77 = math.tanh %76 : vector<16x128xf32>
    %cst_45 = arith.constant 1.000000e+00 : f32
    %78 = vector.broadcast %cst_45 : f32 to vector<16x128xf32>
    %79 = arith.addf %77, %78 : vector<16x128xf32>
    %cst_46 = arith.constant 5.000000e-01 : f32
    %80 = vector.broadcast %cst_46 : f32 to vector<16x128xf32>
    %81 = arith.mulf %80, %79 : vector<16x128xf32>
    %82 = vector.extract_strided_slice %73 {offsets = [0, 128], sizes = [16, 128], strides = [1, 1]} : vector<16x512xf32> to vector<16x128xf32>
    %cst_47 = arith.constant 5.000000e-01 : f32
    %83 = vector.broadcast %cst_47 : f32 to vector<16x128xf32>
    %84 = arith.mulf %83, %82 : vector<16x128xf32>
    %85 = math.tanh %84 : vector<16x128xf32>
    %cst_48 = arith.constant 1.000000e+00 : f32
    %86 = vector.broadcast %cst_48 : f32 to vector<16x128xf32>
    %87 = arith.addf %85, %86 : vector<16x128xf32>
    %cst_49 = arith.constant 5.000000e-01 : f32
    %88 = vector.broadcast %cst_49 : f32 to vector<16x128xf32>
    %89 = arith.mulf %88, %87 : vector<16x128xf32>
    %90 = vector.extract_strided_slice %73 {offsets = [0, 256], sizes = [16, 128], strides = [1, 1]} : vector<16x512xf32> to vector<16x128xf32>
    %91 = math.tanh %90 : vector<16x128xf32>
    %92 = vector.extract_strided_slice %73 {offsets = [0, 384], sizes = [16, 128], strides = [1, 1]} : vector<16x512xf32> to vector<16x128xf32>
    %cst_50 = arith.constant 5.000000e-01 : f32
    %93 = vector.broadcast %cst_50 : f32 to vector<16x128xf32>
    %94 = arith.mulf %93, %92 : vector<16x128xf32>
    %95 = math.tanh %94 : vector<16x128xf32>
    %cst_51 = arith.constant 1.000000e+00 : f32
    %96 = vector.broadcast %cst_51 : f32 to vector<16x128xf32>
    %97 = arith.addf %95, %96 : vector<16x128xf32>
    %cst_52 = arith.constant 5.000000e-01 : f32
    %98 = vector.broadcast %cst_52 : f32 to vector<16x128xf32>
    %99 = arith.mulf %98, %97 : vector<16x128xf32>
    %100 = arith.mulf %89, %59 : vector<16x128xf32>
    %101 = arith.mulf %81, %91 : vector<16x128xf32>
    %102 = arith.addf %100, %101 : vector<16x128xf32>
    %103 = math.tanh %102 : vector<16x128xf32>
    %104 = arith.mulf %99, %103 : vector<16x128xf32>
    %105 = arith.index_cast %c1_i32 : i32 to index
    %c0_53 = arith.constant 0 : index
    %c0_54 = arith.constant 0 : index
    %106 = vector.load %arg17[%105, %c0_53, %c0_54] : memref<8x16x128xf32, #tpu.memory_space<vmem>>, vector<1x16x128xf32>
    %107 = vector.shape_cast %106 : vector<1x16x128xf32> to vector<16x128xf32>
    %108 = arith.mulf %104, %107 : vector<16x128xf32>
    %109 = arith.addf %66, %108 : vector<16x128xf32>
    %c2_i32 = arith.constant 2 : i32
    %110 = arith.index_cast %c2_i32 : i32 to index
    %c0_55 = arith.constant 0 : index
    %c0_56 = arith.constant 0 : index
    %111 = vector.load %arg14[%110, %c0_55, %c0_56] : memref<8x16x512xf32, #tpu.memory_space<vmem>>, vector<1x16x512xf32>
    %112 = vector.shape_cast %111 : vector<1x16x512xf32> to vector<16x512xf32>
    %113 = arith.truncf %104 : vector<16x128xf32> to vector<16x128xbf16>
    %c0_57 = arith.constant 0 : index
    %c0_58 = arith.constant 0 : index
    %114 = vector.load %arg4[%c0_57, %c0_58] : memref<128x512xbf16, #tpu.memory_space<vmem>>, vector<128x512xbf16>
    %cst_59 = arith.constant dense<0.000000e+00> : vector<16x512xf32>
    %115 = tpu.matmul %113, %114, %cst_59 {dimension_numbers = #tpu.dot_dimension_numbers<[1], [0], [0], [1], [0, 0, 1, 1], [], []>} : vector<16x128xbf16>, vector<128x512xbf16>, vector<16x512xf32> -> vector<16x512xf32>
    %116 = arith.addf %112, %115 : vector<16x512xf32>
    %117 = vector.extract_strided_slice %116 {offsets = [0, 0], sizes = [16, 128], strides = [1, 1]} : vector<16x512xf32> to vector<16x128xf32>
    %cst_60 = arith.constant 5.000000e-01 : f32
    %118 = vector.broadcast %cst_60 : f32 to vector<16x128xf32>
    %119 = arith.mulf %118, %117 : vector<16x128xf32>
    %120 = math.tanh %119 : vector<16x128xf32>
    %cst_61 = arith.constant 1.000000e+00 : f32
    %121 = vector.broadcast %cst_61 : f32 to vector<16x128xf32>
    %122 = arith.addf %120, %121 : vector<16x128xf32>
    %cst_62 = arith.constant 5.000000e-01 : f32
    %123 = vector.broadcast %cst_62 : f32 to vector<16x128xf32>
    %124 = arith.mulf %123, %122 : vector<16x128xf32>
    %125 = vector.extract_strided_slice %116 {offsets = [0, 128], sizes = [16, 128], strides = [1, 1]} : vector<16x512xf32> to vector<16x128xf32>
    %cst_63 = arith.constant 5.000000e-01 : f32
    %126 = vector.broadcast %cst_63 : f32 to vector<16x128xf32>
    %127 = arith.mulf %126, %125 : vector<16x128xf32>
    %128 = math.tanh %127 : vector<16x128xf32>
    %cst_64 = arith.constant 1.000000e+00 : f32
    %129 = vector.broadcast %cst_64 : f32 to vector<16x128xf32>
    %130 = arith.addf %128, %129 : vector<16x128xf32>
    %cst_65 = arith.constant 5.000000e-01 : f32
    %131 = vector.broadcast %cst_65 : f32 to vector<16x128xf32>
    %132 = arith.mulf %131, %130 : vector<16x128xf32>
    %133 = vector.extract_strided_slice %116 {offsets = [0, 256], sizes = [16, 128], strides = [1, 1]} : vector<16x512xf32> to vector<16x128xf32>
    %134 = math.tanh %133 : vector<16x128xf32>
    %135 = vector.extract_strided_slice %116 {offsets = [0, 384], sizes = [16, 128], strides = [1, 1]} : vector<16x512xf32> to vector<16x128xf32>
    %cst_66 = arith.constant 5.000000e-01 : f32
    %136 = vector.broadcast %cst_66 : f32 to vector<16x128xf32>
    %137 = arith.mulf %136, %135 : vector<16x128xf32>
    %138 = math.tanh %137 : vector<16x128xf32>
    %cst_67 = arith.constant 1.000000e+00 : f32
    %139 = vector.broadcast %cst_67 : f32 to vector<16x128xf32>
    %140 = arith.addf %138, %139 : vector<16x128xf32>
    %cst_68 = arith.constant 5.000000e-01 : f32
    %141 = vector.broadcast %cst_68 : f32 to vector<16x128xf32>
    %142 = arith.mulf %141, %140 : vector<16x128xf32>
    %143 = arith.mulf %132, %102 : vector<16x128xf32>
    %144 = arith.mulf %124, %134 : vector<16x128xf32>
    %145 = arith.addf %143, %144 : vector<16x128xf32>
    %146 = math.tanh %145 : vector<16x128xf32>
    %147 = arith.mulf %142, %146 : vector<16x128xf32>
    %148 = arith.index_cast %c2_i32 : i32 to index
    %c0_69 = arith.constant 0 : index
    %c0_70 = arith.constant 0 : index
    %149 = vector.load %arg17[%148, %c0_69, %c0_70] : memref<8x16x128xf32, #tpu.memory_space<vmem>>, vector<1x16x128xf32>
    %150 = vector.shape_cast %149 : vector<1x16x128xf32> to vector<16x128xf32>
    %151 = arith.mulf %147, %150 : vector<16x128xf32>
    %152 = arith.addf %109, %151 : vector<16x128xf32>
    %c3_i32 = arith.constant 3 : i32
    %153 = arith.index_cast %c3_i32 : i32 to index
    %c0_71 = arith.constant 0 : index
    %c0_72 = arith.constant 0 : index
    %154 = vector.load %arg14[%153, %c0_71, %c0_72] : memref<8x16x512xf32, #tpu.memory_space<vmem>>, vector<1x16x512xf32>
    %155 = vector.shape_cast %154 : vector<1x16x512xf32> to vector<16x512xf32>
    %156 = arith.truncf %147 : vector<16x128xf32> to vector<16x128xbf16>
    %c0_73 = arith.constant 0 : index
    %c0_74 = arith.constant 0 : index
    %157 = vector.load %arg4[%c0_73, %c0_74] : memref<128x512xbf16, #tpu.memory_space<vmem>>, vector<128x512xbf16>
    %cst_75 = arith.constant dense<0.000000e+00> : vector<16x512xf32>
    %158 = tpu.matmul %156, %157, %cst_75 {dimension_numbers = #tpu.dot_dimension_numbers<[1], [0], [0], [1], [0, 0, 1, 1], [], []>} : vector<16x128xbf16>, vector<128x512xbf16>, vector<16x512xf32> -> vector<16x512xf32>
    %159 = arith.addf %155, %158 : vector<16x512xf32>
    %160 = vector.extract_strided_slice %159 {offsets = [0, 0], sizes = [16, 128], strides = [1, 1]} : vector<16x512xf32> to vector<16x128xf32>
    %cst_76 = arith.constant 5.000000e-01 : f32
    %161 = vector.broadcast %cst_76 : f32 to vector<16x128xf32>
    %162 = arith.mulf %161, %160 : vector<16x128xf32>
    %163 = math.tanh %162 : vector<16x128xf32>
    %cst_77 = arith.constant 1.000000e+00 : f32
    %164 = vector.broadcast %cst_77 : f32 to vector<16x128xf32>
    %165 = arith.addf %163, %164 : vector<16x128xf32>
    %cst_78 = arith.constant 5.000000e-01 : f32
    %166 = vector.broadcast %cst_78 : f32 to vector<16x128xf32>
    %167 = arith.mulf %166, %165 : vector<16x128xf32>
    %168 = vector.extract_strided_slice %159 {offsets = [0, 128], sizes = [16, 128], strides = [1, 1]} : vector<16x512xf32> to vector<16x128xf32>
    %cst_79 = arith.constant 5.000000e-01 : f32
    %169 = vector.broadcast %cst_79 : f32 to vector<16x128xf32>
    %170 = arith.mulf %169, %168 : vector<16x128xf32>
    %171 = math.tanh %170 : vector<16x128xf32>
    %cst_80 = arith.constant 1.000000e+00 : f32
    %172 = vector.broadcast %cst_80 : f32 to vector<16x128xf32>
    %173 = arith.addf %171, %172 : vector<16x128xf32>
    %cst_81 = arith.constant 5.000000e-01 : f32
    %174 = vector.broadcast %cst_81 : f32 to vector<16x128xf32>
    %175 = arith.mulf %174, %173 : vector<16x128xf32>
    %176 = vector.extract_strided_slice %159 {offsets = [0, 256], sizes = [16, 128], strides = [1, 1]} : vector<16x512xf32> to vector<16x128xf32>
    %177 = math.tanh %176 : vector<16x128xf32>
    %178 = vector.extract_strided_slice %159 {offsets = [0, 384], sizes = [16, 128], strides = [1, 1]} : vector<16x512xf32> to vector<16x128xf32>
    %cst_82 = arith.constant 5.000000e-01 : f32
    %179 = vector.broadcast %cst_82 : f32 to vector<16x128xf32>
    %180 = arith.mulf %179, %178 : vector<16x128xf32>
    %181 = math.tanh %180 : vector<16x128xf32>
    %cst_83 = arith.constant 1.000000e+00 : f32
    %182 = vector.broadcast %cst_83 : f32 to vector<16x128xf32>
    %183 = arith.addf %181, %182 : vector<16x128xf32>
    %cst_84 = arith.constant 5.000000e-01 : f32
    %184 = vector.broadcast %cst_84 : f32 to vector<16x128xf32>
    %185 = arith.mulf %184, %183 : vector<16x128xf32>
    %186 = arith.mulf %175, %145 : vector<16x128xf32>
    %187 = arith.mulf %167, %177 : vector<16x128xf32>
    %188 = arith.addf %186, %187 : vector<16x128xf32>
    %189 = math.tanh %188 : vector<16x128xf32>
    %190 = arith.mulf %185, %189 : vector<16x128xf32>
    %191 = arith.index_cast %c3_i32 : i32 to index
    %c0_85 = arith.constant 0 : index
    %c0_86 = arith.constant 0 : index
    %192 = vector.load %arg17[%191, %c0_85, %c0_86] : memref<8x16x128xf32, #tpu.memory_space<vmem>>, vector<1x16x128xf32>
    %193 = vector.shape_cast %192 : vector<1x16x128xf32> to vector<16x128xf32>
    %194 = arith.mulf %190, %193 : vector<16x128xf32>
    %195 = arith.addf %152, %194 : vector<16x128xf32>
    %c4_i32 = arith.constant 4 : i32
    %196 = arith.index_cast %c4_i32 : i32 to index
    %c0_87 = arith.constant 0 : index
    %c0_88 = arith.constant 0 : index
    %197 = vector.load %arg14[%196, %c0_87, %c0_88] : memref<8x16x512xf32, #tpu.memory_space<vmem>>, vector<1x16x512xf32>
    %198 = vector.shape_cast %197 : vector<1x16x512xf32> to vector<16x512xf32>
    %199 = arith.truncf %190 : vector<16x128xf32> to vector<16x128xbf16>
    %c0_89 = arith.constant 0 : index
    %c0_90 = arith.constant 0 : index
    %200 = vector.load %arg4[%c0_89, %c0_90] : memref<128x512xbf16, #tpu.memory_space<vmem>>, vector<128x512xbf16>
    %cst_91 = arith.constant dense<0.000000e+00> : vector<16x512xf32>
    %201 = tpu.matmul %199, %200, %cst_91 {dimension_numbers = #tpu.dot_dimension_numbers<[1], [0], [0], [1], [0, 0, 1, 1], [], []>} : vector<16x128xbf16>, vector<128x512xbf16>, vector<16x512xf32> -> vector<16x512xf32>
    %202 = arith.addf %198, %201 : vector<16x512xf32>
    %203 = vector.extract_strided_slice %202 {offsets = [0, 0], sizes = [16, 128], strides = [1, 1]} : vector<16x512xf32> to vector<16x128xf32>
    %cst_92 = arith.constant 5.000000e-01 : f32
    %204 = vector.broadcast %cst_92 : f32 to vector<16x128xf32>
    %205 = arith.mulf %204, %203 : vector<16x128xf32>
    %206 = math.tanh %205 : vector<16x128xf32>
    %cst_93 = arith.constant 1.000000e+00 : f32
    %207 = vector.broadcast %cst_93 : f32 to vector<16x128xf32>
    %208 = arith.addf %206, %207 : vector<16x128xf32>
    %cst_94 = arith.constant 5.000000e-01 : f32
    %209 = vector.broadcast %cst_94 : f32 to vector<16x128xf32>
    %210 = arith.mulf %209, %208 : vector<16x128xf32>
    %211 = vector.extract_strided_slice %202 {offsets = [0, 128], sizes = [16, 128], strides = [1, 1]} : vector<16x512xf32> to vector<16x128xf32>
    %cst_95 = arith.constant 5.000000e-01 : f32
    %212 = vector.broadcast %cst_95 : f32 to vector<16x128xf32>
    %213 = arith.mulf %212, %211 : vector<16x128xf32>
    %214 = math.tanh %213 : vector<16x128xf32>
    %cst_96 = arith.constant 1.000000e+00 : f32
    %215 = vector.broadcast %cst_96 : f32 to vector<16x128xf32>
    %216 = arith.addf %214, %215 : vector<16x128xf32>
    %cst_97 = arith.constant 5.000000e-01 : f32
    %217 = vector.broadcast %cst_97 : f32 to vector<16x128xf32>
    %218 = arith.mulf %217, %216 : vector<16x128xf32>
    %219 = vector.extract_strided_slice %202 {offsets = [0, 256], sizes = [16, 128], strides = [1, 1]} : vector<16x512xf32> to vector<16x128xf32>
    %220 = math.tanh %219 : vector<16x128xf32>
    %221 = vector.extract_strided_slice %202 {offsets = [0, 384], sizes = [16, 128], strides = [1, 1]} : vector<16x512xf32> to vector<16x128xf32>
    %cst_98 = arith.constant 5.000000e-01 : f32
    %222 = vector.broadcast %cst_98 : f32 to vector<16x128xf32>
    %223 = arith.mulf %222, %221 : vector<16x128xf32>
    %224 = math.tanh %223 : vector<16x128xf32>
    %cst_99 = arith.constant 1.000000e+00 : f32
    %225 = vector.broadcast %cst_99 : f32 to vector<16x128xf32>
    %226 = arith.addf %224, %225 : vector<16x128xf32>
    %cst_100 = arith.constant 5.000000e-01 : f32
    %227 = vector.broadcast %cst_100 : f32 to vector<16x128xf32>
    %228 = arith.mulf %227, %226 : vector<16x128xf32>
    %229 = arith.mulf %218, %188 : vector<16x128xf32>
    %230 = arith.mulf %210, %220 : vector<16x128xf32>
    %231 = arith.addf %229, %230 : vector<16x128xf32>
    %232 = math.tanh %231 : vector<16x128xf32>
    %233 = arith.mulf %228, %232 : vector<16x128xf32>
    %234 = arith.index_cast %c4_i32 : i32 to index
    %c0_101 = arith.constant 0 : index
    %c0_102 = arith.constant 0 : index
    %235 = vector.load %arg17[%234, %c0_101, %c0_102] : memref<8x16x128xf32, #tpu.memory_space<vmem>>, vector<1x16x128xf32>
    %236 = vector.shape_cast %235 : vector<1x16x128xf32> to vector<16x128xf32>
    %237 = arith.mulf %233, %236 : vector<16x128xf32>
    %238 = arith.addf %195, %237 : vector<16x128xf32>
    %c5_i32 = arith.constant 5 : i32
    %239 = arith.index_cast %c5_i32 : i32 to index
    %c0_103 = arith.constant 0 : index
    %c0_104 = arith.constant 0 : index
    %240 = vector.load %arg14[%239, %c0_103, %c0_104] : memref<8x16x512xf32, #tpu.memory_space<vmem>>, vector<1x16x512xf32>
    %241 = vector.shape_cast %240 : vector<1x16x512xf32> to vector<16x512xf32>
    %242 = arith.truncf %233 : vector<16x128xf32> to vector<16x128xbf16>
    %c0_105 = arith.constant 0 : index
    %c0_106 = arith.constant 0 : index
    %243 = vector.load %arg4[%c0_105, %c0_106] : memref<128x512xbf16, #tpu.memory_space<vmem>>, vector<128x512xbf16>
    %cst_107 = arith.constant dense<0.000000e+00> : vector<16x512xf32>
    %244 = tpu.matmul %242, %243, %cst_107 {dimension_numbers = #tpu.dot_dimension_numbers<[1], [0], [0], [1], [0, 0, 1, 1], [], []>} : vector<16x128xbf16>, vector<128x512xbf16>, vector<16x512xf32> -> vector<16x512xf32>
    %245 = arith.addf %241, %244 : vector<16x512xf32>
    %246 = vector.extract_strided_slice %245 {offsets = [0, 0], sizes = [16, 128], strides = [1, 1]} : vector<16x512xf32> to vector<16x128xf32>
    %cst_108 = arith.constant 5.000000e-01 : f32
    %247 = vector.broadcast %cst_108 : f32 to vector<16x128xf32>
    %248 = arith.mulf %247, %246 : vector<16x128xf32>
    %249 = math.tanh %248 : vector<16x128xf32>
    %cst_109 = arith.constant 1.000000e+00 : f32
    %250 = vector.broadcast %cst_109 : f32 to vector<16x128xf32>
    %251 = arith.addf %249, %250 : vector<16x128xf32>
    %cst_110 = arith.constant 5.000000e-01 : f32
    %252 = vector.broadcast %cst_110 : f32 to vector<16x128xf32>
    %253 = arith.mulf %252, %251 : vector<16x128xf32>
    %254 = vector.extract_strided_slice %245 {offsets = [0, 128], sizes = [16, 128], strides = [1, 1]} : vector<16x512xf32> to vector<16x128xf32>
    %cst_111 = arith.constant 5.000000e-01 : f32
    %255 = vector.broadcast %cst_111 : f32 to vector<16x128xf32>
    %256 = arith.mulf %255, %254 : vector<16x128xf32>
    %257 = math.tanh %256 : vector<16x128xf32>
    %cst_112 = arith.constant 1.000000e+00 : f32
    %258 = vector.broadcast %cst_112 : f32 to vector<16x128xf32>
    %259 = arith.addf %257, %258 : vector<16x128xf32>
    %cst_113 = arith.constant 5.000000e-01 : f32
    %260 = vector.broadcast %cst_113 : f32 to vector<16x128xf32>
    %261 = arith.mulf %260, %259 : vector<16x128xf32>
    %262 = vector.extract_strided_slice %245 {offsets = [0, 256], sizes = [16, 128], strides = [1, 1]} : vector<16x512xf32> to vector<16x128xf32>
    %263 = math.tanh %262 : vector<16x128xf32>
    %264 = vector.extract_strided_slice %245 {offsets = [0, 384], sizes = [16, 128], strides = [1, 1]} : vector<16x512xf32> to vector<16x128xf32>
    %cst_114 = arith.constant 5.000000e-01 : f32
    %265 = vector.broadcast %cst_114 : f32 to vector<16x128xf32>
    %266 = arith.mulf %265, %264 : vector<16x128xf32>
    %267 = math.tanh %266 : vector<16x128xf32>
    %cst_115 = arith.constant 1.000000e+00 : f32
    %268 = vector.broadcast %cst_115 : f32 to vector<16x128xf32>
    %269 = arith.addf %267, %268 : vector<16x128xf32>
    %cst_116 = arith.constant 5.000000e-01 : f32
    %270 = vector.broadcast %cst_116 : f32 to vector<16x128xf32>
    %271 = arith.mulf %270, %269 : vector<16x128xf32>
    %272 = arith.mulf %261, %231 : vector<16x128xf32>
    %273 = arith.mulf %253, %263 : vector<16x128xf32>
    %274 = arith.addf %272, %273 : vector<16x128xf32>
    %275 = math.tanh %274 : vector<16x128xf32>
    %276 = arith.mulf %271, %275 : vector<16x128xf32>
    %277 = arith.index_cast %c5_i32 : i32 to index
    %c0_117 = arith.constant 0 : index
    %c0_118 = arith.constant 0 : index
    %278 = vector.load %arg17[%277, %c0_117, %c0_118] : memref<8x16x128xf32, #tpu.memory_space<vmem>>, vector<1x16x128xf32>
    %279 = vector.shape_cast %278 : vector<1x16x128xf32> to vector<16x128xf32>
    %280 = arith.mulf %276, %279 : vector<16x128xf32>
    %281 = arith.addf %238, %280 : vector<16x128xf32>
    %c6_i32 = arith.constant 6 : i32
    %282 = arith.index_cast %c6_i32 : i32 to index
    %c0_119 = arith.constant 0 : index
    %c0_120 = arith.constant 0 : index
    %283 = vector.load %arg14[%282, %c0_119, %c0_120] : memref<8x16x512xf32, #tpu.memory_space<vmem>>, vector<1x16x512xf32>
    %284 = vector.shape_cast %283 : vector<1x16x512xf32> to vector<16x512xf32>
    %285 = arith.truncf %276 : vector<16x128xf32> to vector<16x128xbf16>
    %c0_121 = arith.constant 0 : index
    %c0_122 = arith.constant 0 : index
    %286 = vector.load %arg4[%c0_121, %c0_122] : memref<128x512xbf16, #tpu.memory_space<vmem>>, vector<128x512xbf16>
    %cst_123 = arith.constant dense<0.000000e+00> : vector<16x512xf32>
    %287 = tpu.matmul %285, %286, %cst_123 {dimension_numbers = #tpu.dot_dimension_numbers<[1], [0], [0], [1], [0, 0, 1, 1], [], []>} : vector<16x128xbf16>, vector<128x512xbf16>, vector<16x512xf32> -> vector<16x512xf32>
    %288 = arith.addf %284, %287 : vector<16x512xf32>
    %289 = vector.extract_strided_slice %288 {offsets = [0, 0], sizes = [16, 128], strides = [1, 1]} : vector<16x512xf32> to vector<16x128xf32>
    %cst_124 = arith.constant 5.000000e-01 : f32
    %290 = vector.broadcast %cst_124 : f32 to vector<16x128xf32>
    %291 = arith.mulf %290, %289 : vector<16x128xf32>
    %292 = math.tanh %291 : vector<16x128xf32>
    %cst_125 = arith.constant 1.000000e+00 : f32
    %293 = vector.broadcast %cst_125 : f32 to vector<16x128xf32>
    %294 = arith.addf %292, %293 : vector<16x128xf32>
    %cst_126 = arith.constant 5.000000e-01 : f32
    %295 = vector.broadcast %cst_126 : f32 to vector<16x128xf32>
    %296 = arith.mulf %295, %294 : vector<16x128xf32>
    %297 = vector.extract_strided_slice %288 {offsets = [0, 128], sizes = [16, 128], strides = [1, 1]} : vector<16x512xf32> to vector<16x128xf32>
    %cst_127 = arith.constant 5.000000e-01 : f32
    %298 = vector.broadcast %cst_127 : f32 to vector<16x128xf32>
    %299 = arith.mulf %298, %297 : vector<16x128xf32>
    %300 = math.tanh %299 : vector<16x128xf32>
    %cst_128 = arith.constant 1.000000e+00 : f32
    %301 = vector.broadcast %cst_128 : f32 to vector<16x128xf32>
    %302 = arith.addf %300, %301 : vector<16x128xf32>
    %cst_129 = arith.constant 5.000000e-01 : f32
    %303 = vector.broadcast %cst_129 : f32 to vector<16x128xf32>
    %304 = arith.mulf %303, %302 : vector<16x128xf32>
    %305 = vector.extract_strided_slice %288 {offsets = [0, 256], sizes = [16, 128], strides = [1, 1]} : vector<16x512xf32> to vector<16x128xf32>
    %306 = math.tanh %305 : vector<16x128xf32>
    %307 = vector.extract_strided_slice %288 {offsets = [0, 384], sizes = [16, 128], strides = [1, 1]} : vector<16x512xf32> to vector<16x128xf32>
    %cst_130 = arith.constant 5.000000e-01 : f32
    %308 = vector.broadcast %cst_130 : f32 to vector<16x128xf32>
    %309 = arith.mulf %308, %307 : vector<16x128xf32>
    %310 = math.tanh %309 : vector<16x128xf32>
    %cst_131 = arith.constant 1.000000e+00 : f32
    %311 = vector.broadcast %cst_131 : f32 to vector<16x128xf32>
    %312 = arith.addf %310, %311 : vector<16x128xf32>
    %cst_132 = arith.constant 5.000000e-01 : f32
    %313 = vector.broadcast %cst_132 : f32 to vector<16x128xf32>
    %314 = arith.mulf %313, %312 : vector<16x128xf32>
    %315 = arith.mulf %304, %274 : vector<16x128xf32>
    %316 = arith.mulf %296, %306 : vector<16x128xf32>
    %317 = arith.addf %315, %316 : vector<16x128xf32>
    %318 = math.tanh %317 : vector<16x128xf32>
    %319 = arith.mulf %314, %318 : vector<16x128xf32>
    %320 = arith.index_cast %c6_i32 : i32 to index
    %c0_133 = arith.constant 0 : index
    %c0_134 = arith.constant 0 : index
    %321 = vector.load %arg17[%320, %c0_133, %c0_134] : memref<8x16x128xf32, #tpu.memory_space<vmem>>, vector<1x16x128xf32>
    %322 = vector.shape_cast %321 : vector<1x16x128xf32> to vector<16x128xf32>
    %323 = arith.mulf %319, %322 : vector<16x128xf32>
    %324 = arith.addf %281, %323 : vector<16x128xf32>
    %c7_i32 = arith.constant 7 : i32
    %325 = arith.index_cast %c7_i32 : i32 to index
    %c0_135 = arith.constant 0 : index
    %c0_136 = arith.constant 0 : index
    %326 = vector.load %arg14[%325, %c0_135, %c0_136] : memref<8x16x512xf32, #tpu.memory_space<vmem>>, vector<1x16x512xf32>
    %327 = vector.shape_cast %326 : vector<1x16x512xf32> to vector<16x512xf32>
    %328 = arith.truncf %319 : vector<16x128xf32> to vector<16x128xbf16>
    %c0_137 = arith.constant 0 : index
    %c0_138 = arith.constant 0 : index
    %329 = vector.load %arg4[%c0_137, %c0_138] : memref<128x512xbf16, #tpu.memory_space<vmem>>, vector<128x512xbf16>
    %cst_139 = arith.constant dense<0.000000e+00> : vector<16x512xf32>
    %330 = tpu.matmul %328, %329, %cst_139 {dimension_numbers = #tpu.dot_dimension_numbers<[1], [0], [0], [1], [0, 0, 1, 1], [], []>} : vector<16x128xbf16>, vector<128x512xbf16>, vector<16x512xf32> -> vector<16x512xf32>
    %331 = arith.addf %327, %330 : vector<16x512xf32>
    %332 = vector.extract_strided_slice %331 {offsets = [0, 0], sizes = [16, 128], strides = [1, 1]} : vector<16x512xf32> to vector<16x128xf32>
    %cst_140 = arith.constant 5.000000e-01 : f32
    %333 = vector.broadcast %cst_140 : f32 to vector<16x128xf32>
    %334 = arith.mulf %333, %332 : vector<16x128xf32>
    %335 = math.tanh %334 : vector<16x128xf32>
    %cst_141 = arith.constant 1.000000e+00 : f32
    %336 = vector.broadcast %cst_141 : f32 to vector<16x128xf32>
    %337 = arith.addf %335, %336 : vector<16x128xf32>
    %cst_142 = arith.constant 5.000000e-01 : f32
    %338 = vector.broadcast %cst_142 : f32 to vector<16x128xf32>
    %339 = arith.mulf %338, %337 : vector<16x128xf32>
    %340 = vector.extract_strided_slice %331 {offsets = [0, 128], sizes = [16, 128], strides = [1, 1]} : vector<16x512xf32> to vector<16x128xf32>
    %cst_143 = arith.constant 5.000000e-01 : f32
    %341 = vector.broadcast %cst_143 : f32 to vector<16x128xf32>
    %342 = arith.mulf %341, %340 : vector<16x128xf32>
    %343 = math.tanh %342 : vector<16x128xf32>
    %cst_144 = arith.constant 1.000000e+00 : f32
    %344 = vector.broadcast %cst_144 : f32 to vector<16x128xf32>
    %345 = arith.addf %343, %344 : vector<16x128xf32>
    %cst_145 = arith.constant 5.000000e-01 : f32
    %346 = vector.broadcast %cst_145 : f32 to vector<16x128xf32>
    %347 = arith.mulf %346, %345 : vector<16x128xf32>
    %348 = vector.extract_strided_slice %331 {offsets = [0, 256], sizes = [16, 128], strides = [1, 1]} : vector<16x512xf32> to vector<16x128xf32>
    %349 = math.tanh %348 : vector<16x128xf32>
    %350 = vector.extract_strided_slice %331 {offsets = [0, 384], sizes = [16, 128], strides = [1, 1]} : vector<16x512xf32> to vector<16x128xf32>
    %cst_146 = arith.constant 5.000000e-01 : f32
    %351 = vector.broadcast %cst_146 : f32 to vector<16x128xf32>
    %352 = arith.mulf %351, %350 : vector<16x128xf32>
    %353 = math.tanh %352 : vector<16x128xf32>
    %cst_147 = arith.constant 1.000000e+00 : f32
    %354 = vector.broadcast %cst_147 : f32 to vector<16x128xf32>
    %355 = arith.addf %353, %354 : vector<16x128xf32>
    %cst_148 = arith.constant 5.000000e-01 : f32
    %356 = vector.broadcast %cst_148 : f32 to vector<16x128xf32>
    %357 = arith.mulf %356, %355 : vector<16x128xf32>
    %358 = arith.mulf %347, %317 : vector<16x128xf32>
    %359 = arith.mulf %339, %349 : vector<16x128xf32>
    %360 = arith.addf %358, %359 : vector<16x128xf32>
    %361 = math.tanh %360 : vector<16x128xf32>
    %362 = arith.mulf %357, %361 : vector<16x128xf32>
    %363 = arith.index_cast %c7_i32 : i32 to index
    %c0_149 = arith.constant 0 : index
    %c0_150 = arith.constant 0 : index
    %364 = vector.load %arg17[%363, %c0_149, %c0_150] : memref<8x16x128xf32, #tpu.memory_space<vmem>>, vector<1x16x128xf32>
    %365 = vector.shape_cast %364 : vector<1x16x128xf32> to vector<16x128xf32>
    %366 = arith.mulf %362, %365 : vector<16x128xf32>
    %367 = arith.addf %324, %366 : vector<16x128xf32>
    %c8_i32 = arith.constant 8 : i32
    %cst_151 = arith.constant 0.000000e+00 : f32
    %368 = vector.broadcast %cst_151 : f32 to vector<16x128xf32>
    %369 = arith.truncf %367 : vector<16x128xf32> to vector<16x128xbf16>
    %c0_152 = arith.constant 0 : index
    %c0_153 = arith.constant 0 : index
    %370 = vector.load %arg7[%c0_152, %c0_153] : memref<128x128xbf16, #tpu.memory_space<vmem>>, vector<128x128xbf16>
    %cst_154 = arith.constant dense<0.000000e+00> : vector<16x128xf32>
    %371 = tpu.matmul %369, %370, %cst_154 {dimension_numbers = #tpu.dot_dimension_numbers<[1], [0], [0], [1], [0, 0, 1, 1], [], []>} : vector<16x128xbf16>, vector<128x128xbf16>, vector<16x128xf32> -> vector<16x128xf32>
    %c0_155 = arith.constant 0 : index
    %c0_156 = arith.constant 0 : index
    %c0_157 = arith.constant 0 : index
    %372 = vector.load %arg15[%c0_155, %c0_156, %c0_157] : memref<8x16x128xf32, #tpu.memory_space<vmem>>, vector<8x16x128xf32>
    %373 = vector.shape_cast %371 : vector<16x128xf32> to vector<1x16x128xf32>
    %374 = vector.broadcast %373 : vector<1x16x128xf32> to vector<8x16x128xf32>
    %375 = arith.addf %372, %374 : vector<8x16x128xf32>
    %c0_158 = arith.constant 0 : index
    %c0_159 = arith.constant 0 : index
    %376 = vector.load %arg8[%c0_158, %c0_159] : memref<1x128xf32, #tpu.memory_space<vmem>>, vector<1x128xf32>
    %377 = vector.shape_cast %376 : vector<1x128xf32> to vector<1x1x128xf32>
    %378 = vector.broadcast %377 : vector<1x1x128xf32> to vector<8x16x128xf32>
    %379 = arith.addf %375, %378 : vector<8x16x128xf32>
    %380 = math.tanh %379 : vector<8x16x128xf32>
    %c0_160 = arith.constant 0 : index
    %c0_161 = arith.constant 0 : index
    %381 = vector.load %arg9[%c0_160, %c0_161] : memref<1x128xf32, #tpu.memory_space<vmem>>, vector<1x128xf32>
    %382 = vector.shape_cast %381 : vector<1x128xf32> to vector<1x1x128xf32>
    %383 = vector.broadcast %382 : vector<1x1x128xf32> to vector<8x16x128xf32>
    %384 = arith.mulf %380, %383 : vector<8x16x128xf32>
    %cst_162 = arith.constant dense<0.000000e+00> : vector<8x16xf32>
    %385 = vector.multi_reduction <add>, %384, %cst_162 [2] : vector<8x16x128xf32> to vector<8x16xf32>
    %386 = vector.shape_cast %385 : vector<8x16xf32> to vector<8x16x1xf32>
    %c0_163 = arith.constant 0 : index
    %c0_164 = arith.constant 0 : index
    %387 = vector.load %arg10[%c0_163, %c0_164] : memref<1x1xf32, #tpu.memory_space<vmem>>, vector<1x1xf32>
    %388 = vector.shape_cast %387 : vector<1x1xf32> to vector<1x1x1xf32>
    %389 = vector.broadcast %388 : vector<1x1x1xf32> to vector<8x16x1xf32>
    %390 = arith.addf %386, %389 : vector<8x16x1xf32>
    %cst_165 = arith.constant 5.000000e-01 : f32
    %391 = vector.broadcast %cst_165 : f32 to vector<8x16x1xf32>
    %392 = arith.mulf %391, %390 : vector<8x16x1xf32>
    %393 = math.tanh %392 : vector<8x16x1xf32>
    %cst_166 = arith.constant 1.000000e+00 : f32
    %394 = vector.broadcast %cst_166 : f32 to vector<8x16x1xf32>
    %395 = arith.addf %393, %394 : vector<8x16x1xf32>
    %cst_167 = arith.constant 5.000000e-01 : f32
    %396 = vector.broadcast %cst_167 : f32 to vector<8x16x1xf32>
    %397 = arith.mulf %396, %395 : vector<8x16x1xf32>
    %398 = vector.shape_cast %397 : vector<8x16x1xf32> to vector<8x16x1xf32>
    %399 = vector.broadcast %398 : vector<8x16x1xf32> to vector<8x16x128xf32>
    %c0_168 = arith.constant 0 : index
    %c0_169 = arith.constant 0 : index
    %c0_170 = arith.constant 0 : index
    %400 = vector.load %arg16[%c0_168, %c0_169, %c0_170] : memref<8x16x128xf32, #tpu.memory_space<vmem>>, vector<8x16x128xf32>
    tpu.vector_store %arg16[%c0_168, %c0_169, %c0_170], %399 {strides = array<i32>} : memref<8x16x128xf32, #tpu.memory_space<vmem>>, vector<8x16x128xf32>,
    %cst_171 = arith.constant 0.000000e+00 : f32
    %401 = vector.broadcast %cst_171 : f32 to vector<16x128xf32>
    %c0_i32_172 = arith.constant 0 : i32
    %402 = arith.index_cast %c0_i32_172 : i32 to index
    %c0_173 = arith.constant 0 : index
    %c0_174 = arith.constant 0 : index
    %403 = vector.load %arg16[%402, %c0_173, %c0_174] : memref<8x16x128xf32, #tpu.memory_space<vmem>>, vector<1x16x128xf32>
    %404 = vector.shape_cast %403 : vector<1x16x128xf32> to vector<16x128xf32>
    %405 = arith.index_cast %c0_i32_172 : i32 to index
    %c0_175 = arith.constant 0 : index
    %c0_176 = arith.constant 0 : index
    %406 = vector.load %arg14[%405, %c0_175, %c0_176] : memref<8x16x512xf32, #tpu.memory_space<vmem>>, vector<1x16x512xf32>
    %407 = vector.shape_cast %406 : vector<1x16x512xf32> to vector<16x512xf32>
    %408 = arith.truncf %367 : vector<16x128xf32> to vector<16x128xbf16>
    %c0_177 = arith.constant 0 : index
    %c0_178 = arith.constant 0 : index
    %409 = vector.load %arg4[%c0_177, %c0_178] : memref<128x512xbf16, #tpu.memory_space<vmem>>, vector<128x512xbf16>
    %cst_179 = arith.constant dense<0.000000e+00> : vector<16x512xf32>
    %410 = tpu.matmul %408, %409, %cst_179 {dimension_numbers = #tpu.dot_dimension_numbers<[1], [0], [0], [1], [0, 0, 1, 1], [], []>} : vector<16x128xbf16>, vector<128x512xbf16>, vector<16x512xf32> -> vector<16x512xf32>
    %411 = arith.addf %407, %410 : vector<16x512xf32>
    %412 = vector.extract_strided_slice %411 {offsets = [0, 0], sizes = [16, 128], strides = [1, 1]} : vector<16x512xf32> to vector<16x128xf32>
    %cst_180 = arith.constant 5.000000e-01 : f32
    %413 = vector.broadcast %cst_180 : f32 to vector<16x128xf32>
    %414 = arith.mulf %413, %412 : vector<16x128xf32>
    %415 = math.tanh %414 : vector<16x128xf32>
    %cst_181 = arith.constant 1.000000e+00 : f32
    %416 = vector.broadcast %cst_181 : f32 to vector<16x128xf32>
    %417 = arith.addf %415, %416 : vector<16x128xf32>
    %cst_182 = arith.constant 5.000000e-01 : f32
    %418 = vector.broadcast %cst_182 : f32 to vector<16x128xf32>
    %419 = arith.mulf %418, %417 : vector<16x128xf32>
    %420 = vector.extract_strided_slice %411 {offsets = [0, 128], sizes = [16, 128], strides = [1, 1]} : vector<16x512xf32> to vector<16x128xf32>
    %cst_183 = arith.constant 5.000000e-01 : f32
    %421 = vector.broadcast %cst_183 : f32 to vector<16x128xf32>
    %422 = arith.mulf %421, %420 : vector<16x128xf32>
    %423 = math.tanh %422 : vector<16x128xf32>
    %cst_184 = arith.constant 1.000000e+00 : f32
    %424 = vector.broadcast %cst_184 : f32 to vector<16x128xf32>
    %425 = arith.addf %423, %424 : vector<16x128xf32>
    %cst_185 = arith.constant 5.000000e-01 : f32
    %426 = vector.broadcast %cst_185 : f32 to vector<16x128xf32>
    %427 = arith.mulf %426, %425 : vector<16x128xf32>
    %428 = vector.extract_strided_slice %411 {offsets = [0, 256], sizes = [16, 128], strides = [1, 1]} : vector<16x512xf32> to vector<16x128xf32>
    %429 = math.tanh %428 : vector<16x128xf32>
    %430 = vector.extract_strided_slice %411 {offsets = [0, 384], sizes = [16, 128], strides = [1, 1]} : vector<16x512xf32> to vector<16x128xf32>
    %cst_186 = arith.constant 5.000000e-01 : f32
    %431 = vector.broadcast %cst_186 : f32 to vector<16x128xf32>
    %432 = arith.mulf %431, %430 : vector<16x128xf32>
    %433 = math.tanh %432 : vector<16x128xf32>
    %cst_187 = arith.constant 1.000000e+00 : f32
    %434 = vector.broadcast %cst_187 : f32 to vector<16x128xf32>
    %435 = arith.addf %433, %434 : vector<16x128xf32>
    %cst_188 = arith.constant 5.000000e-01 : f32
    %436 = vector.broadcast %cst_188 : f32 to vector<16x128xf32>
    %437 = arith.mulf %436, %435 : vector<16x128xf32>
    %438 = arith.mulf %427, %368 : vector<16x128xf32>
    %439 = arith.mulf %419, %429 : vector<16x128xf32>
    %440 = arith.addf %438, %439 : vector<16x128xf32>
    %441 = math.tanh %440 : vector<16x128xf32>
    %442 = arith.mulf %437, %441 : vector<16x128xf32>
    %443 = arith.mulf %404, %442 : vector<16x128xf32>
    %cst_189 = arith.constant 1.000000e+00 : f32
    %444 = vector.broadcast %cst_189 : f32 to vector<16x128xf32>
    %445 = arith.subf %444, %404 : vector<16x128xf32>
    %446 = arith.mulf %445, %367 : vector<16x128xf32>
    %447 = arith.addf %443, %446 : vector<16x128xf32>
    %448 = arith.mulf %404, %440 : vector<16x128xf32>
    %cst_190 = arith.constant 1.000000e+00 : f32
    %449 = vector.broadcast %cst_190 : f32 to vector<16x128xf32>
    %450 = arith.subf %449, %404 : vector<16x128xf32>
    %451 = arith.mulf %450, %368 : vector<16x128xf32>
    %452 = arith.addf %448, %451 : vector<16x128xf32>
    %453 = arith.index_cast %c0_i32_172 : i32 to index
    %c0_191 = arith.constant 0 : index
    %c0_192 = arith.constant 0 : index
    %454 = vector.load %arg17[%453, %c0_191, %c0_192] : memref<8x16x128xf32, #tpu.memory_space<vmem>>, vector<1x16x128xf32>
    %455 = vector.shape_cast %454 : vector<1x16x128xf32> to vector<16x128xf32>
    %456 = arith.mulf %447, %455 : vector<16x128xf32>
    %457 = arith.addf %401, %456 : vector<16x128xf32>
    %c1_i32_193 = arith.constant 1 : i32
    %458 = arith.index_cast %c1_i32_193 : i32 to index
    %c0_194 = arith.constant 0 : index
    %c0_195 = arith.constant 0 : index
    %459 = vector.load %arg16[%458, %c0_194, %c0_195] : memref<8x16x128xf32, #tpu.memory_space<vmem>>, vector<1x16x128xf32>
    %460 = vector.shape_cast %459 : vector<1x16x128xf32> to vector<16x128xf32>
    %461 = arith.index_cast %c1_i32_193 : i32 to index
    %c0_196 = arith.constant 0 : index
    %c0_197 = arith.constant 0 : index
    %462 = vector.load %arg14[%461, %c0_196, %c0_197] : memref<8x16x512xf32, #tpu.memory_space<vmem>>, vector<1x16x512xf32>
    %463 = vector.shape_cast %462 : vector<1x16x512xf32> to vector<16x512xf32>
    %464 = arith.truncf %447 : vector<16x128xf32> to vector<16x128xbf16>
    %c0_198 = arith.constant 0 : index
    %c0_199 = arith.constant 0 : index
    %465 = vector.load %arg4[%c0_198, %c0_199] : memref<128x512xbf16, #tpu.memory_space<vmem>>, vector<128x512xbf16>
    %cst_200 = arith.constant dense<0.000000e+00> : vector<16x512xf32>
    %466 = tpu.matmul %464, %465, %cst_200 {dimension_numbers = #tpu.dot_dimension_numbers<[1], [0], [0], [1], [0, 0, 1, 1], [], []>} : vector<16x128xbf16>, vector<128x512xbf16>, vector<16x512xf32> -> vector<16x512xf32>
    %467 = arith.addf %463, %466 : vector<16x512xf32>
    %468 = vector.extract_strided_slice %467 {offsets = [0, 0], sizes = [16, 128], strides = [1, 1]} : vector<16x512xf32> to vector<16x128xf32>
    %cst_201 = arith.constant 5.000000e-01 : f32
    %469 = vector.broadcast %cst_201 : f32 to vector<16x128xf32>
    %470 = arith.mulf %469, %468 : vector<16x128xf32>
    %471 = math.tanh %470 : vector<16x128xf32>
    %cst_202 = arith.constant 1.000000e+00 : f32
    %472 = vector.broadcast %cst_202 : f32 to vector<16x128xf32>
    %473 = arith.addf %471, %472 : vector<16x128xf32>
    %cst_203 = arith.constant 5.000000e-01 : f32
    %474 = vector.broadcast %cst_203 : f32 to vector<16x128xf32>
    %475 = arith.mulf %474, %473 : vector<16x128xf32>
    %476 = vector.extract_strided_slice %467 {offsets = [0, 128], sizes = [16, 128], strides = [1, 1]} : vector<16x512xf32> to vector<16x128xf32>
    %cst_204 = arith.constant 5.000000e-01 : f32
    %477 = vector.broadcast %cst_204 : f32 to vector<16x128xf32>
    %478 = arith.mulf %477, %476 : vector<16x128xf32>
    %479 = math.tanh %478 : vector<16x128xf32>
    %cst_205 = arith.constant 1.000000e+00 : f32
    %480 = vector.broadcast %cst_205 : f32 to vector<16x128xf32>
    %481 = arith.addf %479, %480 : vector<16x128xf32>
    %cst_206 = arith.constant 5.000000e-01 : f32
    %482 = vector.broadcast %cst_206 : f32 to vector<16x128xf32>
    %483 = arith.mulf %482, %481 : vector<16x128xf32>
    %484 = vector.extract_strided_slice %467 {offsets = [0, 256], sizes = [16, 128], strides = [1, 1]} : vector<16x512xf32> to vector<16x128xf32>
    %485 = math.tanh %484 : vector<16x128xf32>
    %486 = vector.extract_strided_slice %467 {offsets = [0, 384], sizes = [16, 128], strides = [1, 1]} : vector<16x512xf32> to vector<16x128xf32>
    %cst_207 = arith.constant 5.000000e-01 : f32
    %487 = vector.broadcast %cst_207 : f32 to vector<16x128xf32>
    %488 = arith.mulf %487, %486 : vector<16x128xf32>
    %489 = math.tanh %488 : vector<16x128xf32>
    %cst_208 = arith.constant 1.000000e+00 : f32
    %490 = vector.broadcast %cst_208 : f32 to vector<16x128xf32>
    %491 = arith.addf %489, %490 : vector<16x128xf32>
    %cst_209 = arith.constant 5.000000e-01 : f32
    %492 = vector.broadcast %cst_209 : f32 to vector<16x128xf32>
    %493 = arith.mulf %492, %491 : vector<16x128xf32>
    %494 = arith.mulf %483, %452 : vector<16x128xf32>
    %495 = arith.mulf %475, %485 : vector<16x128xf32>
    %496 = arith.addf %494, %495 : vector<16x128xf32>
    %497 = math.tanh %496 : vector<16x128xf32>
    %498 = arith.mulf %493, %497 : vector<16x128xf32>
    %499 = arith.mulf %460, %498 : vector<16x128xf32>
    %cst_210 = arith.constant 1.000000e+00 : f32
    %500 = vector.broadcast %cst_210 : f32 to vector<16x128xf32>
    %501 = arith.subf %500, %460 : vector<16x128xf32>
    %502 = arith.mulf %501, %447 : vector<16x128xf32>
    %503 = arith.addf %499, %502 : vector<16x128xf32>
    %504 = arith.mulf %460, %496 : vector<16x128xf32>
    %cst_211 = arith.constant 1.000000e+00 : f32
    %505 = vector.broadcast %cst_211 : f32 to vector<16x128xf32>
    %506 = arith.subf %505, %460 : vector<16x128xf32>
    %507 = arith.mulf %506, %452 : vector<16x128xf32>
    %508 = arith.addf %504, %507 : vector<16x128xf32>
    %509 = arith.index_cast %c1_i32_193 : i32 to index
    %c0_212 = arith.constant 0 : index
    %c0_213 = arith.constant 0 : index
    %510 = vector.load %arg17[%509, %c0_212, %c0_213] : memref<8x16x128xf32, #tpu.memory_space<vmem>>, vector<1x16x128xf32>
    %511 = vector.shape_cast %510 : vector<1x16x128xf32> to vector<16x128xf32>
    %512 = arith.mulf %503, %511 : vector<16x128xf32>
    %513 = arith.addf %457, %512 : vector<16x128xf32>
    %c2_i32_214 = arith.constant 2 : i32
    %514 = arith.index_cast %c2_i32_214 : i32 to index
    %c0_215 = arith.constant 0 : index
    %c0_216 = arith.constant 0 : index
    %515 = vector.load %arg16[%514, %c0_215, %c0_216] : memref<8x16x128xf32, #tpu.memory_space<vmem>>, vector<1x16x128xf32>
    %516 = vector.shape_cast %515 : vector<1x16x128xf32> to vector<16x128xf32>
    %517 = arith.index_cast %c2_i32_214 : i32 to index
    %c0_217 = arith.constant 0 : index
    %c0_218 = arith.constant 0 : index
    %518 = vector.load %arg14[%517, %c0_217, %c0_218] : memref<8x16x512xf32, #tpu.memory_space<vmem>>, vector<1x16x512xf32>
    %519 = vector.shape_cast %518 : vector<1x16x512xf32> to vector<16x512xf32>
    %520 = arith.truncf %503 : vector<16x128xf32> to vector<16x128xbf16>
    %c0_219 = arith.constant 0 : index
    %c0_220 = arith.constant 0 : index
    %521 = vector.load %arg4[%c0_219, %c0_220] : memref<128x512xbf16, #tpu.memory_space<vmem>>, vector<128x512xbf16>
    %cst_221 = arith.constant dense<0.000000e+00> : vector<16x512xf32>
    %522 = tpu.matmul %520, %521, %cst_221 {dimension_numbers = #tpu.dot_dimension_numbers<[1], [0], [0], [1], [0, 0, 1, 1], [], []>} : vector<16x128xbf16>, vector<128x512xbf16>, vector<16x512xf32> -> vector<16x512xf32>
    %523 = arith.addf %519, %522 : vector<16x512xf32>
    %524 = vector.extract_strided_slice %523 {offsets = [0, 0], sizes = [16, 128], strides = [1, 1]} : vector<16x512xf32> to vector<16x128xf32>
    %cst_222 = arith.constant 5.000000e-01 : f32
    %525 = vector.broadcast %cst_222 : f32 to vector<16x128xf32>
    %526 = arith.mulf %525, %524 : vector<16x128xf32>
    %527 = math.tanh %526 : vector<16x128xf32>
    %cst_223 = arith.constant 1.000000e+00 : f32
    %528 = vector.broadcast %cst_223 : f32 to vector<16x128xf32>
    %529 = arith.addf %527, %528 : vector<16x128xf32>
    %cst_224 = arith.constant 5.000000e-01 : f32
    %530 = vector.broadcast %cst_224 : f32 to vector<16x128xf32>
    %531 = arith.mulf %530, %529 : vector<16x128xf32>
    %532 = vector.extract_strided_slice %523 {offsets = [0, 128], sizes = [16, 128], strides = [1, 1]} : vector<16x512xf32> to vector<16x128xf32>
    %cst_225 = arith.constant 5.000000e-01 : f32
    %533 = vector.broadcast %cst_225 : f32 to vector<16x128xf32>
    %534 = arith.mulf %533, %532 : vector<16x128xf32>
    %535 = math.tanh %534 : vector<16x128xf32>
    %cst_226 = arith.constant 1.000000e+00 : f32
    %536 = vector.broadcast %cst_226 : f32 to vector<16x128xf32>
    %537 = arith.addf %535, %536 : vector<16x128xf32>
    %cst_227 = arith.constant 5.000000e-01 : f32
    %538 = vector.broadcast %cst_227 : f32 to vector<16x128xf32>
    %539 = arith.mulf %538, %537 : vector<16x128xf32>
    %540 = vector.extract_strided_slice %523 {offsets = [0, 256], sizes = [16, 128], strides = [1, 1]} : vector<16x512xf32> to vector<16x128xf32>
    %541 = math.tanh %540 : vector<16x128xf32>
    %542 = vector.extract_strided_slice %523 {offsets = [0, 384], sizes = [16, 128], strides = [1, 1]} : vector<16x512xf32> to vector<16x128xf32>
    %cst_228 = arith.constant 5.000000e-01 : f32
    %543 = vector.broadcast %cst_228 : f32 to vector<16x128xf32>
    %544 = arith.mulf %543, %542 : vector<16x128xf32>
    %545 = math.tanh %544 : vector<16x128xf32>
    %cst_229 = arith.constant 1.000000e+00 : f32
    %546 = vector.broadcast %cst_229 : f32 to vector<16x128xf32>
    %547 = arith.addf %545, %546 : vector<16x128xf32>
    %cst_230 = arith.constant 5.000000e-01 : f32
    %548 = vector.broadcast %cst_230 : f32 to vector<16x128xf32>
    %549 = arith.mulf %548, %547 : vector<16x128xf32>
    %550 = arith.mulf %539, %508 : vector<16x128xf32>
    %551 = arith.mulf %531, %541 : vector<16x128xf32>
    %552 = arith.addf %550, %551 : vector<16x128xf32>
    %553 = math.tanh %552 : vector<16x128xf32>
    %554 = arith.mulf %549, %553 : vector<16x128xf32>
    %555 = arith.mulf %516, %554 : vector<16x128xf32>
    %cst_231 = arith.constant 1.000000e+00 : f32
    %556 = vector.broadcast %cst_231 : f32 to vector<16x128xf32>
    %557 = arith.subf %556, %516 : vector<16x128xf32>
    %558 = arith.mulf %557, %503 : vector<16x128xf32>
    %559 = arith.addf %555, %558 : vector<16x128xf32>
    %560 = arith.mulf %516, %552 : vector<16x128xf32>
    %cst_232 = arith.constant 1.000000e+00 : f32
    %561 = vector.broadcast %cst_232 : f32 to vector<16x128xf32>
    %562 = arith.subf %561, %516 : vector<16x128xf32>
    %563 = arith.mulf %562, %508 : vector<16x128xf32>
    %564 = arith.addf %560, %563 : vector<16x128xf32>
    %565 = arith.index_cast %c2_i32_214 : i32 to index
    %c0_233 = arith.constant 0 : index
    %c0_234 = arith.constant 0 : index
    %566 = vector.load %arg17[%565, %c0_233, %c0_234] : memref<8x16x128xf32, #tpu.memory_space<vmem>>, vector<1x16x128xf32>
    %567 = vector.shape_cast %566 : vector<1x16x128xf32> to vector<16x128xf32>
    %568 = arith.mulf %559, %567 : vector<16x128xf32>
    %569 = arith.addf %513, %568 : vector<16x128xf32>
    %c3_i32_235 = arith.constant 3 : i32
    %570 = arith.index_cast %c3_i32_235 : i32 to index
    %c0_236 = arith.constant 0 : index
    %c0_237 = arith.constant 0 : index
    %571 = vector.load %arg16[%570, %c0_236, %c0_237] : memref<8x16x128xf32, #tpu.memory_space<vmem>>, vector<1x16x128xf32>
    %572 = vector.shape_cast %571 : vector<1x16x128xf32> to vector<16x128xf32>
    %573 = arith.index_cast %c3_i32_235 : i32 to index
    %c0_238 = arith.constant 0 : index
    %c0_239 = arith.constant 0 : index
    %574 = vector.load %arg14[%573, %c0_238, %c0_239] : memref<8x16x512xf32, #tpu.memory_space<vmem>>, vector<1x16x512xf32>
    %575 = vector.shape_cast %574 : vector<1x16x512xf32> to vector<16x512xf32>
    %576 = arith.truncf %559 : vector<16x128xf32> to vector<16x128xbf16>
    %c0_240 = arith.constant 0 : index
    %c0_241 = arith.constant 0 : index
    %577 = vector.load %arg4[%c0_240, %c0_241] : memref<128x512xbf16, #tpu.memory_space<vmem>>, vector<128x512xbf16>
    %cst_242 = arith.constant dense<0.000000e+00> : vector<16x512xf32>
    %578 = tpu.matmul %576, %577, %cst_242 {dimension_numbers = #tpu.dot_dimension_numbers<[1], [0], [0], [1], [0, 0, 1, 1], [], []>} : vector<16x128xbf16>, vector<128x512xbf16>, vector<16x512xf32> -> vector<16x512xf32>
    %579 = arith.addf %575, %578 : vector<16x512xf32>
    %580 = vector.extract_strided_slice %579 {offsets = [0, 0], sizes = [16, 128], strides = [1, 1]} : vector<16x512xf32> to vector<16x128xf32>
    %cst_243 = arith.constant 5.000000e-01 : f32
    %581 = vector.broadcast %cst_243 : f32 to vector<16x128xf32>
    %582 = arith.mulf %581, %580 : vector<16x128xf32>
    %583 = math.tanh %582 : vector<16x128xf32>
    %cst_244 = arith.constant 1.000000e+00 : f32
    %584 = vector.broadcast %cst_244 : f32 to vector<16x128xf32>
    %585 = arith.addf %583, %584 : vector<16x128xf32>
    %cst_245 = arith.constant 5.000000e-01 : f32
    %586 = vector.broadcast %cst_245 : f32 to vector<16x128xf32>
    %587 = arith.mulf %586, %585 : vector<16x128xf32>
    %588 = vector.extract_strided_slice %579 {offsets = [0, 128], sizes = [16, 128], strides = [1, 1]} : vector<16x512xf32> to vector<16x128xf32>
    %cst_246 = arith.constant 5.000000e-01 : f32
    %589 = vector.broadcast %cst_246 : f32 to vector<16x128xf32>
    %590 = arith.mulf %589, %588 : vector<16x128xf32>
    %591 = math.tanh %590 : vector<16x128xf32>
    %cst_247 = arith.constant 1.000000e+00 : f32
    %592 = vector.broadcast %cst_247 : f32 to vector<16x128xf32>
    %593 = arith.addf %591, %592 : vector<16x128xf32>
    %cst_248 = arith.constant 5.000000e-01 : f32
    %594 = vector.broadcast %cst_248 : f32 to vector<16x128xf32>
    %595 = arith.mulf %594, %593 : vector<16x128xf32>
    %596 = vector.extract_strided_slice %579 {offsets = [0, 256], sizes = [16, 128], strides = [1, 1]} : vector<16x512xf32> to vector<16x128xf32>
    %597 = math.tanh %596 : vector<16x128xf32>
    %598 = vector.extract_strided_slice %579 {offsets = [0, 384], sizes = [16, 128], strides = [1, 1]} : vector<16x512xf32> to vector<16x128xf32>
    %cst_249 = arith.constant 5.000000e-01 : f32
    %599 = vector.broadcast %cst_249 : f32 to vector<16x128xf32>
    %600 = arith.mulf %599, %598 : vector<16x128xf32>
    %601 = math.tanh %600 : vector<16x128xf32>
    %cst_250 = arith.constant 1.000000e+00 : f32
    %602 = vector.broadcast %cst_250 : f32 to vector<16x128xf32>
    %603 = arith.addf %601, %602 : vector<16x128xf32>
    %cst_251 = arith.constant 5.000000e-01 : f32
    %604 = vector.broadcast %cst_251 : f32 to vector<16x128xf32>
    %605 = arith.mulf %604, %603 : vector<16x128xf32>
    %606 = arith.mulf %595, %564 : vector<16x128xf32>
    %607 = arith.mulf %587, %597 : vector<16x128xf32>
    %608 = arith.addf %606, %607 : vector<16x128xf32>
    %609 = math.tanh %608 : vector<16x128xf32>
    %610 = arith.mulf %605, %609 : vector<16x128xf32>
    %611 = arith.mulf %572, %610 : vector<16x128xf32>
    %cst_252 = arith.constant 1.000000e+00 : f32
    %612 = vector.broadcast %cst_252 : f32 to vector<16x128xf32>
    %613 = arith.subf %612, %572 : vector<16x128xf32>
    %614 = arith.mulf %613, %559 : vector<16x128xf32>
    %615 = arith.addf %611, %614 : vector<16x128xf32>
    %616 = arith.mulf %572, %608 : vector<16x128xf32>
    %cst_253 = arith.constant 1.000000e+00 : f32
    %617 = vector.broadcast %cst_253 : f32 to vector<16x128xf32>
    %618 = arith.subf %617, %572 : vector<16x128xf32>
    %619 = arith.mulf %618, %564 : vector<16x128xf32>
    %620 = arith.addf %616, %619 : vector<16x128xf32>
    %621 = arith.index_cast %c3_i32_235 : i32 to index
    %c0_254 = arith.constant 0 : index
    %c0_255 = arith.constant 0 : index
    %622 = vector.load %arg17[%621, %c0_254, %c0_255] : memref<8x16x128xf32, #tpu.memory_space<vmem>>, vector<1x16x128xf32>
    %623 = vector.shape_cast %622 : vector<1x16x128xf32> to vector<16x128xf32>
    %624 = arith.mulf %615, %623 : vector<16x128xf32>
    %625 = arith.addf %569, %624 : vector<16x128xf32>
    %c4_i32_256 = arith.constant 4 : i32
    %626 = arith.index_cast %c4_i32_256 : i32 to index
    %c0_257 = arith.constant 0 : index
    %c0_258 = arith.constant 0 : index
    %627 = vector.load %arg16[%626, %c0_257, %c0_258] : memref<8x16x128xf32, #tpu.memory_space<vmem>>, vector<1x16x128xf32>
    %628 = vector.shape_cast %627 : vector<1x16x128xf32> to vector<16x128xf32>
    %629 = arith.index_cast %c4_i32_256 : i32 to index
    %c0_259 = arith.constant 0 : index
    %c0_260 = arith.constant 0 : index
    %630 = vector.load %arg14[%629, %c0_259, %c0_260] : memref<8x16x512xf32, #tpu.memory_space<vmem>>, vector<1x16x512xf32>
    %631 = vector.shape_cast %630 : vector<1x16x512xf32> to vector<16x512xf32>
    %632 = arith.truncf %615 : vector<16x128xf32> to vector<16x128xbf16>
    %c0_261 = arith.constant 0 : index
    %c0_262 = arith.constant 0 : index
    %633 = vector.load %arg4[%c0_261, %c0_262] : memref<128x512xbf16, #tpu.memory_space<vmem>>, vector<128x512xbf16>
    %cst_263 = arith.constant dense<0.000000e+00> : vector<16x512xf32>
    %634 = tpu.matmul %632, %633, %cst_263 {dimension_numbers = #tpu.dot_dimension_numbers<[1], [0], [0], [1], [0, 0, 1, 1], [], []>} : vector<16x128xbf16>, vector<128x512xbf16>, vector<16x512xf32> -> vector<16x512xf32>
    %635 = arith.addf %631, %634 : vector<16x512xf32>
    %636 = vector.extract_strided_slice %635 {offsets = [0, 0], sizes = [16, 128], strides = [1, 1]} : vector<16x512xf32> to vector<16x128xf32>
    %cst_264 = arith.constant 5.000000e-01 : f32
    %637 = vector.broadcast %cst_264 : f32 to vector<16x128xf32>
    %638 = arith.mulf %637, %636 : vector<16x128xf32>
    %639 = math.tanh %638 : vector<16x128xf32>
    %cst_265 = arith.constant 1.000000e+00 : f32
    %640 = vector.broadcast %cst_265 : f32 to vector<16x128xf32>
    %641 = arith.addf %639, %640 : vector<16x128xf32>
    %cst_266 = arith.constant 5.000000e-01 : f32
    %642 = vector.broadcast %cst_266 : f32 to vector<16x128xf32>
    %643 = arith.mulf %642, %641 : vector<16x128xf32>
    %644 = vector.extract_strided_slice %635 {offsets = [0, 128], sizes = [16, 128], strides = [1, 1]} : vector<16x512xf32> to vector<16x128xf32>
    %cst_267 = arith.constant 5.000000e-01 : f32
    %645 = vector.broadcast %cst_267 : f32 to vector<16x128xf32>
    %646 = arith.mulf %645, %644 : vector<16x128xf32>
    %647 = math.tanh %646 : vector<16x128xf32>
    %cst_268 = arith.constant 1.000000e+00 : f32
    %648 = vector.broadcast %cst_268 : f32 to vector<16x128xf32>
    %649 = arith.addf %647, %648 : vector<16x128xf32>
    %cst_269 = arith.constant 5.000000e-01 : f32
    %650 = vector.broadcast %cst_269 : f32 to vector<16x128xf32>
    %651 = arith.mulf %650, %649 : vector<16x128xf32>
    %652 = vector.extract_strided_slice %635 {offsets = [0, 256], sizes = [16, 128], strides = [1, 1]} : vector<16x512xf32> to vector<16x128xf32>
    %653 = math.tanh %652 : vector<16x128xf32>
    %654 = vector.extract_strided_slice %635 {offsets = [0, 384], sizes = [16, 128], strides = [1, 1]} : vector<16x512xf32> to vector<16x128xf32>
    %cst_270 = arith.constant 5.000000e-01 : f32
    %655 = vector.broadcast %cst_270 : f32 to vector<16x128xf32>
    %656 = arith.mulf %655, %654 : vector<16x128xf32>
    %657 = math.tanh %656 : vector<16x128xf32>
    %cst_271 = arith.constant 1.000000e+00 : f32
    %658 = vector.broadcast %cst_271 : f32 to vector<16x128xf32>
    %659 = arith.addf %657, %658 : vector<16x128xf32>
    %cst_272 = arith.constant 5.000000e-01 : f32
    %660 = vector.broadcast %cst_272 : f32 to vector<16x128xf32>
    %661 = arith.mulf %660, %659 : vector<16x128xf32>
    %662 = arith.mulf %651, %620 : vector<16x128xf32>
    %663 = arith.mulf %643, %653 : vector<16x128xf32>
    %664 = arith.addf %662, %663 : vector<16x128xf32>
    %665 = math.tanh %664 : vector<16x128xf32>
    %666 = arith.mulf %661, %665 : vector<16x128xf32>
    %667 = arith.mulf %628, %666 : vector<16x128xf32>
    %cst_273 = arith.constant 1.000000e+00 : f32
    %668 = vector.broadcast %cst_273 : f32 to vector<16x128xf32>
    %669 = arith.subf %668, %628 : vector<16x128xf32>
    %670 = arith.mulf %669, %615 : vector<16x128xf32>
    %671 = arith.addf %667, %670 : vector<16x128xf32>
    %672 = arith.mulf %628, %664 : vector<16x128xf32>
    %cst_274 = arith.constant 1.000000e+00 : f32
    %673 = vector.broadcast %cst_274 : f32 to vector<16x128xf32>
    %674 = arith.subf %673, %628 : vector<16x128xf32>
    %675 = arith.mulf %674, %620 : vector<16x128xf32>
    %676 = arith.addf %672, %675 : vector<16x128xf32>
    %677 = arith.index_cast %c4_i32_256 : i32 to index
    %c0_275 = arith.constant 0 : index
    %c0_276 = arith.constant 0 : index
    %678 = vector.load %arg17[%677, %c0_275, %c0_276] : memref<8x16x128xf32, #tpu.memory_space<vmem>>, vector<1x16x128xf32>
    %679 = vector.shape_cast %678 : vector<1x16x128xf32> to vector<16x128xf32>
    %680 = arith.mulf %671, %679 : vector<16x128xf32>
    %681 = arith.addf %625, %680 : vector<16x128xf32>
    %c5_i32_277 = arith.constant 5 : i32
    %682 = arith.index_cast %c5_i32_277 : i32 to index
    %c0_278 = arith.constant 0 : index
    %c0_279 = arith.constant 0 : index
    %683 = vector.load %arg16[%682, %c0_278, %c0_279] : memref<8x16x128xf32, #tpu.memory_space<vmem>>, vector<1x16x128xf32>
    %684 = vector.shape_cast %683 : vector<1x16x128xf32> to vector<16x128xf32>
    %685 = arith.index_cast %c5_i32_277 : i32 to index
    %c0_280 = arith.constant 0 : index
    %c0_281 = arith.constant 0 : index
    %686 = vector.load %arg14[%685, %c0_280, %c0_281] : memref<8x16x512xf32, #tpu.memory_space<vmem>>, vector<1x16x512xf32>
    %687 = vector.shape_cast %686 : vector<1x16x512xf32> to vector<16x512xf32>
    %688 = arith.truncf %671 : vector<16x128xf32> to vector<16x128xbf16>
    %c0_282 = arith.constant 0 : index
    %c0_283 = arith.constant 0 : index
    %689 = vector.load %arg4[%c0_282, %c0_283] : memref<128x512xbf16, #tpu.memory_space<vmem>>, vector<128x512xbf16>
    %cst_284 = arith.constant dense<0.000000e+00> : vector<16x512xf32>
    %690 = tpu.matmul %688, %689, %cst_284 {dimension_numbers = #tpu.dot_dimension_numbers<[1], [0], [0], [1], [0, 0, 1, 1], [], []>} : vector<16x128xbf16>, vector<128x512xbf16>, vector<16x512xf32> -> vector<16x512xf32>
    %691 = arith.addf %687, %690 : vector<16x512xf32>
    %692 = vector.extract_strided_slice %691 {offsets = [0, 0], sizes = [16, 128], strides = [1, 1]} : vector<16x512xf32> to vector<16x128xf32>
    %cst_285 = arith.constant 5.000000e-01 : f32
    %693 = vector.broadcast %cst_285 : f32 to vector<16x128xf32>
    %694 = arith.mulf %693, %692 : vector<16x128xf32>
    %695 = math.tanh %694 : vector<16x128xf32>
    %cst_286 = arith.constant 1.000000e+00 : f32
    %696 = vector.broadcast %cst_286 : f32 to vector<16x128xf32>
    %697 = arith.addf %695, %696 : vector<16x128xf32>
    %cst_287 = arith.constant 5.000000e-01 : f32
    %698 = vector.broadcast %cst_287 : f32 to vector<16x128xf32>
    %699 = arith.mulf %698, %697 : vector<16x128xf32>
    %700 = vector.extract_strided_slice %691 {offsets = [0, 128], sizes = [16, 128], strides = [1, 1]} : vector<16x512xf32> to vector<16x128xf32>
    %cst_288 = arith.constant 5.000000e-01 : f32
    %701 = vector.broadcast %cst_288 : f32 to vector<16x128xf32>
    %702 = arith.mulf %701, %700 : vector<16x128xf32>
    %703 = math.tanh %702 : vector<16x128xf32>
    %cst_289 = arith.constant 1.000000e+00 : f32
    %704 = vector.broadcast %cst_289 : f32 to vector<16x128xf32>
    %705 = arith.addf %703, %704 : vector<16x128xf32>
    %cst_290 = arith.constant 5.000000e-01 : f32
    %706 = vector.broadcast %cst_290 : f32 to vector<16x128xf32>
    %707 = arith.mulf %706, %705 : vector<16x128xf32>
    %708 = vector.extract_strided_slice %691 {offsets = [0, 256], sizes = [16, 128], strides = [1, 1]} : vector<16x512xf32> to vector<16x128xf32>
    %709 = math.tanh %708 : vector<16x128xf32>
    %710 = vector.extract_strided_slice %691 {offsets = [0, 384], sizes = [16, 128], strides = [1, 1]} : vector<16x512xf32> to vector<16x128xf32>
    %cst_291 = arith.constant 5.000000e-01 : f32
    %711 = vector.broadcast %cst_291 : f32 to vector<16x128xf32>
    %712 = arith.mulf %711, %710 : vector<16x128xf32>
    %713 = math.tanh %712 : vector<16x128xf32>
    %cst_292 = arith.constant 1.000000e+00 : f32
    %714 = vector.broadcast %cst_292 : f32 to vector<16x128xf32>
    %715 = arith.addf %713, %714 : vector<16x128xf32>
    %cst_293 = arith.constant 5.000000e-01 : f32
    %716 = vector.broadcast %cst_293 : f32 to vector<16x128xf32>
    %717 = arith.mulf %716, %715 : vector<16x128xf32>
    %718 = arith.mulf %707, %676 : vector<16x128xf32>
    %719 = arith.mulf %699, %709 : vector<16x128xf32>
    %720 = arith.addf %718, %719 : vector<16x128xf32>
    %721 = math.tanh %720 : vector<16x128xf32>
    %722 = arith.mulf %717, %721 : vector<16x128xf32>
    %723 = arith.mulf %684, %722 : vector<16x128xf32>
    %cst_294 = arith.constant 1.000000e+00 : f32
    %724 = vector.broadcast %cst_294 : f32 to vector<16x128xf32>
    %725 = arith.subf %724, %684 : vector<16x128xf32>
    %726 = arith.mulf %725, %671 : vector<16x128xf32>
    %727 = arith.addf %723, %726 : vector<16x128xf32>
    %728 = arith.mulf %684, %720 : vector<16x128xf32>
    %cst_295 = arith.constant 1.000000e+00 : f32
    %729 = vector.broadcast %cst_295 : f32 to vector<16x128xf32>
    %730 = arith.subf %729, %684 : vector<16x128xf32>
    %731 = arith.mulf %730, %676 : vector<16x128xf32>
    %732 = arith.addf %728, %731 : vector<16x128xf32>
    %733 = arith.index_cast %c5_i32_277 : i32 to index
    %c0_296 = arith.constant 0 : index
    %c0_297 = arith.constant 0 : index
    %734 = vector.load %arg17[%733, %c0_296, %c0_297] : memref<8x16x128xf32, #tpu.memory_space<vmem>>, vector<1x16x128xf32>
    %735 = vector.shape_cast %734 : vector<1x16x128xf32> to vector<16x128xf32>
    %736 = arith.mulf %727, %735 : vector<16x128xf32>
    %737 = arith.addf %681, %736 : vector<16x128xf32>
    %c6_i32_298 = arith.constant 6 : i32
    %738 = arith.index_cast %c6_i32_298 : i32 to index
    %c0_299 = arith.constant 0 : index
    %c0_300 = arith.constant 0 : index
    %739 = vector.load %arg16[%738, %c0_299, %c0_300] : memref<8x16x128xf32, #tpu.memory_space<vmem>>, vector<1x16x128xf32>
    %740 = vector.shape_cast %739 : vector<1x16x128xf32> to vector<16x128xf32>
    %741 = arith.index_cast %c6_i32_298 : i32 to index
    %c0_301 = arith.constant 0 : index
    %c0_302 = arith.constant 0 : index
    %742 = vector.load %arg14[%741, %c0_301, %c0_302] : memref<8x16x512xf32, #tpu.memory_space<vmem>>, vector<1x16x512xf32>
    %743 = vector.shape_cast %742 : vector<1x16x512xf32> to vector<16x512xf32>
    %744 = arith.truncf %727 : vector<16x128xf32> to vector<16x128xbf16>
    %c0_303 = arith.constant 0 : index
    %c0_304 = arith.constant 0 : index
    %745 = vector.load %arg4[%c0_303, %c0_304] : memref<128x512xbf16, #tpu.memory_space<vmem>>, vector<128x512xbf16>
    %cst_305 = arith.constant dense<0.000000e+00> : vector<16x512xf32>
    %746 = tpu.matmul %744, %745, %cst_305 {dimension_numbers = #tpu.dot_dimension_numbers<[1], [0], [0], [1], [0, 0, 1, 1], [], []>} : vector<16x128xbf16>, vector<128x512xbf16>, vector<16x512xf32> -> vector<16x512xf32>
    %747 = arith.addf %743, %746 : vector<16x512xf32>
    %748 = vector.extract_strided_slice %747 {offsets = [0, 0], sizes = [16, 128], strides = [1, 1]} : vector<16x512xf32> to vector<16x128xf32>
    %cst_306 = arith.constant 5.000000e-01 : f32
    %749 = vector.broadcast %cst_306 : f32 to vector<16x128xf32>
    %750 = arith.mulf %749, %748 : vector<16x128xf32>
    %751 = math.tanh %750 : vector<16x128xf32>
    %cst_307 = arith.constant 1.000000e+00 : f32
    %752 = vector.broadcast %cst_307 : f32 to vector<16x128xf32>
    %753 = arith.addf %751, %752 : vector<16x128xf32>
    %cst_308 = arith.constant 5.000000e-01 : f32
    %754 = vector.broadcast %cst_308 : f32 to vector<16x128xf32>
    %755 = arith.mulf %754, %753 : vector<16x128xf32>
    %756 = vector.extract_strided_slice %747 {offsets = [0, 128], sizes = [16, 128], strides = [1, 1]} : vector<16x512xf32> to vector<16x128xf32>
    %cst_309 = arith.constant 5.000000e-01 : f32
    %757 = vector.broadcast %cst_309 : f32 to vector<16x128xf32>
    %758 = arith.mulf %757, %756 : vector<16x128xf32>
    %759 = math.tanh %758 : vector<16x128xf32>
    %cst_310 = arith.constant 1.000000e+00 : f32
    %760 = vector.broadcast %cst_310 : f32 to vector<16x128xf32>
    %761 = arith.addf %759, %760 : vector<16x128xf32>
    %cst_311 = arith.constant 5.000000e-01 : f32
    %762 = vector.broadcast %cst_311 : f32 to vector<16x128xf32>
    %763 = arith.mulf %762, %761 : vector<16x128xf32>
    %764 = vector.extract_strided_slice %747 {offsets = [0, 256], sizes = [16, 128], strides = [1, 1]} : vector<16x512xf32> to vector<16x128xf32>
    %765 = math.tanh %764 : vector<16x128xf32>
    %766 = vector.extract_strided_slice %747 {offsets = [0, 384], sizes = [16, 128], strides = [1, 1]} : vector<16x512xf32> to vector<16x128xf32>
    %cst_312 = arith.constant 5.000000e-01 : f32
    %767 = vector.broadcast %cst_312 : f32 to vector<16x128xf32>
    %768 = arith.mulf %767, %766 : vector<16x128xf32>
    %769 = math.tanh %768 : vector<16x128xf32>
    %cst_313 = arith.constant 1.000000e+00 : f32
    %770 = vector.broadcast %cst_313 : f32 to vector<16x128xf32>
    %771 = arith.addf %769, %770 : vector<16x128xf32>
    %cst_314 = arith.constant 5.000000e-01 : f32
    %772 = vector.broadcast %cst_314 : f32 to vector<16x128xf32>
    %773 = arith.mulf %772, %771 : vector<16x128xf32>
    %774 = arith.mulf %763, %732 : vector<16x128xf32>
    %775 = arith.mulf %755, %765 : vector<16x128xf32>
    %776 = arith.addf %774, %775 : vector<16x128xf32>
    %777 = math.tanh %776 : vector<16x128xf32>
    %778 = arith.mulf %773, %777 : vector<16x128xf32>
    %779 = arith.mulf %740, %778 : vector<16x128xf32>
    %cst_315 = arith.constant 1.000000e+00 : f32
    %780 = vector.broadcast %cst_315 : f32 to vector<16x128xf32>
    %781 = arith.subf %780, %740 : vector<16x128xf32>
    %782 = arith.mulf %781, %727 : vector<16x128xf32>
    %783 = arith.addf %779, %782 : vector<16x128xf32>
    %784 = arith.mulf %740, %776 : vector<16x128xf32>
    %cst_316 = arith.constant 1.000000e+00 : f32
    %785 = vector.broadcast %cst_316 : f32 to vector<16x128xf32>
    %786 = arith.subf %785, %740 : vector<16x128xf32>
    %787 = arith.mulf %786, %732 : vector<16x128xf32>
    %788 = arith.addf %784, %787 : vector<16x128xf32>
    %789 = arith.index_cast %c6_i32_298 : i32 to index
    %c0_317 = arith.constant 0 : index
    %c0_318 = arith.constant 0 : index
    %790 = vector.load %arg17[%789, %c0_317, %c0_318] : memref<8x16x128xf32, #tpu.memory_space<vmem>>, vector<1x16x128xf32>
    %791 = vector.shape_cast %790 : vector<1x16x128xf32> to vector<16x128xf32>
    %792 = arith.mulf %783, %791 : vector<16x128xf32>
    %793 = arith.addf %737, %792 : vector<16x128xf32>
    %c7_i32_319 = arith.constant 7 : i32
    %794 = arith.index_cast %c7_i32_319 : i32 to index
    %c0_320 = arith.constant 0 : index
    %c0_321 = arith.constant 0 : index
    %795 = vector.load %arg16[%794, %c0_320, %c0_321] : memref<8x16x128xf32, #tpu.memory_space<vmem>>, vector<1x16x128xf32>
    %796 = vector.shape_cast %795 : vector<1x16x128xf32> to vector<16x128xf32>
    %797 = arith.index_cast %c7_i32_319 : i32 to index
    %c0_322 = arith.constant 0 : index
    %c0_323 = arith.constant 0 : index
    %798 = vector.load %arg14[%797, %c0_322, %c0_323] : memref<8x16x512xf32, #tpu.memory_space<vmem>>, vector<1x16x512xf32>
    %799 = vector.shape_cast %798 : vector<1x16x512xf32> to vector<16x512xf32>
    %800 = arith.truncf %783 : vector<16x128xf32> to vector<16x128xbf16>
    %c0_324 = arith.constant 0 : index
    %c0_325 = arith.constant 0 : index
    %801 = vector.load %arg4[%c0_324, %c0_325] : memref<128x512xbf16, #tpu.memory_space<vmem>>, vector<128x512xbf16>
    %cst_326 = arith.constant dense<0.000000e+00> : vector<16x512xf32>
    %802 = tpu.matmul %800, %801, %cst_326 {dimension_numbers = #tpu.dot_dimension_numbers<[1], [0], [0], [1], [0, 0, 1, 1], [], []>} : vector<16x128xbf16>, vector<128x512xbf16>, vector<16x512xf32> -> vector<16x512xf32>
    %803 = arith.addf %799, %802 : vector<16x512xf32>
    %804 = vector.extract_strided_slice %803 {offsets = [0, 0], sizes = [16, 128], strides = [1, 1]} : vector<16x512xf32> to vector<16x128xf32>
    %cst_327 = arith.constant 5.000000e-01 : f32
    %805 = vector.broadcast %cst_327 : f32 to vector<16x128xf32>
    %806 = arith.mulf %805, %804 : vector<16x128xf32>
    %807 = math.tanh %806 : vector<16x128xf32>
    %cst_328 = arith.constant 1.000000e+00 : f32
    %808 = vector.broadcast %cst_328 : f32 to vector<16x128xf32>
    %809 = arith.addf %807, %808 : vector<16x128xf32>
    %cst_329 = arith.constant 5.000000e-01 : f32
    %810 = vector.broadcast %cst_329 : f32 to vector<16x128xf32>
    %811 = arith.mulf %810, %809 : vector<16x128xf32>
    %812 = vector.extract_strided_slice %803 {offsets = [0, 128], sizes = [16, 128], strides = [1, 1]} : vector<16x512xf32> to vector<16x128xf32>
    %cst_330 = arith.constant 5.000000e-01 : f32
    %813 = vector.broadcast %cst_330 : f32 to vector<16x128xf32>
    %814 = arith.mulf %813, %812 : vector<16x128xf32>
    %815 = math.tanh %814 : vector<16x128xf32>
    %cst_331 = arith.constant 1.000000e+00 : f32
    %816 = vector.broadcast %cst_331 : f32 to vector<16x128xf32>
    %817 = arith.addf %815, %816 : vector<16x128xf32>
    %cst_332 = arith.constant 5.000000e-01 : f32
    %818 = vector.broadcast %cst_332 : f32 to vector<16x128xf32>
    %819 = arith.mulf %818, %817 : vector<16x128xf32>
    %820 = vector.extract_strided_slice %803 {offsets = [0, 256], sizes = [16, 128], strides = [1, 1]} : vector<16x512xf32> to vector<16x128xf32>
    %821 = math.tanh %820 : vector<16x128xf32>
    %822 = vector.extract_strided_slice %803 {offsets = [0, 384], sizes = [16, 128], strides = [1, 1]} : vector<16x512xf32> to vector<16x128xf32>
    %cst_333 = arith.constant 5.000000e-01 : f32
    %823 = vector.broadcast %cst_333 : f32 to vector<16x128xf32>
    %824 = arith.mulf %823, %822 : vector<16x128xf32>
    %825 = math.tanh %824 : vector<16x128xf32>
    %cst_334 = arith.constant 1.000000e+00 : f32
    %826 = vector.broadcast %cst_334 : f32 to vector<16x128xf32>
    %827 = arith.addf %825, %826 : vector<16x128xf32>
    %cst_335 = arith.constant 5.000000e-01 : f32
    %828 = vector.broadcast %cst_335 : f32 to vector<16x128xf32>
    %829 = arith.mulf %828, %827 : vector<16x128xf32>
    %830 = arith.mulf %819, %788 : vector<16x128xf32>
    %831 = arith.mulf %811, %821 : vector<16x128xf32>
    %832 = arith.addf %830, %831 : vector<16x128xf32>
    %833 = math.tanh %832 : vector<16x128xf32>
    %834 = arith.mulf %829, %833 : vector<16x128xf32>
    %835 = arith.mulf %796, %834 : vector<16x128xf32>
    %cst_336 = arith.constant 1.000000e+00 : f32
    %836 = vector.broadcast %cst_336 : f32 to vector<16x128xf32>
    %837 = arith.subf %836, %796 : vector<16x128xf32>
    %838 = arith.mulf %837, %783 : vector<16x128xf32>
    %839 = arith.addf %835, %838 : vector<16x128xf32>
    %840 = arith.mulf %796, %832 : vector<16x128xf32>
    %cst_337 = arith.constant 1.000000e+00 : f32
    %841 = vector.broadcast %cst_337 : f32 to vector<16x128xf32>
    %842 = arith.subf %841, %796 : vector<16x128xf32>
    %843 = arith.mulf %842, %788 : vector<16x128xf32>
    %844 = arith.addf %840, %843 : vector<16x128xf32>
    %845 = arith.index_cast %c7_i32_319 : i32 to index
    %c0_338 = arith.constant 0 : index
    %c0_339 = arith.constant 0 : index
    %846 = vector.load %arg17[%845, %c0_338, %c0_339] : memref<8x16x128xf32, #tpu.memory_space<vmem>>, vector<1x16x128xf32>
    %847 = vector.shape_cast %846 : vector<1x16x128xf32> to vector<16x128xf32>
    %848 = arith.mulf %839, %847 : vector<16x128xf32>
    %849 = arith.addf %793, %848 : vector<16x128xf32>
    %c8_i32_340 = arith.constant 8 : i32
    %c0_341 = arith.constant 0 : index
    %c0_342 = arith.constant 0 : index
    %850 = vector.load %arg11[%c0_341, %c0_342] : memref<128x128xf32, #tpu.memory_space<vmem>>, vector<128x128xf32>
    %cst_343 = arith.constant dense<0.000000e+00> : vector<16x128xf32>
    %851 = tpu.matmul %849, %850, %cst_343 {dimension_numbers = #tpu.dot_dimension_numbers<[1], [0], [0], [1], [0, 0, 1, 1], [], []>} : vector<16x128xf32>, vector<128x128xf32>, vector<16x128xf32> -> vector<16x128xf32>
    %c0_344 = arith.constant 0 : index
    %c0_345 = arith.constant 0 : index
    %852 = vector.load %arg12[%c0_344, %c0_345] : memref<1x128xf32, #tpu.memory_space<vmem>>, vector<1x128xf32>
    %853 = vector.broadcast %852 : vector<1x128xf32> to vector<16x128xf32>
    %854 = arith.addf %851, %853 : vector<16x128xf32>
    %c0_346 = arith.constant 0 : index
    %c0_347 = arith.constant 0 : index
    %855 = vector.load %arg13[%c0_346, %c0_347] : memref<16x128xf32, #tpu.memory_space<vmem>>, vector<16x128xf32>
    tpu.vector_store %arg13[%c0_346, %c0_347], %854 {strides = array<i32>} : memref<16x128xf32, #tpu.memory_space<vmem>>, vector<16x128xf32>,
    return
  }
  func.func @transform_0(%arg0: i32) -> (i32, i32, i32) {
    %c0_i32 = arith.constant 0 : i32
    %c0_i32_0 = arith.constant 0 : i32
    %c0_i32_1 = arith.constant 0 : i32
    return %c0_i32, %arg0, %c0_i32_0 : i32, i32, i32
  }
  func.func @transform_1(%arg0: i32) -> (i32, i32) {
    %c0_i32 = arith.constant 0 : i32
    %c0_i32_0 = arith.constant 0 : i32
    return %arg0, %c0_i32 : i32, i32
  }
  func.func @transform_2(%arg0: i32) -> (i32, i32) {
    %c0_i32 = arith.constant 0 : i32
    %c0_i32_0 = arith.constant 0 : i32
    %c0_i32_1 = arith.constant 0 : i32
    return %c0_i32, %c0_i32_0 : i32, i32
  }
  func.func @transform_3(%arg0: i32) -> (i32, i32) {
    %c0_i32 = arith.constant 0 : i32
    %c0_i32_0 = arith.constant 0 : i32
    %c0_i32_1 = arith.constant 0 : i32
    return %c0_i32, %c0_i32_0 : i32, i32
  }
  func.func @transform_4(%arg0: i32) -> (i32, i32) {
    %c0_i32 = arith.constant 0 : i32
    %c0_i32_0 = arith.constant 0 : i32
    %c0_i32_1 = arith.constant 0 : i32
    return %c0_i32, %c0_i32_0 : i32, i32
  }
  func.func @transform_5(%arg0: i32) -> (i32, i32) {
    %c0_i32 = arith.constant 0 : i32
    %c0_i32_0 = arith.constant 0 : i32
    %c0_i32_1 = arith.constant 0 : i32
    return %c0_i32, %c0_i32_0 : i32, i32
  }
  func.func @transform_6(%arg0: i32) -> (i32, i32) {
    %c0_i32 = arith.constant 0 : i32
    %c0_i32_0 = arith.constant 0 : i32
    %c0_i32_1 = arith.constant 0 : i32
    return %c0_i32, %c0_i32_0 : i32, i32
  }
  func.func @transform_7(%arg0: i32) -> (i32, i32) {
    %c0_i32 = arith.constant 0 : i32
    %c0_i32_0 = arith.constant 0 : i32
    %c0_i32_1 = arith.constant 0 : i32
    return %c0_i32, %c0_i32_0 : i32, i32
  }
  func.func @transform_8(%arg0: i32) -> (i32, i32) {
    %c0_i32 = arith.constant 0 : i32
    %c0_i32_0 = arith.constant 0 : i32
    %c0_i32_1 = arith.constant 0 : i32
    return %c0_i32, %c0_i32_0 : i32, i32
  }
  func.func @transform_9(%arg0: i32) -> (i32, i32) {
    %c0_i32 = arith.constant 0 : i32
    %c0_i32_0 = arith.constant 0 : i32
    %c0_i32_1 = arith.constant 0 : i32
    return %c0_i32, %c0_i32_0 : i32, i32
  }
  func.func @transform_10(%arg0: i32) -> (i32, i32) {
    %c0_i32 = arith.constant 0 : i32
    %c0_i32_0 = arith.constant 0 : i32
    %c0_i32_1 = arith.constant 0 : i32
    return %c0_i32, %c0_i32_0 : i32, i32
  }
  func.func @transform_11(%arg0: i32) -> (i32, i32) {
    %c0_i32 = arith.constant 0 : i32
    %c0_i32_0 = arith.constant 0 : i32
    %c0_i32_1 = arith.constant 0 : i32
    return %c0_i32, %c0_i32_0 : i32, i32
  }
  func.func @transform_12(%arg0: i32) -> (i32, i32) {
    %c0_i32 = arith.constant 0 : i32
    %c0_i32_0 = arith.constant 0 : i32
    return %arg0, %c0_i32 : i32, i32
  }
}

</mosaic_0001>

<llo_original>
// kernel: tpu_custom_call.1
$region0: #{tpu_custom_call.1}
  #allocation0 [shape = 'u32[]', space=smem, size = 0x4, offset = 0x4, fixed_abs, tag = 'smem constant byte address 0x4 - core index']
  #allocation1 [shape = 'u32[72,128]{1,0:T(1,128)}', space=vmem, size = 0x9000, scoped, tag = 'internal scratch']
  #allocation2 [shape = 'f32[8,16,512]{2,1,0:T(8,128)}', space=vmem, size = 0x40000, scoped, tag = 'scratch operand']
  #allocation3 [shape = 'f32[8,16,128]{2,1,0:T(8,128)}', space=vmem, size = 0x10000, scoped, tag = 'scratch operand']
  #allocation4 [shape = 'f32[8,16,128]{2,1,0:T(8,128)}', space=vmem, size = 0x10000, scoped, tag = 'scratch operand']
  #allocation5 [shape = 'f32[8,16,128]{2,1,0:T(8,128)}', space=vmem, size = 0x10000, scoped, tag = 'scratch operand']
  #allocation6 [shape = 'f32[1,1]{1,0:T(1,128)S(1)}', space=vmem, size = 0x200, scoped, tag = 'scoped memory for tpu_custom_call.1']
  %s0 = inlined_call_operand.hbm [shape: bf16[8,16,128], index: 0, kind: input, shape index: {}]
  %s1 = inlined_call_operand.vmem [shape: s32[16,1], index: 1, kind: input, shape index: {}]
  %s2 = inlined_call_operand.hbm [shape: bf16[128,512], index: 2, kind: input, shape index: {}]
  %s3 = inlined_call_operand.hbm [shape: bf16[128,512], index: 3, kind: input, shape index: {}]
  %s4 = inlined_call_operand.vmem [shape: f32[1,512], index: 4, kind: input, shape index: {}]
  %s5 = inlined_call_operand.hbm [shape: bf16[128,128], index: 5, kind: input, shape index: {}]
  %s6 = inlined_call_operand.hbm [shape: bf16[128,128], index: 6, kind: input, shape index: {}]
  %s7 = inlined_call_operand.vmem [shape: f32[1,128], index: 7, kind: input, shape index: {}]
  %s8 = inlined_call_operand.vmem [shape: f32[1,128], index: 8, kind: input, shape index: {}]
  %s9 = inlined_call_operand.<no memory space> [shape: f32[1,1], index: 9, kind: input, shape index: {}]
  %s10 = inlined_call_operand.hbm [shape: f32[128,128], index: 10, kind: input, shape index: {}]
  %s11 = inlined_call_operand.vmem [shape: f32[1,128], index: 11, kind: input, shape index: {}]
  %s12 = inlined_call_operand.hbm [shape: f32[16,128], index: 12, kind: output, shape index: {}]
  %s13 = sld [smem:[#allocation0]]
  $region82: #{tpu_custom_call.1} parent=0
    _
  %s15 = ssub.s32 1, %s13
  %s16 = scalar_select 0, %s15, %s13
  %v17 = vstv %s9
  %18 = vst [vmem:[#allocation6] sm:$0x1] %v17
  $region1: #{tpu_custom_call.1} parent=0
    #allocation7 [shape = 'u8[32768]{0}', space=vmem, size = 0x8000, scoped, tag = 'input window, operand 0, single buffered']
    #allocation8 [shape = 's32[1]{0}', space=sflag, size = 0x4, scoped, tag = 'scoped memory for tpu_custom_call.1']
    #allocation9 [shape = 's32[1]{0}', space=sflag, size = 0x4, scoped, tag = 'scoped memory for tpu_custom_call.1']
    #allocation10 [shape = 'u8[131072]{0}', space=vmem, size = 0x20000, scoped, tag = 'input window, operand 2, single buffered']
    #allocation11 [shape = 's32[1]{0}', space=sflag, size = 0x4, scoped, tag = 'scoped memory for tpu_custom_call.1']
    #allocation12 [shape = 'u8[131072]{0}', space=vmem, size = 0x20000, scoped, tag = 'input window, operand 3, single buffered']
    #allocation13 [shape = 'u8[32768]{0}', space=vmem, size = 0x8000, scoped, tag = 'input window, operand 5, single buffered']
    #allocation14 [shape = 's32[1]{0}', space=sflag, size = 0x4, scoped, tag = 'scoped memory for tpu_custom_call.1']
    #allocation15 [shape = 'u8[32768]{0}', space=vmem, size = 0x8000, scoped, tag = 'input window, operand 6, single buffered']
    #allocation16 [shape = 'u8[65536]{0}', space=vmem, size = 0x10000, scoped, tag = 'input window, operand 10, single buffered']
    #allocation17 [shape = 's32[1]{0}', space=sflag, size = 0x4, scoped, tag = 'scoped memory for tpu_custom_call.1']
    #allocation18 [shape = 'u8[8192]{0}', space=vmem, size = 0x2000, scoped, tag = 'output window, operand 0, single buffered']
    %19 = vsyncpa [#allocation8], 0
    %20 = vsyncpa [#allocation11], 0
    %21 = vsyncpa [#allocation14], 0
    %22 = vsyncpa [#allocation17], 0
    %23 = vsyncpa [#allocation9], 0
    // Predicated region
    $region2: #{tpu_custom_call.1} parent=1 // pred_check
      _
    $region3: #{tpu_custom_call.1} parent=1 // pred_check_branch
      %25 = sbr.rel (0) target = $region5
    $region4: #{tpu_custom_call.1} parent=1 // pred_region
      %27 = vsyncadd [#allocation8], 0
      %s28 = sshll.u32 %s0, 4
      %s29 = int_to_ptr.hbm [resolvable:$true] %s28
      %s30 = sshll.u32 [#allocation7], 4
      %s31 = int_to_ptr.vmem [resolvable:$true] %s30
      %36 = dma.hbm_to_vmem [thread:$0]  %s29, 1024, %s31, [#allocation8], 64, 64, 4
    $region5: #{tpu_custom_call.1} parent=1 // pred_fallthru
      _
    // Predicated region
    $region6: #{tpu_custom_call.1} parent=1 // pred_check
      _
    $region7: #{tpu_custom_call.1} parent=1 // pred_check_branch
      %38 = sbr.rel (0) target = $region9
    $region8: #{tpu_custom_call.1} parent=1 // pred_region
      _
    $region9: #{tpu_custom_call.1} parent=1 // pred_fallthru
      _
    // Predicated region
    $region10: #{tpu_custom_call.1} parent=1 // pred_check
      _
    $region11: #{tpu_custom_call.1} parent=1 // pred_check_branch
      %40 = sbr.rel (0) target = $region13
    $region12: #{tpu_custom_call.1} parent=1 // pred_region
      %42 = vsyncadd [#allocation11], 0
      %s43 = sshll.u32 %s2, 4
      %s44 = int_to_ptr.hbm [resolvable:$true] %s43
      %s45 = sshll.u32 [#allocation10], 4
      %s46 = int_to_ptr.vmem [resolvable:$true] %s45
      %51 = dma.hbm_to_vmem [thread:$0]  %s44, 4096, %s46, [#allocation11], 256, 256, 16
    $region13: #{tpu_custom_call.1} parent=1 // pred_fallthru
      _
    // Predicated region
    $region14: #{tpu_custom_call.1} parent=1 // pred_check
      _
    $region15: #{tpu_custom_call.1} parent=1 // pred_check_branch
      %53 = sbr.rel (0) target = $region17
    $region16: #{tpu_custom_call.1} parent=1 // pred_region
      %55 = vsyncadd [#allocation11], 0
      %s56 = sshll.u32 %s3, 4
      %s57 = int_to_ptr.hbm [resolvable:$true] %s56
      %s58 = sshll.u32 [#allocation12], 4
      %s59 = int_to_ptr.vmem [resolvable:$true] %s58
      %64 = dma.hbm_to_vmem [thread:$0]  %s57, 4096, %s59, [#allocation11], 256, 256, 16
    $region17: #{tpu_custom_call.1} parent=1 // pred_fallthru
      _
    // Predicated region
    $region18: #{tpu_custom_call.1} parent=1 // pred_check
      _
    $region19: #{tpu_custom_call.1} parent=1 // pred_check_branch
      %66 = sbr.rel (0) target = $region21
    $region20: #{tpu_custom_call.1} parent=1 // pred_region
      _
    $region21: #{tpu_custom_call.1} parent=1 // pred_fallthru
      _
    // Predicated region
    $region22: #{tpu_custom_call.1} parent=1 // pred_check
      _
    $region23: #{tpu_custom_call.1} parent=1 // pred_check_branch
      %68 = sbr.rel (0) target = $region25
    $region24: #{tpu_custom_call.1} parent=1 // pred_region
      %70 = vsyncadd [#allocation14], 0
      %s71 = sshll.u32 %s5, 4
      %s72 = int_to_ptr.hbm [resolvable:$true] %s71
      %s73 = sshll.u32 [#allocation13], 4
      %s74 = int_to_ptr.vmem [resolvable:$true] %s73
      %79 = dma.hbm_to_vmem [thread:$0]  %s72, 1024, %s74, [#allocation14], 64, 64, 4
    $region25: #{tpu_custom_call.1} parent=1 // pred_fallthru
      _
    // Predicated region
    $region26: #{tpu_custom_call.1} parent=1 // pred_check
      _
    $region27: #{tpu_custom_call.1} parent=1 // pred_check_branch
      %81 = sbr.rel (0) target = $region29
    $region28: #{tpu_custom_call.1} parent=1 // pred_region
      %83 = vsyncadd [#allocation14], 0
      %s84 = sshll.u32 %s6, 4
      %s85 = int_to_ptr.hbm [resolvable:$true] %s84
      %s86 = sshll.u32 [#allocation15], 4
      %s87 = int_to_ptr.vmem [resolvable:$true] %s86
      %92 = dma.hbm_to_vmem [thread:$0]  %s85, 1024, %s87, [#allocation14], 64, 64, 4
    $region29: #{tpu_custom_call.1} parent=1 // pred_fallthru
      _
    // Predicated region
    $region30: #{tpu_custom_call.1} parent=1 // pred_check
      _
    $region31: #{tpu_custom_call.1} parent=1 // pred_check_branch
      %94 = sbr.rel (0) target = $region33
    $region32: #{tpu_custom_call.1} parent=1 // pred_region
      _
    $region33: #{tpu_custom_call.1} parent=1 // pred_fallthru
      _
    // Predicated region
    $region34: #{tpu_custom_call.1} parent=1 // pred_check
      _
    $region35: #{tpu_custom_call.1} parent=1 // pred_check_branch
      %96 = sbr.rel (0) target = $region37
    $region36: #{tpu_custom_call.1} parent=1 // pred_region
      _
    $region37: #{tpu_custom_call.1} parent=1 // pred_fallthru
      _
    // Predicated region
    $region38: #{tpu_custom_call.1} parent=1 // pred_check
      _
    $region39: #{tpu_custom_call.1} parent=1 // pred_check_branch
      %98 = sbr.rel (0) target = $region41
    $region40: #{tpu_custom_call.1} parent=1 // pred_region
      _
    $region41: #{tpu_custom_call.1} parent=1 // pred_fallthru
      _
    // Predicated region
    $region42: #{tpu_custom_call.1} parent=1 // pred_check
      _
    $region43: #{tpu_custom_call.1} parent=1 // pred_check_branch
      %100 = sbr.rel (0) target = $region45
    $region44: #{tpu_custom_call.1} parent=1 // pred_region
      %102 = vsyncadd [#allocation17], 0
      %s103 = sshll.u32 %s10, 4
      %s104 = int_to_ptr.hbm [resolvable:$true] %s103
      %s105 = sshll.u32 [#allocation16], 4
      %s106 = int_to_ptr.vmem [resolvable:$true] %s105
      %111 = dma.hbm_to_vmem [thread:$0]  %s104, 2048, %s106, [#allocation17], 128, 128, 8
    $region45: #{tpu_custom_call.1} parent=1 // pred_fallthru
      _
    // Predicated region
    $region46: #{tpu_custom_call.1} parent=1 // pred_check
      _
    $region47: #{tpu_custom_call.1} parent=1 // pred_check_branch
      %113 = sbr.rel (0) target = $region49
    $region48: #{tpu_custom_call.1} parent=1 // pred_region
      _
    $region49: #{tpu_custom_call.1} parent=1 // pred_fallthru
      _
    // Predicated region
    $region50: #{tpu_custom_call.1} parent=1 // pred_check
      _
    $region51: #{tpu_custom_call.1} parent=1 // pred_check_branch
      %115 = sbr.rel (0) target = $region53
    $region52: #{tpu_custom_call.1} parent=1 // pred_region
      %117 = dma.done [#allocation8], 1024
    $region53: #{tpu_custom_call.1} parent=1 // pred_fallthru
      _
    // Predicated region
    $region54: #{tpu_custom_call.1} parent=1 // pred_check
      _
    $region55: #{tpu_custom_call.1} parent=1 // pred_check_branch
      %119 = sbr.rel (0) target = $region57
    $region56: #{tpu_custom_call.1} parent=1 // pred_region
      %121 = dma.done [#allocation11], 4096
    $region57: #{tpu_custom_call.1} parent=1 // pred_fallthru
      _
    // Predicated region
    $region58: #{tpu_custom_call.1} parent=1 // pred_check
      _
    $region59: #{tpu_custom_call.1} parent=1 // pred_check_branch
      %123 = sbr.rel (0) target = $region61
    $region60: #{tpu_custom_call.1} parent=1 // pred_region
      %125 = dma.done [#allocation11], 4096
    $region61: #{tpu_custom_call.1} parent=1 // pred_fallthru
      _
    // Predicated region
    $region62: #{tpu_custom_call.1} parent=1 // pred_check
      _
    $region63: #{tpu_custom_call.1} parent=1 // pred_check_branch
      %127 = sbr.rel (0) target = $region65
    $region64: #{tpu_custom_call.1} parent=1 // pred_region
      %129 = dma.done [#allocation14], 1024
    $region65: #{tpu_custom_call.1} parent=1 // pred_fallthru
      _
    // Predicated region
    $region66: #{tpu_custom_call.1} parent=1 // pred_check
      _
    $region67: #{tpu_custom_call.1} parent=1 // pred_check_branch
      %131 = sbr.rel (0) target = $region69
    $region68: #{tpu_custom_call.1} parent=1 // pred_region
      %133 = dma.done [#allocation14], 1024
    $region69: #{tpu_custom_call.1} parent=1 // pred_fallthru
      _
    // Predicated region
    $region70: #{tpu_custom_call.1} parent=1 // pred_check
      _
    $region71: #{tpu_custom_call.1} parent=1 // pred_check_branch
      %135 = sbr.rel (0) target = $region73
    $region72: #{tpu_custom_call.1} parent=1 // pred_region
      %137 = dma.done [#allocation17], 2048
    $region73: #{tpu_custom_call.1} parent=1 // pred_fallthru
      _
    %v139 = vld [vmem:[#allocation7] sm:$0xf]
    %v140 = vld [vmem:[#allocation7 + $0x4] sm:$0xf]
    %v141 = vld [vmem:[#allocation7 + $0x8] sm:$0xf]
    %v142 = vld [vmem:[#allocation7 + $0xc] sm:$0xf]
    %v143 = vld [vmem:[#allocation7 + $0x10] sm:$0xf]
    %v144 = vld [vmem:[#allocation7 + $0x14] sm:$0xf]
    %v145 = vld [vmem:[#allocation7 + $0x18] sm:$0xf]
    %v146 = vld [vmem:[#allocation7 + $0x1c] sm:$0xf]
    %v147 = vld [vmem:[#allocation7 + $0x20] sm:$0xf]
    %v148 = vld [vmem:[#allocation7 + $0x24] sm:$0xf]
    %v149 = vld [vmem:[#allocation7 + $0x28] sm:$0xf]
    %v150 = vld [vmem:[#allocation7 + $0x2c] sm:$0xf]
    %v151 = vld [vmem:[#allocation7 + $0x30] sm:$0xf]
    %v152 = vld [vmem:[#allocation7 + $0x34] sm:$0xf]
    %v153 = vld [vmem:[#allocation7 + $0x38] sm:$0xf]
    %v154 = vld [vmem:[#allocation7 + $0x3c] sm:$0xf]
    %v155 = vld [vmem:[#allocation10] sm:$0xff]
    %v156 = vld [vmem:[#allocation10 + $0x8] sm:$0xff]
    %v157 = vld [vmem:[#allocation10 + $0x10] sm:$0xff]
    %v158 = vld [vmem:[#allocation10 + $0x18] sm:$0xff]
    %v159 = vld [vmem:[#allocation10 + $0x20] sm:$0xff]
    %v160 = vld [vmem:[#allocation10 + $0x28] sm:$0xff]
    %v161 = vld [vmem:[#allocation10 + $0x30] sm:$0xff]
    %v162 = vld [vmem:[#allocation10 + $0x38] sm:$0xff]
    %v163 = vld [vmem:[#allocation10 + $0x40] sm:$0xff]
    %v164 = vld [vmem:[#allocation10 + $0x48] sm:$0xff]
    %v165 = vld [vmem:[#allocation10 + $0x50] sm:$0xff]
    %v166 = vld [vmem:[#allocation10 + $0x58] sm:$0xff]
    %v167 = vld [vmem:[#allocation10 + $0x60] sm:$0xff]
    %v168 = vld [vmem:[#allocation10 + $0x68] sm:$0xff]
    %v169 = vld [vmem:[#allocation10 + $0x70] sm:$0xff]
    %v170 = vld [vmem:[#allocation10 + $0x78] sm:$0xff]
    %v171 = vld [vmem:[#allocation10 + $0x80] sm:$0xff]
    %v172 = vld [vmem:[#allocation10 + $0x88] sm:$0xff]
    %v173 = vld [vmem:[#allocation10 + $0x90] sm:$0xff]
    %v174 = vld [vmem:[#allocation10 + $0x98] sm:$0xff]
    %v175 = vld [vmem:[#allocation10 + $0xa0] sm:$0xff]
    %v176 = vld [vmem:[#allocation10 + $0xa8] sm:$0xff]
    %v177 = vld [vmem:[#allocation10 + $0xb0] sm:$0xff]
    %v178 = vld [vmem:[#allocation10 + $0xb8] sm:$0xff]
    %v179 = vld [vmem:[#allocation10 + $0xc0] sm:$0xff]
    %v180 = vld [vmem:[#allocation10 + $0xc8] sm:$0xff]
    %v181 = vld [vmem:[#allocation10 + $0xd0] sm:$0xff]
    %v182 = vld [vmem:[#allocation10 + $0xd8] sm:$0xff]
    %v183 = vld [vmem:[#allocation10 + $0xe0] sm:$0xff]
    %v184 = vld [vmem:[#allocation10 + $0xe8] sm:$0xff]
    %v185 = vld [vmem:[#allocation10 + $0xf0] sm:$0xff]
    %v186 = vld [vmem:[#allocation10 + $0xf8] sm:$0xff]
    %v187 = vld [vmem:[%s4] sm:$0xf]
    %v189 = vperm.slane %v187, 0
    %v190 = vperm.slane %v187, 1
    %v191 = vperm.slane %v187, 2
    %v192 = vperm.slane %v187, 3
    %v213 = vunpack.c.l.b16 %v139
    %v214 = vunpack.c.l.b16 %v140
    %v215 = vunpack.c.l.b16 %v141
    %v216 = vunpack.c.l.b16 %v142
    %v217 = vunpack.c.l.b16 %v143
    %v218 = vunpack.c.l.b16 %v144
    %v219 = vunpack.c.l.b16 %v145
    %v220 = vunpack.c.l.b16 %v146
    %v221 = vunpack.c.l.b16 %v147
    %v222 = vunpack.c.l.b16 %v148
    %v223 = vunpack.c.l.b16 %v149
    %v224 = vunpack.c.l.b16 %v150
    %v225 = vunpack.c.l.b16 %v151
    %v226 = vunpack.c.l.b16 %v152
    %v227 = vunpack.c.l.b16 %v153
    %v228 = vunpack.c.l.b16 %v154
    %v229 = vpack.c.b16 %v214, %v213
    %v230 = vpack.c.b16 %v216, %v215
    %v231 = vpack.c.b16 %v218, %v217
    %v232 = vpack.c.b16 %v220, %v219
    %v233 = vpack.c.b16 %v222, %v221
    %v234 = vpack.c.b16 %v224, %v223
    %v235 = vpack.c.b16 %v226, %v225
    %v236 = vpack.c.b16 %v228, %v227
    %v277 = vunpack.c.l.b16 %v155
    %v278 = vunpack.c.h.b16 %v155
    %v279 = vunpack.c.l.b16 %v156
    %v280 = vunpack.c.h.b16 %v156
    %v281 = vunpack.c.l.b16 %v157
    %v282 = vunpack.c.h.b16 %v157
    %v283 = vunpack.c.l.b16 %v158
    %v284 = vunpack.c.h.b16 %v158
    %v285 = vunpack.c.l.b16 %v159
    %v286 = vunpack.c.h.b16 %v159
    %v287 = vunpack.c.l.b16 %v160
    %v288 = vunpack.c.h.b16 %v160
    %v289 = vunpack.c.l.b16 %v161
    %v290 = vunpack.c.h.b16 %v161
    %v291 = vunpack.c.l.b16 %v162
    %v292 = vunpack.c.h.b16 %v162
    %v293 = vunpack.c.l.b16 %v163
    %v294 = vunpack.c.h.b16 %v163
    %v295 = vunpack.c.l.b16 %v164
    %v296 = vunpack.c.h.b16 %v164
    %v297 = vunpack.c.l.b16 %v165
    %v298 = vunpack.c.h.b16 %v165
    %v299 = vunpack.c.l.b16 %v166
    %v300 = vunpack.c.h.b16 %v166
    %v301 = vunpack.c.l.b16 %v167
    %v302 = vunpack.c.h.b16 %v167
    %v303 = vunpack.c.l.b16 %v168
    %v304 = vunpack.c.h.b16 %v168
    %v305 = vunpack.c.l.b16 %v169
    %v306 = vunpack.c.h.b16 %v169
    %v307 = vunpack.c.l.b16 %v170
    %v308 = vunpack.c.h.b16 %v170
    %v309 = vunpack.c.l.b16 %v171
    %v310 = vunpack.c.h.b16 %v171
    %v311 = vunpack.c.l.b16 %v172
    %v312 = vunpack.c.h.b16 %v172
    %v313 = vunpack.c.l.b16 %v173
    %v314 = vunpack.c.h.b16 %v173
    %v315 = vunpack.c.l.b16 %v174
    %v316 = vunpack.c.h.b16 %v174
    %v317 = vunpack.c.l.b16 %v175
    %v318 = vunpack.c.h.b16 %v175
    %v319 = vunpack.c.l.b16 %v176
    %v320 = vunpack.c.h.b16 %v176
    %v321 = vunpack.c.l.b16 %v177
    %v322 = vunpack.c.h.b16 %v177
    %v323 = vunpack.c.l.b16 %v178
    %v324 = vunpack.c.h.b16 %v178
    %v325 = vunpack.c.l.b16 %v179
    %v326 = vunpack.c.h.b16 %v179
    %v327 = vunpack.c.l.b16 %v180
    %v328 = vunpack.c.h.b16 %v180
    %v329 = vunpack.c.l.b16 %v181
    %v330 = vunpack.c.h.b16 %v181
    %v331 = vunpack.c.l.b16 %v182
    %v332 = vunpack.c.h.b16 %v182
    %v333 = vunpack.c.l.b16 %v183
    %v334 = vunpack.c.h.b16 %v183
    %v335 = vunpack.c.l.b16 %v184
    %v336 = vunpack.c.h.b16 %v184
    %v337 = vunpack.c.l.b16 %v185
    %v338 = vunpack.c.h.b16 %v185
    %v339 = vunpack.c.l.b16 %v186
    %v340 = vunpack.c.h.b16 %v186
    %v341 = vpack.c.b16 %v281, %v277
    %v342 = vpack.c.b16 %v282, %v278
    %v343 = vpack.c.b16 %v283, %v279
    %v344 = vpack.c.b16 %v284, %v280
    %v345 = vpack.c.b16 %v289, %v285
    %v346 = vpack.c.b16 %v290, %v286
    %v347 = vpack.c.b16 %v291, %v287
    %v348 = vpack.c.b16 %v292, %v288
    %v349 = vpack.c.b16 %v297, %v293
    %v350 = vpack.c.b16 %v298, %v294
    %v351 = vpack.c.b16 %v299, %v295
    %v352 = vpack.c.b16 %v300, %v296
    %v353 = vpack.c.b16 %v305, %v301
    %v354 = vpack.c.b16 %v306, %v302
    %v355 = vpack.c.b16 %v307, %v303
    %v356 = vpack.c.b16 %v308, %v304
    %v357 = vpack.c.b16 %v313, %v309
    %v358 = vpack.c.b16 %v314, %v310
    %v359 = vpack.c.b16 %v315, %v311
    %v360 = vpack.c.b16 %v316, %v312
    %v361 = vpack.c.b16 %v321, %v317
    %v362 = vpack.c.b16 %v322, %v318
    %v363 = vpack.c.b16 %v323, %v319
    %v364 = vpack.c.b16 %v324, %v320
    %v365 = vpack.c.b16 %v329, %v325
    %v366 = vpack.c.b16 %v330, %v326
    %v367 = vpack.c.b16 %v331, %v327
    %v368 = vpack.c.b16 %v332, %v328
    %v369 = vpack.c.b16 %v337, %v333
    %v370 = vpack.c.b16 %v338, %v334
    %v371 = vpack.c.b16 %v339, %v335
    %v372 = vpack.c.b16 %v340, %v336
    %405 = vmatpush.bf16.msra.mxu0 %v369
    %406 = vmatpush.bf16.msra.mxu0 %v365
    %407 = vmatpush.bf16.msra.mxu0 %v361
    %408 = vmatpush.bf16.msra.mxu0 %v357
    %409 = vmatpush.bf16.msra.mxu0 %v353
    %410 = vmatpush.bf16.msra.mxu0 %v349
    %411 = vmatpush.bf16.msra.mxu0 %v345
    %412 = vmatpush.bf16.msra.mxu0 %v341
    %413 = vmatmul.bf16.gmra.mxu0 %v229
    %v414 = vpop.f32.mrf.mxu0
    %v415 = vadd.f32 %v189, %v414
    %v416 = vpop.f32.mrf.mxu0
    %v417 = vadd.f32 %v189, %v416
    %418 = vmatmul.bf16.gmra.mxu0 %v230
    %v419 = vpop.f32.mrf.mxu0
    %v420 = vadd.f32 %v189, %v419
    %v421 = vpop.f32.mrf.mxu0
    %v422 = vadd.f32 %v189, %v421
    %423 = vmatmul.bf16.gmra.mxu0 %v231
    %v424 = vpop.f32.mrf.mxu0
    %v425 = vadd.f32 %v189, %v424
    %v426 = vpop.f32.mrf.mxu0
    %v427 = vadd.f32 %v189, %v426
    %428 = vmatmul.bf16.gmra.mxu0 %v232
    %v429 = vpop.f32.mrf.mxu0
    %v430 = vadd.f32 %v189, %v429
    %v431 = vpop.f32.mrf.mxu0
    %v432 = vadd.f32 %v189, %v431
    %433 = vmatmul.bf16.gmra.mxu0 %v233
    %v434 = vpop.f32.mrf.mxu0
    %v435 = vadd.f32 %v189, %v434
    %v436 = vpop.f32.mrf.mxu0
    %v437 = vadd.f32 %v189, %v436
    %438 = vmatmul.bf16.gmra.mxu0 %v234
    %v439 = vpop.f32.mrf.mxu0
    %v440 = vadd.f32 %v189, %v439
    %v441 = vpop.f32.mrf.mxu0
    %v442 = vadd.f32 %v189, %v441
    %443 = vmatmul.bf16.gmra.mxu0 %v235
    %v444 = vpop.f32.mrf.mxu0
    %v445 = vadd.f32 %v189, %v444
    %v446 = vpop.f32.mrf.mxu0
    %v447 = vadd.f32 %v189, %v446
    %448 = vmatmul.bf16.gmra.mxu0 %v236
    %v449 = vpop.f32.mrf.mxu0
    %v450 = vadd.f32 %v189, %v449
    %v451 = vpop.f32.mrf.mxu0
    %v452 = vadd.f32 %v189, %v451
    %453 = vdwg.mxu0
    %454 = vmatpush.bf16.msra.mxu0 %v370
    %455 = vmatpush.bf16.msra.mxu0 %v366
    %456 = vmatpush.bf16.msra.mxu0 %v362
    %457 = vmatpush.bf16.msra.mxu0 %v358
    %458 = vmatpush.bf16.msra.mxu0 %v354
    %459 = vmatpush.bf16.msra.mxu0 %v350
    %460 = vmatpush.bf16.msra.mxu0 %v346
    %461 = vmatpush.bf16.msra.mxu0 %v342
    %462 = vmatmul.bf16.gmra.mxu0 %v229
    %v463 = vpop.f32.mrf.mxu0
    %v464 = vadd.f32 %v190, %v463
    %v465 = vpop.f32.mrf.mxu0
    %v466 = vadd.f32 %v190, %v465
    %467 = vmatmul.bf16.gmra.mxu0 %v230
    %v468 = vpop.f32.mrf.mxu0
    %v469 = vadd.f32 %v190, %v468
    %v470 = vpop.f32.mrf.mxu0
    %v471 = vadd.f32 %v190, %v470
    %472 = vmatmul.bf16.gmra.mxu0 %v231
    %v473 = vpop.f32.mrf.mxu0
    %v474 = vadd.f32 %v190, %v473
    %v475 = vpop.f32.mrf.mxu0
    %v476 = vadd.f32 %v190, %v475
    %477 = vmatmul.bf16.gmra.mxu0 %v232
    %v478 = vpop.f32.mrf.mxu0
    %v479 = vadd.f32 %v190, %v478
    %v480 = vpop.f32.mrf.mxu0
    %v481 = vadd.f32 %v190, %v480
    %482 = vmatmul.bf16.gmra.mxu0 %v233
    %v483 = vpop.f32.mrf.mxu0
    %v484 = vadd.f32 %v190, %v483
    %v485 = vpop.f32.mrf.mxu0
    %v486 = vadd.f32 %v190, %v485
    %487 = vmatmul.bf16.gmra.mxu0 %v234
    %v488 = vpop.f32.mrf.mxu0
    %v489 = vadd.f32 %v190, %v488
    %v490 = vpop.f32.mrf.mxu0
    %v491 = vadd.f32 %v190, %v490
    %492 = vmatmul.bf16.gmra.mxu0 %v235
    %v493 = vpop.f32.mrf.mxu0
    %v494 = vadd.f32 %v190, %v493
    %v495 = vpop.f32.mrf.mxu0
    %v496 = vadd.f32 %v190, %v495
    %497 = vmatmul.bf16.gmra.mxu0 %v236
    %v498 = vpop.f32.mrf.mxu0
    %v499 = vadd.f32 %v190, %v498
    %v500 = vpop.f32.mrf.mxu0
    %v501 = vadd.f32 %v190, %v500
    %502 = vdwg.mxu0
    %503 = vmatpush.bf16.msra.mxu0 %v371
    %504 = vmatpush.bf16.msra.mxu0 %v367
    %505 = vmatpush.bf16.msra.mxu0 %v363
    %506 = vmatpush.bf16.msra.mxu0 %v359
    %507 = vmatpush.bf16.msra.mxu0 %v355
    %508 = vmatpush.bf16.msra.mxu0 %v351
    %509 = vmatpush.bf16.msra.mxu0 %v347
    %510 = vmatpush.bf16.msra.mxu0 %v343
    %511 = vmatmul.bf16.gmra.mxu0 %v229
    %v512 = vpop.f32.mrf.mxu0
    %v513 = vadd.f32 %v191, %v512
    %v514 = vpop.f32.mrf.mxu0
    %v515 = vadd.f32 %v191, %v514
    %516 = vmatmul.bf16.gmra.mxu0 %v230
    %v517 = vpop.f32.mrf.mxu0
    %v518 = vadd.f32 %v191, %v517
    %v519 = vpop.f32.mrf.mxu0
    %v520 = vadd.f32 %v191, %v519
    %521 = vmatmul.bf16.gmra.mxu0 %v231
    %v522 = vpop.f32.mrf.mxu0
    %v523 = vadd.f32 %v191, %v522
    %v524 = vpop.f32.mrf.mxu0
    %v525 = vadd.f32 %v191, %v524
    %526 = vmatmul.bf16.gmra.mxu0 %v232
    %v527 = vpop.f32.mrf.mxu0
    %v528 = vadd.f32 %v191, %v527
    %v529 = vpop.f32.mrf.mxu0
    %v530 = vadd.f32 %v191, %v529
    %531 = vmatmul.bf16.gmra.mxu0 %v233
    %v532 = vpop.f32.mrf.mxu0
    %v533 = vadd.f32 %v191, %v532
    %v534 = vpop.f32.mrf.mxu0
    %v535 = vadd.f32 %v191, %v534
    %536 = vmatmul.bf16.gmra.mxu0 %v234
    %v537 = vpop.f32.mrf.mxu0
    %v538 = vadd.f32 %v191, %v537
    %v539 = vpop.f32.mrf.mxu0
    %v540 = vadd.f32 %v191, %v539
    %541 = vmatmul.bf16.gmra.mxu0 %v235
    %v542 = vpop.f32.mrf.mxu0
    %v543 = vadd.f32 %v191, %v542
    %v544 = vpop.f32.mrf.mxu0
    %v545 = vadd.f32 %v191, %v544
    %546 = vmatmul.bf16.gmra.mxu0 %v236
    %v547 = vpop.f32.mrf.mxu0
    %v548 = vadd.f32 %v191, %v547
    %v549 = vpop.f32.mrf.mxu0
    %v550 = vadd.f32 %v191, %v549
    %551 = vdwg.mxu0
    %552 = vmatpush.bf16.msra.mxu0 %v372
    %553 = vmatpush.bf16.msra.mxu0 %v368
    %554 = vmatpush.bf16.msra.mxu0 %v364
    %555 = vmatpush.bf16.msra.mxu0 %v360
    %556 = vmatpush.bf16.msra.mxu0 %v356
    %557 = vmatpush.bf16.msra.mxu0 %v352
    %558 = vmatpush.bf16.msra.mxu0 %v348
    %559 = vmatpush.bf16.msra.mxu0 %v344
    %560 = vmatmul.bf16.gmra.mxu0 %v229
    %v561 = vpop.f32.mrf.mxu0
    %v562 = vadd.f32 %v192, %v561
    %v563 = vpop.f32.mrf.mxu0
    %v564 = vadd.f32 %v192, %v563
    %565 = vmatmul.bf16.gmra.mxu0 %v230
    %v566 = vpop.f32.mrf.mxu0
    %v567 = vadd.f32 %v192, %v566
    %v568 = vpop.f32.mrf.mxu0
    %v569 = vadd.f32 %v192, %v568
    %570 = vmatmul.bf16.gmra.mxu0 %v231
    %v571 = vpop.f32.mrf.mxu0
    %v572 = vadd.f32 %v192, %v571
    %v573 = vpop.f32.mrf.mxu0
    %v574 = vadd.f32 %v192, %v573
    %575 = vmatmul.bf16.gmra.mxu0 %v232
    %v576 = vpop.f32.mrf.mxu0
    %v577 = vadd.f32 %v192, %v576
    %v578 = vpop.f32.mrf.mxu0
    %v579 = vadd.f32 %v192, %v578
    %580 = vmatmul.bf16.gmra.mxu0 %v233
    %v581 = vpop.f32.mrf.mxu0
    %v582 = vadd.f32 %v192, %v581
    %v583 = vpop.f32.mrf.mxu0
    %v584 = vadd.f32 %v192, %v583
    %585 = vmatmul.bf16.gmra.mxu0 %v234
    %v586 = vpop.f32.mrf.mxu0
    %v587 = vadd.f32 %v192, %v586
    %v588 = vpop.f32.mrf.mxu0
    %v589 = vadd.f32 %v192, %v588
    %590 = vmatmul.bf16.gmra.mxu0 %v235
    %v591 = vpop.f32.mrf.mxu0
    %v592 = vadd.f32 %v192, %v591
    %v593 = vpop.f32.mrf.mxu0
    %v594 = vadd.f32 %v192, %v593
    %595 = vmatmul.bf16.gmra.mxu0 %v236
    %v596 = vpop.f32.mrf.mxu0
    %v597 = vadd.f32 %v192, %v596
    %v598 = vpop.f32.mrf.mxu0
    %v599 = vadd.f32 %v192, %v598
    %600 = vdwg.mxu0
    %601 = vst [vmem:[#allocation2] sm:$0xff] %v415
    %602 = vst [vmem:[#allocation2 + $0x8] sm:$0xff] %v464
    %603 = vst [vmem:[#allocation2 + $0x10] sm:$0xff] %v513
    %604 = vst [vmem:[#allocation2 + $0x18] sm:$0xff] %v562
    %605 = vst [vmem:[#allocation2 + $0x20] sm:$0xff] %v417
    %606 = vst [vmem:[#allocation2 + $0x28] sm:$0xff] %v466
    %607 = vst [vmem:[#allocation2 + $0x30] sm:$0xff] %v515
    %608 = vst [vmem:[#allocation2 + $0x38] sm:$0xff] %v564
    %609 = vst [vmem:[#allocation2 + $0x40] sm:$0xff] %v420
    %610 = vst [vmem:[#allocation2 + $0x48] sm:$0xff] %v469
    %611 = vst [vmem:[#allocation2 + $0x50] sm:$0xff] %v518
    %612 = vst [vmem:[#allocation2 + $0x58] sm:$0xff] %v567
    %613 = vst [vmem:[#allocation2 + $0x60] sm:$0xff] %v422
    %614 = vst [vmem:[#allocation2 + $0x68] sm:$0xff] %v471
    %615 = vst [vmem:[#allocation2 + $0x70] sm:$0xff] %v520
    %616 = vst [vmem:[#allocation2 + $0x78] sm:$0xff] %v569
    %617 = vst [vmem:[#allocation2 + $0x80] sm:$0xff] %v425
    %618 = vst [vmem:[#allocation2 + $0x88] sm:$0xff] %v474
    %619 = vst [vmem:[#allocation2 + $0x90] sm:$0xff] %v523
    %620 = vst [vmem:[#allocation2 + $0x98] sm:$0xff] %v572
    %621 = vst [vmem:[#allocation2 + $0xa0] sm:$0xff] %v427
    %622 = vst [vmem:[#allocation2 + $0xa8] sm:$0xff] %v476
    %623 = vst [vmem:[#allocation2 + $0xb0] sm:$0xff] %v525
    %624 = vst [vmem:[#allocation2 + $0xb8] sm:$0xff] %v574
    %625 = vst [vmem:[#allocation2 + $0xc0] sm:$0xff] %v430
    %626 = vst [vmem:[#allocation2 + $0xc8] sm:$0xff] %v479
    %627 = vst [vmem:[#allocation2 + $0xd0] sm:$0xff] %v528
    %628 = vst [vmem:[#allocation2 + $0xd8] sm:$0xff] %v577
    %629 = vst [vmem:[#allocation2 + $0xe0] sm:$0xff] %v432
    %630 = vst [vmem:[#allocation2 + $0xe8] sm:$0xff] %v481
    %631 = vst [vmem:[#allocation2 + $0xf0] sm:$0xff] %v530
    %632 = vst [vmem:[#allocation2 + $0xf8] sm:$0xff] %v579
    %633 = vst [vmem:[#allocation2 + $0x100] sm:$0xff] %v435
    %634 = vst [vmem:[#allocation2 + $0x108] sm:$0xff] %v484
    %635 = vst [vmem:[#allocation2 + $0x110] sm:$0xff] %v533
    %636 = vst [vmem:[#allocation2 + $0x118] sm:$0xff] %v582
    %637 = vst [vmem:[#allocation2 + $0x120] sm:$0xff] %v437
    %638 = vst [vmem:[#allocation2 + $0x128] sm:$0xff] %v486
    %639 = vst [vmem:[#allocation2 + $0x130] sm:$0xff] %v535
    %640 = vst [vmem:[#allocation2 + $0x138] sm:$0xff] %v584
    %641 = vst [vmem:[#allocation2 + $0x140] sm:$0xff] %v440
    %642 = vst [vmem:[#allocation2 + $0x148] sm:$0xff] %v489
    %643 = vst [vmem:[#allocation2 + $0x150] sm:$0xff] %v538
    %644 = vst [vmem:[#allocation2 + $0x158] sm:$0xff] %v587
    %645 = vst [vmem:[#allocation2 + $0x160] sm:$0xff] %v442
    %646 = vst [vmem:[#allocation2 + $0x168] sm:$0xff] %v491
    %647 = vst [vmem:[#allocation2 + $0x170] sm:$0xff] %v540
    %648 = vst [vmem:[#allocation2 + $0x178] sm:$0xff] %v589
    %649 = vst [vmem:[#allocation2 + $0x180] sm:$0xff] %v445
    %650 = vst [vmem:[#allocation2 + $0x188] sm:$0xff] %v494
    %651 = vst [vmem:[#allocation2 + $0x190] sm:$0xff] %v543
    %652 = vst [vmem:[#allocation2 + $0x198] sm:$0xff] %v592
    %653 = vst [vmem:[#allocation2 + $0x1a0] sm:$0xff] %v447
    %654 = vst [vmem:[#allocation2 + $0x1a8] sm:$0xff] %v496
    %655 = vst [vmem:[#allocation2 + $0x1b0] sm:$0xff] %v545
    %656 = vst [vmem:[#allocation2 + $0x1b8] sm:$0xff] %v594
    %657 = vst [vmem:[#allocation2 + $0x1c0] sm:$0xff] %v450
    %658 = vst [vmem:[#allocation2 + $0x1c8] sm:$0xff] %v499
    %659 = vst [vmem:[#allocation2 + $0x1d0] sm:$0xff] %v548
    %660 = vst [vmem:[#allocation2 + $0x1d8] sm:$0xff] %v597
    %661 = vst [vmem:[#allocation2 + $0x1e0] sm:$0xff] %v452
    %662 = vst [vmem:[#allocation2 + $0x1e8] sm:$0xff] %v501
    %663 = vst [vmem:[#allocation2 + $0x1f0] sm:$0xff] %v550
    %664 = vst [vmem:[#allocation2 + $0x1f8] sm:$0xff] %v599
    %v665 = vld [vmem:[#allocation13] sm:$0xf]
    %v666 = vld [vmem:[#allocation13 + $0x4] sm:$0xf]
    %v667 = vld [vmem:[#allocation13 + $0x8] sm:$0xf]
    %v668 = vld [vmem:[#allocation13 + $0xc] sm:$0xf]
    %v669 = vld [vmem:[#allocation13 + $0x10] sm:$0xf]
    %v670 = vld [vmem:[#allocation13 + $0x14] sm:$0xf]
    %v671 = vld [vmem:[#allocation13 + $0x18] sm:$0xf]
    %v672 = vld [vmem:[#allocation13 + $0x1c] sm:$0xf]
    %v673 = vld [vmem:[#allocation13 + $0x20] sm:$0xf]
    %v674 = vld [vmem:[#allocation13 + $0x24] sm:$0xf]
    %v675 = vld [vmem:[#allocation13 + $0x28] sm:$0xf]
    %v676 = vld [vmem:[#allocation13 + $0x2c] sm:$0xf]
    %v677 = vld [vmem:[#allocation13 + $0x30] sm:$0xf]
    %v678 = vld [vmem:[#allocation13 + $0x34] sm:$0xf]
    %v679 = vld [vmem:[#allocation13 + $0x38] sm:$0xf]
    %v680 = vld [vmem:[#allocation13 + $0x3c] sm:$0xf]
    %v697 = vunpack.c.l.b16 %v665
    %v698 = vunpack.c.l.b16 %v666
    %v699 = vunpack.c.l.b16 %v667
    %v700 = vunpack.c.l.b16 %v668
    %v701 = vunpack.c.l.b16 %v669
    %v702 = vunpack.c.l.b16 %v670
    %v703 = vunpack.c.l.b16 %v671
    %v704 = vunpack.c.l.b16 %v672
    %v705 = vunpack.c.l.b16 %v673
    %v706 = vunpack.c.l.b16 %v674
    %v707 = vunpack.c.l.b16 %v675
    %v708 = vunpack.c.l.b16 %v676
    %v709 = vunpack.c.l.b16 %v677
    %v710 = vunpack.c.l.b16 %v678
    %v711 = vunpack.c.l.b16 %v679
    %v712 = vunpack.c.l.b16 %v680
    %v713 = vpack.c.b16 %v698, %v697
    %v714 = vpack.c.b16 %v700, %v699
    %v715 = vpack.c.b16 %v702, %v701
    %v716 = vpack.c.b16 %v704, %v703
    %v717 = vpack.c.b16 %v706, %v705
    %v718 = vpack.c.b16 %v708, %v707
    %v719 = vpack.c.b16 %v710, %v709
    %v720 = vpack.c.b16 %v712, %v711
    %729 = vmatpush.bf16.msra.mxu0 %v720
    %730 = vmatpush.bf16.msra.mxu0 %v719
    %731 = vmatpush.bf16.msra.mxu0 %v718
    %732 = vmatpush.bf16.msra.mxu0 %v717
    %733 = vmatpush.bf16.msra.mxu0 %v716
    %734 = vmatpush.bf16.msra.mxu0 %v715
    %735 = vmatpush.bf16.msra.mxu0 %v714
    %736 = vmatpush.bf16.msra.mxu0 %v713
    %737 = vmatmul.bf16.gmra.mxu0 %v229
    %v738 = vpop.f32.mrf.mxu0
    %v739 = vadd.f32 0.0, %v738
    %v740 = vpop.f32.mrf.mxu0
    %v741 = vadd.f32 0.0, %v740
    %742 = vmatmul.bf16.gmra.mxu0 %v230
    %v743 = vpop.f32.mrf.mxu0
    %v744 = vadd.f32 0.0, %v743
    %v745 = vpop.f32.mrf.mxu0
    %v746 = vadd.f32 0.0, %v745
    %747 = vmatmul.bf16.gmra.mxu0 %v231
    %v748 = vpop.f32.mrf.mxu0
    %v749 = vadd.f32 0.0, %v748
    %v750 = vpop.f32.mrf.mxu0
    %v751 = vadd.f32 0.0, %v750
    %752 = vmatmul.bf16.gmra.mxu0 %v232
    %v753 = vpop.f32.mrf.mxu0
    %v754 = vadd.f32 0.0, %v753
    %v755 = vpop.f32.mrf.mxu0
    %v756 = vadd.f32 0.0, %v755
    %757 = vmatmul.bf16.gmra.mxu0 %v233
    %v758 = vpop.f32.mrf.mxu0
    %v759 = vadd.f32 0.0, %v758
    %v760 = vpop.f32.mrf.mxu0
    %v761 = vadd.f32 0.0, %v760
    %762 = vmatmul.bf16.gmra.mxu0 %v234
    %v763 = vpop.f32.mrf.mxu0
    %v764 = vadd.f32 0.0, %v763
    %v765 = vpop.f32.mrf.mxu0
    %v766 = vadd.f32 0.0, %v765
    %767 = vmatmul.bf16.gmra.mxu0 %v235
    %v768 = vpop.f32.mrf.mxu0
    %v769 = vadd.f32 0.0, %v768
    %v770 = vpop.f32.mrf.mxu0
    %v771 = vadd.f32 0.0, %v770
    %772 = vmatmul.bf16.gmra.mxu0 %v236
    %v773 = vpop.f32.mrf.mxu0
    %v774 = vadd.f32 0.0, %v773
    %v775 = vpop.f32.mrf.mxu0
    %v776 = vadd.f32 0.0, %v775
    %777 = vdwg.mxu0
    %778 = vst [vmem:[#allocation3] sm:$0xff] %v739
    %779 = vst [vmem:[#allocation3 + $0x8] sm:$0xff] %v741
    %780 = vst [vmem:[#allocation3 + $0x10] sm:$0xff] %v744
    %781 = vst [vmem:[#allocation3 + $0x18] sm:$0xff] %v746
    %782 = vst [vmem:[#allocation3 + $0x20] sm:$0xff] %v749
    %783 = vst [vmem:[#allocation3 + $0x28] sm:$0xff] %v751
    %784 = vst [vmem:[#allocation3 + $0x30] sm:$0xff] %v754
    %785 = vst [vmem:[#allocation3 + $0x38] sm:$0xff] %v756
    %786 = vst [vmem:[#allocation3 + $0x40] sm:$0xff] %v759
    %787 = vst [vmem:[#allocation3 + $0x48] sm:$0xff] %v761
    %788 = vst [vmem:[#allocation3 + $0x50] sm:$0xff] %v764
    %789 = vst [vmem:[#allocation3 + $0x58] sm:$0xff] %v766
    %790 = vst [vmem:[#allocation3 + $0x60] sm:$0xff] %v769
    %791 = vst [vmem:[#allocation3 + $0x68] sm:$0xff] %v771
    %792 = vst [vmem:[#allocation3 + $0x70] sm:$0xff] %v774
    %793 = vst [vmem:[#allocation3 + $0x78] sm:$0xff] %v776
    %v794 = vld [vmem:[%s1] sm:$0xff]
    %v795 = vld [vmem:[%s1 + $0x8] sm:$0xff]
    %796 = vset.pattern.permute.xlu0 0
    %797 = vperm.xlu0 %796, %v794
    %v798 = vpop.permute.xlu0 %797
    %799 = vset.pattern.permute.xlu0 0
    %800 = vperm.xlu0 %799, %v795
    %v801 = vpop.permute.xlu0 %800
    %vm802 = vcmp.eq.s32.totalorder %v798, 0
    %vm803 = vcmp.eq.s32.totalorder %v801, 0
    %vm804 = vcmp.eq.s32.totalorder %v798, 1
    %vm805 = vcmp.eq.s32.totalorder %v801, 1
    %vm806 = vcmp.eq.s32.totalorder %v798, 2
    %vm807 = vcmp.eq.s32.totalorder %v801, 2
    %vm808 = vcmp.eq.s32.totalorder %v798, 3
    %vm809 = vcmp.eq.s32.totalorder %v801, 3
    %vm810 = vcmp.eq.s32.totalorder %v798, 4
    %vm811 = vcmp.eq.s32.totalorder %v801, 4
    %vm812 = vcmp.eq.s32.totalorder %v798, 5
    %vm813 = vcmp.eq.s32.totalorder %v801, 5
    %vm814 = vcmp.eq.s32.totalorder %v798, 6
    %vm815 = vcmp.eq.s32.totalorder %v801, 6
    %vm816 = vcmp.eq.s32.totalorder %v798, 7
    %vm817 = vcmp.eq.s32.totalorder %v801, 7
    %v818 = vsel %vm802, 1, 0
    %v819 = vsel %vm803, 1, 0
    %v820 = vsel %vm804, 1, 0
    %v821 = vsel %vm805, 1, 0
    %v822 = vsel %vm806, 1, 0
    %v823 = vsel %vm807, 1, 0
    %v824 = vsel %vm808, 1, 0
    %v825 = vsel %vm809, 1, 0
    %v826 = vsel %vm810, 1, 0
    %v827 = vsel %vm811, 1, 0
    %v828 = vsel %vm812, 1, 0
    %v829 = vsel %vm813, 1, 0
    %v830 = vsel %vm814, 1, 0
    %v831 = vsel %vm815, 1, 0
    %v832 = vsel %vm816, 1, 0
    %v833 = vsel %vm817, 1, 0
    %v834 = vcvt.s32.f32 %v818
    %v835 = vcvt.s32.f32 %v819
    %v836 = vcvt.s32.f32 %v820
    %v837 = vcvt.s32.f32 %v821
    %v838 = vcvt.s32.f32 %v822
    %v839 = vcvt.s32.f32 %v823
    %v840 = vcvt.s32.f32 %v824
    %v841 = vcvt.s32.f32 %v825
    %v842 = vcvt.s32.f32 %v826
    %v843 = vcvt.s32.f32 %v827
    %v844 = vcvt.s32.f32 %v828
    %v845 = vcvt.s32.f32 %v829
    %v846 = vcvt.s32.f32 %v830
    %v847 = vcvt.s32.f32 %v831
    %v848 = vcvt.s32.f32 %v832
    %v849 = vcvt.s32.f32 %v833
    %850 = vst [vmem:[#allocation5] sm:$0xff] %v834
    %851 = vst [vmem:[#allocation5 + $0x8] sm:$0xff] %v835
    %852 = vst [vmem:[#allocation5 + $0x10] sm:$0xff] %v836
    %853 = vst [vmem:[#allocation5 + $0x18] sm:$0xff] %v837
    %854 = vst [vmem:[#allocation5 + $0x20] sm:$0xff] %v838
    %855 = vst [vmem:[#allocation5 + $0x28] sm:$0xff] %v839
    %856 = vst [vmem:[#allocation5 + $0x30] sm:$0xff] %v840
    %857 = vst [vmem:[#allocation5 + $0x38] sm:$0xff] %v841
    %858 = vst [vmem:[#allocation5 + $0x40] sm:$0xff] %v842
    %859 = vst [vmem:[#allocation5 + $0x48] sm:$0xff] %v843
    %860 = vst [vmem:[#allocation5 + $0x50] sm:$0xff] %v844
    %861 = vst [vmem:[#allocation5 + $0x58] sm:$0xff] %v845
    %862 = vst [vmem:[#allocation5 + $0x60] sm:$0xff] %v846
    %863 = vst [vmem:[#allocation5 + $0x68] sm:$0xff] %v847
    %864 = vst [vmem:[#allocation5 + $0x70] sm:$0xff] %v848
    %865 = vst [vmem:[#allocation5 + $0x78] sm:$0xff] %v849
    %v866 = vld [vmem:[#allocation2] sm:$0xff]
    %v867 = vld [vmem:[#allocation2 + $0x8] sm:$0xff]
    %v868 = vld [vmem:[#allocation2 + $0x10] sm:$0xff]
    %v869 = vld [vmem:[#allocation2 + $0x18] sm:$0xff]
    %v870 = vld [vmem:[#allocation2 + $0x20] sm:$0xff]
    %v871 = vld [vmem:[#allocation2 + $0x28] sm:$0xff]
    %v872 = vld [vmem:[#allocation2 + $0x30] sm:$0xff]
    %v873 = vld [vmem:[#allocation2 + $0x38] sm:$0xff]
    %v874 = vld [vmem:[#allocation12] sm:$0xff]
    %v875 = vld [vmem:[#allocation12 + $0x8] sm:$0xff]
    %v876 = vld [vmem:[#allocation12 + $0x10] sm:$0xff]
    %v877 = vld [vmem:[#allocation12 + $0x18] sm:$0xff]
    %v878 = vld [vmem:[#allocation12 + $0x20] sm:$0xff]
    %v879 = vld [vmem:[#allocation12 + $0x28] sm:$0xff]
    %v880 = vld [vmem:[#allocation12 + $0x30] sm:$0xff]
    %v881 = vld [vmem:[#allocation12 + $0x38] sm:$0xff]
    %v882 = vld [vmem:[#allocation12 + $0x40] sm:$0xff]
    %v883 = vld [vmem:[#allocation12 + $0x48] sm:$0xff]
    %v884 = vld [vmem:[#allocation12 + $0x50] sm:$0xff]
    %v885 = vld [vmem:[#allocation12 + $0x58] sm:$0xff]
    %v886 = vld [vmem:[#allocation12 + $0x60] sm:$0xff]
    %v887 = vld [vmem:[#allocation12 + $0x68] sm:$0xff]
    %v888 = vld [vmem:[#allocation12 + $0x70] sm:$0xff]
    %v889 = vld [vmem:[#allocation12 + $0x78] sm:$0xff]
    %v890 = vld [vmem:[#allocation12 + $0x80] sm:$0xff]
    %v891 = vld [vmem:[#allocation12 + $0x88] sm:$0xff]
    %v892 = vld [vmem:[#allocation12 + $0x90] sm:$0xff]
    %v893 = vld [vmem:[#allocation12 + $0x98] sm:$0xff]
    %v894 = vld [vmem:[#allocation12 + $0xa0] sm:$0xff]
    %v895 = vld [vmem:[#allocation12 + $0xa8] sm:$0xff]
    %v896 = vld [vmem:[#allocation12 + $0xb0] sm:$0xff]
    %v897 = vld [vmem:[#allocation12 + $0xb8] sm:$0xff]
    %v898 = vld [vmem:[#allocation12 + $0xc0] sm:$0xff]
    %v899 = vld [vmem:[#allocation12 + $0xc8] sm:$0xff]
    %v900 = vld [vmem:[#allocation12 + $0xd0] sm:$0xff]
    %v901 = vld [vmem:[#allocation12 + $0xd8] sm:$0xff]
    %v902 = vld [vmem:[#allocation12 + $0xe0] sm:$0xff]
    %v903 = vld [vmem:[#allocation12 + $0xe8] sm:$0xff]
    %v904 = vld [vmem:[#allocation12 + $0xf0] sm:$0xff]
    %v905 = vld [vmem:[#allocation12 + $0xf8] sm:$0xff]
    %v938 = vunpack.c.l.b16 %v874
    %v939 = vunpack.c.h.b16 %v874
    %v940 = vunpack.c.l.b16 %v875
    %v941 = vunpack.c.h.b16 %v875
    %v942 = vunpack.c.l.b16 %v876
    %v943 = vunpack.c.h.b16 %v876
    %v944 = vunpack.c.l.b16 %v877
    %v945 = vunpack.c.h.b16 %v877
    %v946 = vunpack.c.l.b16 %v878
    %v947 = vunpack.c.h.b16 %v878
    %v948 = vunpack.c.l.b16 %v879
    %v949 = vunpack.c.h.b16 %v879
    %v950 = vunpack.c.l.b16 %v880
    %v951 = vunpack.c.h.b16 %v880
    %v952 = vunpack.c.l.b16 %v881
    %v953 = vunpack.c.h.b16 %v881
    %v954 = vunpack.c.l.b16 %v882
    %v955 = vunpack.c.h.b16 %v882
    %v956 = vunpack.c.l.b16 %v883
    %v957 = vunpack.c.h.b16 %v883
    %v958 = vunpack.c.l.b16 %v884
    %v959 = vunpack.c.h.b16 %v884
    %v960 = vunpack.c.l.b16 %v885
    %v961 = vunpack.c.h.b16 %v885
    %v962 = vunpack.c.l.b16 %v886
    %v963 = vunpack.c.h.b16 %v886
    %v964 = vunpack.c.l.b16 %v887
    %v965 = vunpack.c.h.b16 %v887
    %v966 = vunpack.c.l.b16 %v888
    %v967 = vunpack.c.h.b16 %v888
    %v968 = vunpack.c.l.b16 %v889
    %v969 = vunpack.c.h.b16 %v889
    %v970 = vunpack.c.l.b16 %v890
    %v971 = vunpack.c.h.b16 %v890
    %v972 = vunpack.c.l.b16 %v891
    %v973 = vunpack.c.h.b16 %v891
    %v974 = vunpack.c.l.b16 %v892
    %v975 = vunpack.c.h.b16 %v892
    %v976 = vunpack.c.l.b16 %v893
    %v977 = vunpack.c.h.b16 %v893
    %v978 = vunpack.c.l.b16 %v894
    %v979 = vunpack.c.h.b16 %v894
    %v980 = vunpack.c.l.b16 %v895
    %v981 = vunpack.c.h.b16 %v895
    %v982 = vunpack.c.l.b16 %v896
    %v983 = vunpack.c.h.b16 %v896
    %v984 = vunpack.c.l.b16 %v897
    %v985 = vunpack.c.h.b16 %v897
    %v986 = vunpack.c.l.b16 %v898
    %v987 = vunpack.c.h.b16 %v898
    %v988 = vunpack.c.l.b16 %v899
    %v989 = vunpack.c.h.b16 %v899
    %v990 = vunpack.c.l.b16 %v900
    %v991 = vunpack.c.h.b16 %v900
    %v992 = vunpack.c.l.b16 %v901
    %v993 = vunpack.c.h.b16 %v901
    %v994 = vunpack.c.l.b16 %v902
    %v995 = vunpack.c.h.b16 %v902
    %v996 = vunpack.c.l.b16 %v903
    %v997 = vunpack.c.h.b16 %v903
    %v998 = vunpack.c.l.b16 %v904
    %v999 = vunpack.c.h.b16 %v904
    %v1000 = vunpack.c.l.b16 %v905
    %v1001 = vunpack.c.h.b16 %v905
    %v1002 = vpack.c.b16 %v942, %v938
    %v1003 = vpack.c.b16 %v943, %v939
    %v1004 = vpack.c.b16 %v944, %v940
    %v1005 = vpack.c.b16 %v945, %v941
    %v1006 = vpack.c.b16 %v950, %v946
    %v1007 = vpack.c.b16 %v951, %v947
    %v1008 = vpack.c.b16 %v952, %v948
    %v1009 = vpack.c.b16 %v953, %v949
    %v1010 = vpack.c.b16 %v958, %v954
    %v1011 = vpack.c.b16 %v959, %v955
    %v1012 = vpack.c.b16 %v960, %v956
    %v1013 = vpack.c.b16 %v961, %v957
    %v1014 = vpack.c.b16 %v966, %v962
    %v1015 = vpack.c.b16 %v967, %v963
    %v1016 = vpack.c.b16 %v968, %v964
    %v1017 = vpack.c.b16 %v969, %v965
    %v1018 = vpack.c.b16 %v974, %v970
    %v1019 = vpack.c.b16 %v975, %v971
    %v1020 = vpack.c.b16 %v976, %v972
    %v1021 = vpack.c.b16 %v977, %v973
    %v1022 = vpack.c.b16 %v982, %v978
    %v1023 = vpack.c.b16 %v983, %v979
    %v1024 = vpack.c.b16 %v984, %v980
    %v1025 = vpack.c.b16 %v985, %v981
    %v1026 = vpack.c.b16 %v990, %v986
    %v1027 = vpack.c.b16 %v991, %v987
    %v1028 = vpack.c.b16 %v992, %v988
    %v1029 = vpack.c.b16 %v993, %v989
    %v1030 = vpack.c.b16 %v998, %v994
    %v1031 = vpack.c.b16 %v999, %v995
    %v1032 = vpack.c.b16 %v1000, %v996
    %v1033 = vpack.c.b16 %v1001, %v997
    %1066 = vmatpush.bf16.msra.mxu0 %v1030
    %1067 = vmatpush.bf16.msra.mxu0 %v1026
    %1068 = vmatpush.bf16.msra.mxu0 %v1022
    %1069 = vmatpush.bf16.msra.mxu0 %v1018
    %1070 = vmatpush.bf16.msra.mxu0 %v1014
    %1071 = vmatpush.bf16.msra.mxu0 %v1010
    %1072 = vmatpush.bf16.msra.mxu0 %v1006
    %1073 = vmatpush.bf16.msra.mxu0 %v1002
    %1074 = vmatmul.bf16.gmra.mxu0 0
    %v1075 = vpop.f32.mrf.mxu0
    %v1076 = vadd.f32 0.0, %v1075
    %v1077 = vpop.f32.mrf.mxu0
    %v1078 = vadd.f32 0.0, %v1077
    %1079 = vdwg.mxu0
    %1080 = vmatpush.bf16.msra.mxu0 %v1031
    %1081 = vmatpush.bf16.msra.mxu0 %v1027
    %1082 = vmatpush.bf16.msra.mxu0 %v1023
    %1083 = vmatpush.bf16.msra.mxu0 %v1019
    %1084 = vmatpush.bf16.msra.mxu0 %v1015
    %1085 = vmatpush.bf16.msra.mxu0 %v1011
    %1086 = vmatpush.bf16.msra.mxu0 %v1007
    %1087 = vmatpush.bf16.msra.mxu0 %v1003
    %1088 = vmatmul.bf16.gmra.mxu0 0
    %v1089 = vpop.f32.mrf.mxu0
    %v1090 = vadd.f32 0.0, %v1089
    %v1091 = vpop.f32.mrf.mxu0
    %v1092 = vadd.f32 0.0, %v1091
    %1093 = vdwg.mxu0
    %1094 = vmatpush.bf16.msra.mxu0 %v1032
    %1095 = vmatpush.bf16.msra.mxu0 %v1028
    %1096 = vmatpush.bf16.msra.mxu0 %v1024
    %1097 = vmatpush.bf16.msra.mxu0 %v1020
    %1098 = vmatpush.bf16.msra.mxu0 %v1016
    %1099 = vmatpush.bf16.msra.mxu0 %v1012
    %1100 = vmatpush.bf16.msra.mxu0 %v1008
    %1101 = vmatpush.bf16.msra.mxu0 %v1004
    %1102 = vmatmul.bf16.gmra.mxu0 0
    %v1103 = vpop.f32.mrf.mxu0
    %v1104 = vadd.f32 0.0, %v1103
    %v1105 = vpop.f32.mrf.mxu0
    %v1106 = vadd.f32 0.0, %v1105
    %1107 = vdwg.mxu0
    %1108 = vmatpush.bf16.msra.mxu0 %v1033
    %1109 = vmatpush.bf16.msra.mxu0 %v1029
    %1110 = vmatpush.bf16.msra.mxu0 %v1025
    %1111 = vmatpush.bf16.msra.mxu0 %v1021
    %1112 = vmatpush.bf16.msra.mxu0 %v1017
    %1113 = vmatpush.bf16.msra.mxu0 %v1013
    %1114 = vmatpush.bf16.msra.mxu0 %v1009
    %1115 = vmatpush.bf16.msra.mxu0 %v1005
    %1116 = vmatmul.bf16.gmra.mxu0 0
    %v1117 = vpop.f32.mrf.mxu0
    %v1118 = vadd.f32 0.0, %v1117
    %v1119 = vpop.f32.mrf.mxu0
    %v1120 = vadd.f32 0.0, %v1119
    %1121 = vdwg.mxu0
    %v1122 = vadd.f32 %v866, %v1076
    %v1123 = vadd.f32 %v867, %v1090
    %v1124 = vadd.f32 %v868, %v1104
    %v1125 = vadd.f32 %v869, %v1118
    %v1126 = vadd.f32 %v870, %v1078
    %v1127 = vadd.f32 %v871, %v1092
    %v1128 = vadd.f32 %v872, %v1106
    %v1129 = vadd.f32 %v873, %v1120
    %v1130 = vmul.f32 %v1122, 0.5
    %v1131 = vmul.f32 %v1126, 0.5
    %v1132 = vtanh.pop %v1130
    %v1133 = vtanh.pop %v1131
    %v1134 = vadd.f32 %v1132, 1.0
    %v1135 = vadd.f32 %v1133, 1.0
    %v1136 = vmul.f32 %v1134, 0.5
    %v1137 = vmul.f32 %v1135, 0.5
    %v1138 = vmul.f32 %v1123, 0.5
    %v1139 = vmul.f32 %v1127, 0.5
    %v1140 = vtanh.pop %v1138
    %v1141 = vtanh.pop %v1139
    %v1142 = vadd.f32 %v1140, 1.0
    %v1143 = vadd.f32 %v1141, 1.0
    %v1144 = vmul.f32 %v1142, 0.5
    %v1145 = vmul.f32 %v1143, 0.5
    %v1146 = vtanh.pop %v1124
    %v1147 = vtanh.pop %v1128
    %v1148 = vmul.f32 %v1125, 0.5
    %v1149 = vmul.f32 %v1129, 0.5
    %v1150 = vtanh.pop %v1148
    %v1151 = vtanh.pop %v1149
    %v1152 = vadd.f32 %v1150, 1.0
    %v1153 = vadd.f32 %v1151, 1.0
    %v1154 = vmul.f32 %v1152, 0.5
    %v1155 = vmul.f32 %v1153, 0.5
    %v1156 = vmul.f32 %v1144, 0.0
    %v1157 = vmul.f32 %v1145, 0.0
    %v1158 = vmul.f32 %v1136, %v1146
    %v1159 = vmul.f32 %v1137, %v1147
    %v1160 = vadd.f32 %v1156, %v1158
    %v1161 = vadd.f32 %v1157, %v1159
    %v1162 = vtanh.pop %v1160
    %v1163 = vtanh.pop %v1161
    %v1164 = vmul.f32 %v1154, %v1162
    %v1165 = vmul.f32 %v1155, %v1163
    %v1166 = vld [vmem:[#allocation5] sm:$0xff]
    %v1167 = vld [vmem:[#allocation5 + $0x8] sm:$0xff]
    %v1168 = vmul.f32 %v1164, %v1166
    %v1169 = vmul.f32 %v1165, %v1167
    %v1170 = vadd.f32 %v1168, 0.0
    %v1171 = vadd.f32 %v1169, 0.0
    %s1172 = scalar_lea.vmem [#allocation2], 64
    %v1173 = vld [vmem:[%s1172] sm:$0xff]
    %v1174 = vld [vmem:[%s1172 + $0x8] sm:$0xff]
    %v1175 = vld [vmem:[%s1172 + $0x10] sm:$0xff]
    %v1176 = vld [vmem:[%s1172 + $0x18] sm:$0xff]
    %v1177 = vld [vmem:[%s1172 + $0x20] sm:$0xff]
    %v1178 = vld [vmem:[%s1172 + $0x28] sm:$0xff]
    %v1179 = vld [vmem:[%s1172 + $0x30] sm:$0xff]
    %v1180 = vld [vmem:[%s1172 + $0x38] sm:$0xff]
    %v1181 = vpack.c.bf16 %v1165, %v1164
    %1182 = vmatpush.bf16.msra.mxu0 %v1030
    %1183 = vmatpush.bf16.msra.mxu0 %v1026
    %1184 = vmatpush.bf16.msra.mxu0 %v1022
    %1185 = vmatpush.bf16.msra.mxu0 %v1018
    %1186 = vmatpush.bf16.msra.mxu0 %v1014
    %1187 = vmatpush.bf16.msra.mxu0 %v1010
    %1188 = vmatpush.bf16.msra.mxu0 %v1006
    %1189 = vmatpush.bf16.msra.mxu0 %v1002
    %1190 = vmatmul.bf16.gmra.mxu0 %v1181
    %v1191 = vpop.f32.mrf.mxu0
    %v1192 = vadd.f32 0.0, %v1191
    %v1193 = vpop.f32.mrf.mxu0
    %v1194 = vadd.f32 0.0, %v1193
    %1195 = vdwg.mxu0
    %1196 = vmatpush.bf16.msra.mxu0 %v1031
    %1197 = vmatpush.bf16.msra.mxu0 %v1027
    %1198 = vmatpush.bf16.msra.mxu0 %v1023
    %1199 = vmatpush.bf16.msra.mxu0 %v1019
    %1200 = vmatpush.bf16.msra.mxu0 %v1015
    %1201 = vmatpush.bf16.msra.mxu0 %v1011
    %1202 = vmatpush.bf16.msra.mxu0 %v1007
    %1203 = vmatpush.bf16.msra.mxu0 %v1003
    %1204 = vmatmul.bf16.gmra.mxu0 %v1181
    %v1205 = vpop.f32.mrf.mxu0
    %v1206 = vadd.f32 0.0, %v1205
    %v1207 = vpop.f32.mrf.mxu0
    %v1208 = vadd.f32 0.0, %v1207
    %1209 = vdwg.mxu0
    %1210 = vmatpush.bf16.msra.mxu0 %v1032
    %1211 = vmatpush.bf16.msra.mxu0 %v1028
    %1212 = vmatpush.bf16.msra.mxu0 %v1024
    %1213 = vmatpush.bf16.msra.mxu0 %v1020
    %1214 = vmatpush.bf16.msra.mxu0 %v1016
    %1215 = vmatpush.bf16.msra.mxu0 %v1012
    %1216 = vmatpush.bf16.msra.mxu0 %v1008
    %1217 = vmatpush.bf16.msra.mxu0 %v1004
    %1218 = vmatmul.bf16.gmra.mxu0 %v1181
    %v1219 = vpop.f32.mrf.mxu0
    %v1220 = vadd.f32 0.0, %v1219
    %v1221 = vpop.f32.mrf.mxu0
    %v1222 = vadd.f32 0.0, %v1221
    %1223 = vdwg.mxu0
    %1224 = vmatpush.bf16.msra.mxu0 %v1033
    %1225 = vmatpush.bf16.msra.mxu0 %v1029
    %1226 = vmatpush.bf16.msra.mxu0 %v1025
    %1227 = vmatpush.bf16.msra.mxu0 %v1021
    %1228 = vmatpush.bf16.msra.mxu0 %v1017
    %1229 = vmatpush.bf16.msra.mxu0 %v1013
    %1230 = vmatpush.bf16.msra.mxu0 %v1009
    %1231 = vmatpush.bf16.msra.mxu0 %v1005
    %1232 = vmatmul.bf16.gmra.mxu0 %v1181
    %v1233 = vpop.f32.mrf.mxu0
    %v1234 = vadd.f32 0.0, %v1233
    %v1235 = vpop.f32.mrf.mxu0
    %v1236 = vadd.f32 0.0, %v1235
    %1237 = vdwg.mxu0
    %v1238 = vadd.f32 %v1173, %v1192
    %v1239 = vadd.f32 %v1174, %v1206
    %v1240 = vadd.f32 %v1175, %v1220
    %v1241 = vadd.f32 %v1176, %v1234
    %v1242 = vadd.f32 %v1177, %v1194
    %v1243 = vadd.f32 %v1178, %v1208
    %v1244 = vadd.f32 %v1179, %v1222
    %v1245 = vadd.f32 %v1180, %v1236
    %v1246 = vmul.f32 %v1238, 0.5
    %v1247 = vmul.f32 %v1242, 0.5
    %v1248 = vtanh.pop %v1246
    %v1249 = vtanh.pop %v1247
    %v1250 = vadd.f32 %v1248, 1.0
    %v1251 = vadd.f32 %v1249, 1.0
    %v1252 = vmul.f32 %v1250, 0.5
    %v1253 = vmul.f32 %v1251, 0.5
    %v1254 = vmul.f32 %v1239, 0.5
    %v1255 = vmul.f32 %v1243, 0.5
    %v1256 = vtanh.pop %v1254
    %v1257 = vtanh.pop %v1255
    %v1258 = vadd.f32 %v1256, 1.0
    %v1259 = vadd.f32 %v1257, 1.0
    %v1260 = vmul.f32 %v1258, 0.5
    %v1261 = vmul.f32 %v1259, 0.5
    %v1262 = vtanh.pop %v1240
    %v1263 = vtanh.pop %v1244
    %v1264 = vmul.f32 %v1241, 0.5
    %v1265 = vmul.f32 %v1245, 0.5
    %v1266 = vtanh.pop %v1264
    %v1267 = vtanh.pop %v1265
    %v1268 = vadd.f32 %v1266, 1.0
    %v1269 = vadd.f32 %v1267, 1.0
    %v1270 = vmul.f32 %v1268, 0.5
    %v1271 = vmul.f32 %v1269, 0.5
    %v1272 = vmul.f32 %v1260, %v1160
    %v1273 = vmul.f32 %v1261, %v1161
    %v1274 = vmul.f32 %v1252, %v1262
    %v1275 = vmul.f32 %v1253, %v1263
    %v1276 = vadd.f32 %v1272, %v1274
    %v1277 = vadd.f32 %v1273, %v1275
    %v1278 = vtanh.pop %v1276
    %v1279 = vtanh.pop %v1277
    %v1280 = vmul.f32 %v1270, %v1278
    %v1281 = vmul.f32 %v1271, %v1279
    %s1282 = scalar_lea.vmem [#allocation5], 16
    %v1283 = vld [vmem:[%s1282] sm:$0xff]
    %v1284 = vld [vmem:[%s1282 + $0x8] sm:$0xff]
    %v1285 = vmul.f32 %v1280, %v1283
    %v1286 = vmul.f32 %v1281, %v1284
    %v1287 = vadd.f32 %v1170, %v1285
    %v1288 = vadd.f32 %v1171, %v1286
    %s1289 = scalar_lea.vmem [#allocation2], 128
    %v1290 = vld [vmem:[%s1289] sm:$0xff]
    %v1291 = vld [vmem:[%s1289 + $0x8] sm:$0xff]
    %v1292 = vld [vmem:[%s1289 + $0x10] sm:$0xff]
    %v1293 = vld [vmem:[%s1289 + $0x18] sm:$0xff]
    %v1294 = vld [vmem:[%s1289 + $0x20] sm:$0xff]
    %v1295 = vld [vmem:[%s1289 + $0x28] sm:$0xff]
    %v1296 = vld [vmem:[%s1289 + $0x30] sm:$0xff]
    %v1297 = vld [vmem:[%s1289 + $0x38] sm:$0xff]
    %v1298 = vpack.c.bf16 %v1281, %v1280
    %1299 = vmatpush.bf16.msra.mxu0 %v1030
    %1300 = vmatpush.bf16.msra.mxu0 %v1026
    %1301 = vmatpush.bf16.msra.mxu0 %v1022
    %1302 = vmatpush.bf16.msra.mxu0 %v1018
    %1303 = vmatpush.bf16.msra.mxu0 %v1014
    %1304 = vmatpush.bf16.msra.mxu0 %v1010
    %1305 = vmatpush.bf16.msra.mxu0 %v1006
    %1306 = vmatpush.bf16.msra.mxu0 %v1002
    %1307 = vmatmul.bf16.gmra.mxu0 %v1298
    %v1308 = vpop.f32.mrf.mxu0
    %v1309 = vadd.f32 0.0, %v1308
    %v1310 = vpop.f32.mrf.mxu0
    %v1311 = vadd.f32 0.0, %v1310
    %1312 = vdwg.mxu0
    %1313 = vmatpush.bf16.msra.mxu0 %v1031
    %1314 = vmatpush.bf16.msra.mxu0 %v1027
    %1315 = vmatpush.bf16.msra.mxu0 %v1023
    %1316 = vmatpush.bf16.msra.mxu0 %v1019
    %1317 = vmatpush.bf16.msra.mxu0 %v1015
    %1318 = vmatpush.bf16.msra.mxu0 %v1011
    %1319 = vmatpush.bf16.msra.mxu0 %v1007
    %1320 = vmatpush.bf16.msra.mxu0 %v1003
    %1321 = vmatmul.bf16.gmra.mxu0 %v1298
    %v1322 = vpop.f32.mrf.mxu0
    %v1323 = vadd.f32 0.0, %v1322
    %v1324 = vpop.f32.mrf.mxu0
    %v1325 = vadd.f32 0.0, %v1324
    %1326 = vdwg.mxu0
    %1327 = vmatpush.bf16.msra.mxu0 %v1032
    %1328 = vmatpush.bf16.msra.mxu0 %v1028
    %1329 = vmatpush.bf16.msra.mxu0 %v1024
    %1330 = vmatpush.bf16.msra.mxu0 %v1020
    %1331 = vmatpush.bf16.msra.mxu0 %v1016
    %1332 = vmatpush.bf16.msra.mxu0 %v1012
    %1333 = vmatpush.bf16.msra.mxu0 %v1008
    %1334 = vmatpush.bf16.msra.mxu0 %v1004
    %1335 = vmatmul.bf16.gmra.mxu0 %v1298
    %v1336 = vpop.f32.mrf.mxu0
    %v1337 = vadd.f32 0.0, %v1336
    %v1338 = vpop.f32.mrf.mxu0
    %v1339 = vadd.f32 0.0, %v1338
    %1340 = vdwg.mxu0
    %1341 = vmatpush.bf16.msra.mxu0 %v1033
    %1342 = vmatpush.bf16.msra.mxu0 %v1029
    %1343 = vmatpush.bf16.msra.mxu0 %v1025
    %1344 = vmatpush.bf16.msra.mxu0 %v1021
    %1345 = vmatpush.bf16.msra.mxu0 %v1017
    %1346 = vmatpush.bf16.msra.mxu0 %v1013
    %1347 = vmatpush.bf16.msra.mxu0 %v1009
    %1348 = vmatpush.bf16.msra.mxu0 %v1005
    %1349 = vmatmul.bf16.gmra.mxu0 %v1298
    %v1350 = vpop.f32.mrf.mxu0
    %v1351 = vadd.f32 0.0, %v1350
    %v1352 = vpop.f32.mrf.mxu0
    %v1353 = vadd.f32 0.0, %v1352
    %1354 = vdwg.mxu0
    %v1355 = vadd.f32 %v1290, %v1309
    %v1356 = vadd.f32 %v1291, %v1323
    %v1357 = vadd.f32 %v1292, %v1337
    %v1358 = vadd.f32 %v1293, %v1351
    %v1359 = vadd.f32 %v1294, %v1311
    %v1360 = vadd.f32 %v1295, %v1325
    %v1361 = vadd.f32 %v1296, %v1339
    %v1362 = vadd.f32 %v1297, %v1353
    %v1363 = vmul.f32 %v1355, 0.5
    %v1364 = vmul.f32 %v1359, 0.5
    %v1365 = vtanh.pop %v1363
    %v1366 = vtanh.pop %v1364
    %v1367 = vadd.f32 %v1365, 1.0
    %v1368 = vadd.f32 %v1366, 1.0
    %v1369 = vmul.f32 %v1367, 0.5
    %v1370 = vmul.f32 %v1368, 0.5
    %v1371 = vmul.f32 %v1356, 0.5
    %v1372 = vmul.f32 %v1360, 0.5
    %v1373 = vtanh.pop %v1371
    %v1374 = vtanh.pop %v1372
    %v1375 = vadd.f32 %v1373, 1.0
    %v1376 = vadd.f32 %v1374, 1.0
    %v1377 = vmul.f32 %v1375, 0.5
    %v1378 = vmul.f32 %v1376, 0.5
    %v1379 = vtanh.pop %v1357
    %v1380 = vtanh.pop %v1361
    %v1381 = vmul.f32 %v1358, 0.5
    %v1382 = vmul.f32 %v1362, 0.5
    %v1383 = vtanh.pop %v1381
    %v1384 = vtanh.pop %v1382
    %v1385 = vadd.f32 %v1383, 1.0
    %v1386 = vadd.f32 %v1384, 1.0
    %v1387 = vmul.f32 %v1385, 0.5
    %v1388 = vmul.f32 %v1386, 0.5
    %v1389 = vmul.f32 %v1377, %v1276
    %v1390 = vmul.f32 %v1378, %v1277
    %v1391 = vmul.f32 %v1369, %v1379
    %v1392 = vmul.f32 %v1370, %v1380
    %v1393 = vadd.f32 %v1389, %v1391
    %v1394 = vadd.f32 %v1390, %v1392
    %v1395 = vtanh.pop %v1393
    %v1396 = vtanh.pop %v1394
    %v1397 = vmul.f32 %v1387, %v1395
    %v1398 = vmul.f32 %v1388, %v1396
    %s1399 = scalar_lea.vmem [#allocation5], 32
    %v1400 = vld [vmem:[%s1399] sm:$0xff]
    %v1401 = vld [vmem:[%s1399 + $0x8] sm:$0xff]
    %v1402 = vmul.f32 %v1397, %v1400
    %v1403 = vmul.f32 %v1398, %v1401
    %v1404 = vadd.f32 %v1287, %v1402
    %v1405 = vadd.f32 %v1288, %v1403
    %s1406 = scalar_lea.vmem [#allocation2], 192
    %v1407 = vld [vmem:[%s1406] sm:$0xff]
    %v1408 = vld [vmem:[%s1406 + $0x8] sm:$0xff]
    %v1409 = vld [vmem:[%s1406 + $0x10] sm:$0xff]
    %v1410 = vld [vmem:[%s1406 + $0x18] sm:$0xff]
    %v1411 = vld [vmem:[%s1406 + $0x20] sm:$0xff]
    %v1412 = vld [vmem:[%s1406 + $0x28] sm:$0xff]
    %v1413 = vld [vmem:[%s1406 + $0x30] sm:$0xff]
    %v1414 = vld [vmem:[%s1406 + $0x38] sm:$0xff]
    %v1415 = vpack.c.bf16 %v1398, %v1397
    %1416 = vmatpush.bf16.msra.mxu0 %v1030
    %1417 = vmatpush.bf16.msra.mxu0 %v1026
    %1418 = vmatpush.bf16.msra.mxu0 %v1022
    %1419 = vmatpush.bf16.msra.mxu0 %v1018
    %1420 = vmatpush.bf16.msra.mxu0 %v1014
    %1421 = vmatpush.bf16.msra.mxu0 %v1010
    %1422 = vmatpush.bf16.msra.mxu0 %v1006
    %1423 = vmatpush.bf16.msra.mxu0 %v1002
    %1424 = vmatmul.bf16.gmra.mxu0 %v1415
    %v1425 = vpop.f32.mrf.mxu0
    %v1426 = vadd.f32 0.0, %v1425
    %v1427 = vpop.f32.mrf.mxu0
    %v1428 = vadd.f32 0.0, %v1427
    %1429 = vdwg.mxu0
    %1430 = vmatpush.bf16.msra.mxu0 %v1031
    %1431 = vmatpush.bf16.msra.mxu0 %v1027
    %1432 = vmatpush.bf16.msra.mxu0 %v1023
    %1433 = vmatpush.bf16.msra.mxu0 %v1019
    %1434 = vmatpush.bf16.msra.mxu0 %v1015
    %1435 = vmatpush.bf16.msra.mxu0 %v1011
    %1436 = vmatpush.bf16.msra.mxu0 %v1007
    %1437 = vmatpush.bf16.msra.mxu0 %v1003
    %1438 = vmatmul.bf16.gmra.mxu0 %v1415
    %v1439 = vpop.f32.mrf.mxu0
    %v1440 = vadd.f32 0.0, %v1439
    %v1441 = vpop.f32.mrf.mxu0
    %v1442 = vadd.f32 0.0, %v1441
    %1443 = vdwg.mxu0
    %1444 = vmatpush.bf16.msra.mxu0 %v1032
    %1445 = vmatpush.bf16.msra.mxu0 %v1028
    %1446 = vmatpush.bf16.msra.mxu0 %v1024
    %1447 = vmatpush.bf16.msra.mxu0 %v1020
    %1448 = vmatpush.bf16.msra.mxu0 %v1016
    %1449 = vmatpush.bf16.msra.mxu0 %v1012
    %1450 = vmatpush.bf16.msra.mxu0 %v1008
    %1451 = vmatpush.bf16.msra.mxu0 %v1004
    %1452 = vmatmul.bf16.gmra.mxu0 %v1415
    %v1453 = vpop.f32.mrf.mxu0
    %v1454 = vadd.f32 0.0, %v1453
    %v1455 = vpop.f32.mrf.mxu0
    %v1456 = vadd.f32 0.0, %v1455
    %1457 = vdwg.mxu0
    %1458 = vmatpush.bf16.msra.mxu0 %v1033
    %1459 = vmatpush.bf16.msra.mxu0 %v1029
    %1460 = vmatpush.bf16.msra.mxu0 %v1025
    %1461 = vmatpush.bf16.msra.mxu0 %v1021
    %1462 = vmatpush.bf16.msra.mxu0 %v1017
    %1463 = vmatpush.bf16.msra.mxu0 %v1013
    %1464 = vmatpush.bf16.msra.mxu0 %v1009
    %1465 = vmatpush.bf16.msra.mxu0 %v1005
    %1466 = vmatmul.bf16.gmra.mxu0 %v1415
    %v1467 = vpop.f32.mrf.mxu0
    %v1468 = vadd.f32 0.0, %v1467
    %v1469 = vpop.f32.mrf.mxu0
    %v1470 = vadd.f32 0.0, %v1469
    %1471 = vdwg.mxu0
    %v1472 = vadd.f32 %v1407, %v1426
    %v1473 = vadd.f32 %v1408, %v1440
    %v1474 = vadd.f32 %v1409, %v1454
    %v1475 = vadd.f32 %v1410, %v1468
    %v1476 = vadd.f32 %v1411, %v1428
    %v1477 = vadd.f32 %v1412, %v1442
    %v1478 = vadd.f32 %v1413, %v1456
    %v1479 = vadd.f32 %v1414, %v1470
    %v1480 = vmul.f32 %v1472, 0.5
    %v1481 = vmul.f32 %v1476, 0.5
    %v1482 = vtanh.pop %v1480
    %v1483 = vtanh.pop %v1481
    %v1484 = vadd.f32 %v1482, 1.0
    %v1485 = vadd.f32 %v1483, 1.0
    %v1486 = vmul.f32 %v1484, 0.5
    %v1487 = vmul.f32 %v1485, 0.5
    %v1488 = vmul.f32 %v1473, 0.5
    %v1489 = vmul.f32 %v1477, 0.5
    %v1490 = vtanh.pop %v1488
    %v1491 = vtanh.pop %v1489
    %v1492 = vadd.f32 %v1490, 1.0
    %v1493 = vadd.f32 %v1491, 1.0
    %v1494 = vmul.f32 %v1492, 0.5
    %v1495 = vmul.f32 %v1493, 0.5
    %v1496 = vtanh.pop %v1474
    %v1497 = vtanh.pop %v1478
    %v1498 = vmul.f32 %v1475, 0.5
    %v1499 = vmul.f32 %v1479, 0.5
    %v1500 = vtanh.pop %v1498
    %v1501 = vtanh.pop %v1499
    %v1502 = vadd.f32 %v1500, 1.0
    %v1503 = vadd.f32 %v1501, 1.0
    %v1504 = vmul.f32 %v1502, 0.5
    %v1505 = vmul.f32 %v1503, 0.5
    %v1506 = vmul.f32 %v1494, %v1393
    %v1507 = vmul.f32 %v1495, %v1394
    %v1508 = vmul.f32 %v1486, %v1496
    %v1509 = vmul.f32 %v1487, %v1497
    %v1510 = vadd.f32 %v1506, %v1508
    %v1511 = vadd.f32 %v1507, %v1509
    %v1512 = vtanh.pop %v1510
    %v1513 = vtanh.pop %v1511
    %v1514 = vmul.f32 %v1504, %v1512
    %v1515 = vmul.f32 %v1505, %v1513
    %s1516 = scalar_lea.vmem [#allocation5], 48
    %v1517 = vld [vmem:[%s1516] sm:$0xff]
    %v1518 = vld [vmem:[%s1516 + $0x8] sm:$0xff]
    %v1519 = vmul.f32 %v1514, %v1517
    %v1520 = vmul.f32 %v1515, %v1518
    %v1521 = vadd.f32 %v1404, %v1519
    %v1522 = vadd.f32 %v1405, %v1520
    %s1523 = scalar_lea.vmem [#allocation2], 256
    %v1524 = vld [vmem:[%s1523] sm:$0xff]
    %v1525 = vld [vmem:[%s1523 + $0x8] sm:$0xff]
    %v1526 = vld [vmem:[%s1523 + $0x10] sm:$0xff]
    %v1527 = vld [vmem:[%s1523 + $0x18] sm:$0xff]
    %v1528 = vld [vmem:[%s1523 + $0x20] sm:$0xff]
    %v1529 = vld [vmem:[%s1523 + $0x28] sm:$0xff]
    %v1530 = vld [vmem:[%s1523 + $0x30] sm:$0xff]
    %v1531 = vld [vmem:[%s1523 + $0x38] sm:$0xff]
    %v1532 = vpack.c.bf16 %v1515, %v1514
    %1533 = vmatpush.bf16.msra.mxu0 %v1030
    %1534 = vmatpush.bf16.msra.mxu0 %v1026
    %1535 = vmatpush.bf16.msra.mxu0 %v1022
    %1536 = vmatpush.bf16.msra.mxu0 %v1018
    %1537 = vmatpush.bf16.msra.mxu0 %v1014
    %1538 = vmatpush.bf16.msra.mxu0 %v1010
    %1539 = vmatpush.bf16.msra.mxu0 %v1006
    %1540 = vmatpush.bf16.msra.mxu0 %v1002
    %1541 = vmatmul.bf16.gmra.mxu0 %v1532
    %v1542 = vpop.f32.mrf.mxu0
    %v1543 = vadd.f32 0.0, %v1542
    %v1544 = vpop.f32.mrf.mxu0
    %v1545 = vadd.f32 0.0, %v1544
    %1546 = vdwg.mxu0
    %1547 = vmatpush.bf16.msra.mxu0 %v1031
    %1548 = vmatpush.bf16.msra.mxu0 %v1027
    %1549 = vmatpush.bf16.msra.mxu0 %v1023
    %1550 = vmatpush.bf16.msra.mxu0 %v1019
    %1551 = vmatpush.bf16.msra.mxu0 %v1015
    %1552 = vmatpush.bf16.msra.mxu0 %v1011
    %1553 = vmatpush.bf16.msra.mxu0 %v1007
    %1554 = vmatpush.bf16.msra.mxu0 %v1003
    %1555 = vmatmul.bf16.gmra.mxu0 %v1532
    %v1556 = vpop.f32.mrf.mxu0
    %v1557 = vadd.f32 0.0, %v1556
    %v1558 = vpop.f32.mrf.mxu0
    %v1559 = vadd.f32 0.0, %v1558
    %1560 = vdwg.mxu0
    %1561 = vmatpush.bf16.msra.mxu0 %v1032
    %1562 = vmatpush.bf16.msra.mxu0 %v1028
    %1563 = vmatpush.bf16.msra.mxu0 %v1024
    %1564 = vmatpush.bf16.msra.mxu0 %v1020
    %1565 = vmatpush.bf16.msra.mxu0 %v1016
    %1566 = vmatpush.bf16.msra.mxu0 %v1012
    %1567 = vmatpush.bf16.msra.mxu0 %v1008
    %1568 = vmatpush.bf16.msra.mxu0 %v1004
    %1569 = vmatmul.bf16.gmra.mxu0 %v1532
    %v1570 = vpop.f32.mrf.mxu0
    %v1571 = vadd.f32 0.0, %v1570
    %v1572 = vpop.f32.mrf.mxu0
    %v1573 = vadd.f32 0.0, %v1572
    %1574 = vdwg.mxu0
    %1575 = vmatpush.bf16.msra.mxu0 %v1033
    %1576 = vmatpush.bf16.msra.mxu0 %v1029
    %1577 = vmatpush.bf16.msra.mxu0 %v1025
    %1578 = vmatpush.bf16.msra.mxu0 %v1021
    %1579 = vmatpush.bf16.msra.mxu0 %v1017
    %1580 = vmatpush.bf16.msra.mxu0 %v1013
    %1581 = vmatpush.bf16.msra.mxu0 %v1009
    %1582 = vmatpush.bf16.msra.mxu0 %v1005
    %1583 = vmatmul.bf16.gmra.mxu0 %v1532
    %v1584 = vpop.f32.mrf.mxu0
    %v1585 = vadd.f32 0.0, %v1584
    %v1586 = vpop.f32.mrf.mxu0
    %v1587 = vadd.f32 0.0, %v1586
    %1588 = vdwg.mxu0
    %v1589 = vadd.f32 %v1524, %v1543
    %v1590 = vadd.f32 %v1525, %v1557
    %v1591 = vadd.f32 %v1526, %v1571
    %v1592 = vadd.f32 %v1527, %v1585
    %v1593 = vadd.f32 %v1528, %v1545
    %v1594 = vadd.f32 %v1529, %v1559
    %v1595 = vadd.f32 %v1530, %v1573
    %v1596 = vadd.f32 %v1531, %v1587
    %v1597 = vmul.f32 %v1589, 0.5
    %v1598 = vmul.f32 %v1593, 0.5
    %v1599 = vtanh.pop %v1597
    %v1600 = vtanh.pop %v1598
    %v1601 = vadd.f32 %v1599, 1.0
    %v1602 = vadd.f32 %v1600, 1.0
    %v1603 = vmul.f32 %v1601, 0.5
    %v1604 = vmul.f32 %v1602, 0.5
    %v1605 = vmul.f32 %v1590, 0.5
    %v1606 = vmul.f32 %v1594, 0.5
    %v1607 = vtanh.pop %v1605
    %v1608 = vtanh.pop %v1606
    %v1609 = vadd.f32 %v1607, 1.0
    %v1610 = vadd.f32 %v1608, 1.0
    %v1611 = vmul.f32 %v1609, 0.5
    %v1612 = vmul.f32 %v1610, 0.5
    %v1613 = vtanh.pop %v1591
    %v1614 = vtanh.pop %v1595
    %v1615 = vmul.f32 %v1592, 0.5
    %v1616 = vmul.f32 %v1596, 0.5
    %v1617 = vtanh.pop %v1615
    %v1618 = vtanh.pop %v1616
    %v1619 = vadd.f32 %v1617, 1.0
    %v1620 = vadd.f32 %v1618, 1.0
    %v1621 = vmul.f32 %v1619, 0.5
    %v1622 = vmul.f32 %v1620, 0.5
    %v1623 = vmul.f32 %v1611, %v1510
    %v1624 = vmul.f32 %v1612, %v1511
    %v1625 = vmul.f32 %v1603, %v1613
    %v1626 = vmul.f32 %v1604, %v1614
    %v1627 = vadd.f32 %v1623, %v1625
    %v1628 = vadd.f32 %v1624, %v1626
    %v1629 = vtanh.pop %v1627
    %v1630 = vtanh.pop %v1628
    %v1631 = vmul.f32 %v1621, %v1629
    %v1632 = vmul.f32 %v1622, %v1630
    %s1633 = scalar_lea.vmem [#allocation5], 64
    %v1634 = vld [vmem:[%s1633] sm:$0xff]
    %v1635 = vld [vmem:[%s1633 + $0x8] sm:$0xff]
    %v1636 = vmul.f32 %v1631, %v1634
    %v1637 = vmul.f32 %v1632, %v1635
    %v1638 = vadd.f32 %v1521, %v1636
    %v1639 = vadd.f32 %v1522, %v1637
    %s1640 = scalar_lea.vmem [#allocation2], 320
    %v1641 = vld [vmem:[%s1640] sm:$0xff]
    %v1642 = vld [vmem:[%s1640 + $0x8] sm:$0xff]
    %v1643 = vld [vmem:[%s1640 + $0x10] sm:$0xff]
    %v1644 = vld [vmem:[%s1640 + $0x18] sm:$0xff]
    %v1645 = vld [vmem:[%s1640 + $0x20] sm:$0xff]
    %v1646 = vld [vmem:[%s1640 + $0x28] sm:$0xff]
    %v1647 = vld [vmem:[%s1640 + $0x30] sm:$0xff]
    %v1648 = vld [vmem:[%s1640 + $0x38] sm:$0xff]
    %v1649 = vpack.c.bf16 %v1632, %v1631
    %1650 = vmatpush.bf16.msra.mxu0 %v1030
    %1651 = vmatpush.bf16.msra.mxu0 %v1026
    %1652 = vmatpush.bf16.msra.mxu0 %v1022
    %1653 = vmatpush.bf16.msra.mxu0 %v1018
    %1654 = vmatpush.bf16.msra.mxu0 %v1014
    %1655 = vmatpush.bf16.msra.mxu0 %v1010
    %1656 = vmatpush.bf16.msra.mxu0 %v1006
    %1657 = vmatpush.bf16.msra.mxu0 %v1002
    %1658 = vmatmul.bf16.gmra.mxu0 %v1649
    %v1659 = vpop.f32.mrf.mxu0
    %v1660 = vadd.f32 0.0, %v1659
    %v1661 = vpop.f32.mrf.mxu0
    %v1662 = vadd.f32 0.0, %v1661
    %1663 = vdwg.mxu0
    %1664 = vmatpush.bf16.msra.mxu0 %v1031
    %1665 = vmatpush.bf16.msra.mxu0 %v1027
    %1666 = vmatpush.bf16.msra.mxu0 %v1023
    %1667 = vmatpush.bf16.msra.mxu0 %v1019
    %1668 = vmatpush.bf16.msra.mxu0 %v1015
    %1669 = vmatpush.bf16.msra.mxu0 %v1011
    %1670 = vmatpush.bf16.msra.mxu0 %v1007
    %1671 = vmatpush.bf16.msra.mxu0 %v1003
    %1672 = vmatmul.bf16.gmra.mxu0 %v1649
    %v1673 = vpop.f32.mrf.mxu0
    %v1674 = vadd.f32 0.0, %v1673
    %v1675 = vpop.f32.mrf.mxu0
    %v1676 = vadd.f32 0.0, %v1675
    %1677 = vdwg.mxu0
    %1678 = vmatpush.bf16.msra.mxu0 %v1032
    %1679 = vmatpush.bf16.msra.mxu0 %v1028
    %1680 = vmatpush.bf16.msra.mxu0 %v1024
    %1681 = vmatpush.bf16.msra.mxu0 %v1020
    %1682 = vmatpush.bf16.msra.mxu0 %v1016
    %1683 = vmatpush.bf16.msra.mxu0 %v1012
    %1684 = vmatpush.bf16.msra.mxu0 %v1008
    %1685 = vmatpush.bf16.msra.mxu0 %v1004
    %1686 = vmatmul.bf16.gmra.mxu0 %v1649
    %v1687 = vpop.f32.mrf.mxu0
    %v1688 = vadd.f32 0.0, %v1687
    %v1689 = vpop.f32.mrf.mxu0
    %v1690 = vadd.f32 0.0, %v1689
    %1691 = vdwg.mxu0
    %1692 = vmatpush.bf16.msra.mxu0 %v1033
    %1693 = vmatpush.bf16.msra.mxu0 %v1029
    %1694 = vmatpush.bf16.msra.mxu0 %v1025
    %1695 = vmatpush.bf16.msra.mxu0 %v1021
    %1696 = vmatpush.bf16.msra.mxu0 %v1017
    %1697 = vmatpush.bf16.msra.mxu0 %v1013
    %1698 = vmatpush.bf16.msra.mxu0 %v1009
    %1699 = vmatpush.bf16.msra.mxu0 %v1005
    %1700 = vmatmul.bf16.gmra.mxu0 %v1649
    %v1701 = vpop.f32.mrf.mxu0
    %v1702 = vadd.f32 0.0, %v1701
    %v1703 = vpop.f32.mrf.mxu0
    %v1704 = vadd.f32 0.0, %v1703
    %1705 = vdwg.mxu0
    %v1706 = vadd.f32 %v1641, %v1660
    %v1707 = vadd.f32 %v1642, %v1674
    %v1708 = vadd.f32 %v1643, %v1688
    %v1709 = vadd.f32 %v1644, %v1702
    %v1710 = vadd.f32 %v1645, %v1662
    %v1711 = vadd.f32 %v1646, %v1676
    %v1712 = vadd.f32 %v1647, %v1690
    %v1713 = vadd.f32 %v1648, %v1704
    %v1714 = vmul.f32 %v1706, 0.5
    %v1715 = vmul.f32 %v1710, 0.5
    %v1716 = vtanh.pop %v1714
    %v1717 = vtanh.pop %v1715
    %v1718 = vadd.f32 %v1716, 1.0
    %v1719 = vadd.f32 %v1717, 1.0
    %v1720 = vmul.f32 %v1718, 0.5
    %v1721 = vmul.f32 %v1719, 0.5
    %v1722 = vmul.f32 %v1707, 0.5
    %v1723 = vmul.f32 %v1711, 0.5
    %v1724 = vtanh.pop %v1722
    %v1725 = vtanh.pop %v1723
    %v1726 = vadd.f32 %v1724, 1.0
    %v1727 = vadd.f32 %v1725, 1.0
    %v1728 = vmul.f32 %v1726, 0.5
    %v1729 = vmul.f32 %v1727, 0.5
    %v1730 = vtanh.pop %v1708
    %v1731 = vtanh.pop %v1712
    %v1732 = vmul.f32 %v1709, 0.5
    %v1733 = vmul.f32 %v1713, 0.5
    %v1734 = vtanh.pop %v1732
    %v1735 = vtanh.pop %v1733
    %v1736 = vadd.f32 %v1734, 1.0
    %v1737 = vadd.f32 %v1735, 1.0
    %v1738 = vmul.f32 %v1736, 0.5
    %v1739 = vmul.f32 %v1737, 0.5
    %v1740 = vmul.f32 %v1728, %v1627
    %v1741 = vmul.f32 %v1729, %v1628
    %v1742 = vmul.f32 %v1720, %v1730
    %v1743 = vmul.f32 %v1721, %v1731
    %v1744 = vadd.f32 %v1740, %v1742
    %v1745 = vadd.f32 %v1741, %v1743
    %v1746 = vtanh.pop %v1744
    %v1747 = vtanh.pop %v1745
    %v1748 = vmul.f32 %v1738, %v1746
    %v1749 = vmul.f32 %v1739, %v1747
    %s1750 = scalar_lea.vmem [#allocation5], 80
    %v1751 = vld [vmem:[%s1750] sm:$0xff]
    %v1752 = vld [vmem:[%s1750 + $0x8] sm:$0xff]
    %v1753 = vmul.f32 %v1748, %v1751
    %v1754 = vmul.f32 %v1749, %v1752
    %v1755 = vadd.f32 %v1638, %v1753
    %v1756 = vadd.f32 %v1639, %v1754
    %s1757 = scalar_lea.vmem [#allocation2], 384
    %v1758 = vld [vmem:[%s1757] sm:$0xff]
    %v1759 = vld [vmem:[%s1757 + $0x8] sm:$0xff]
    %v1760 = vld [vmem:[%s1757 + $0x10] sm:$0xff]
    %v1761 = vld [vmem:[%s1757 + $0x18] sm:$0xff]
    %v1762 = vld [vmem:[%s1757 + $0x20] sm:$0xff]
    %v1763 = vld [vmem:[%s1757 + $0x28] sm:$0xff]
    %v1764 = vld [vmem:[%s1757 + $0x30] sm:$0xff]
    %v1765 = vld [vmem:[%s1757 + $0x38] sm:$0xff]
    %v1766 = vpack.c.bf16 %v1749, %v1748
    %1767 = vmatpush.bf16.msra.mxu0 %v1030
    %1768 = vmatpush.bf16.msra.mxu0 %v1026
    %1769 = vmatpush.bf16.msra.mxu0 %v1022
    %1770 = vmatpush.bf16.msra.mxu0 %v1018
    %1771 = vmatpush.bf16.msra.mxu0 %v1014
    %1772 = vmatpush.bf16.msra.mxu0 %v1010
    %1773 = vmatpush.bf16.msra.mxu0 %v1006
    %1774 = vmatpush.bf16.msra.mxu0 %v1002
    %1775 = vmatmul.bf16.gmra.mxu0 %v1766
    %v1776 = vpop.f32.mrf.mxu0
    %v1777 = vadd.f32 0.0, %v1776
    %v1778 = vpop.f32.mrf.mxu0
    %v1779 = vadd.f32 0.0, %v1778
    %1780 = vdwg.mxu0
    %1781 = vmatpush.bf16.msra.mxu0 %v1031
    %1782 = vmatpush.bf16.msra.mxu0 %v1027
    %1783 = vmatpush.bf16.msra.mxu0 %v1023
    %1784 = vmatpush.bf16.msra.mxu0 %v1019
    %1785 = vmatpush.bf16.msra.mxu0 %v1015
    %1786 = vmatpush.bf16.msra.mxu0 %v1011
    %1787 = vmatpush.bf16.msra.mxu0 %v1007
    %1788 = vmatpush.bf16.msra.mxu0 %v1003
    %1789 = vmatmul.bf16.gmra.mxu0 %v1766
    %v1790 = vpop.f32.mrf.mxu0
    %v1791 = vadd.f32 0.0, %v1790
    %v1792 = vpop.f32.mrf.mxu0
    %v1793 = vadd.f32 0.0, %v1792
    %1794 = vdwg.mxu0
    %1795 = vmatpush.bf16.msra.mxu0 %v1032
    %1796 = vmatpush.bf16.msra.mxu0 %v1028
    %1797 = vmatpush.bf16.msra.mxu0 %v1024
    %1798 = vmatpush.bf16.msra.mxu0 %v1020
    %1799 = vmatpush.bf16.msra.mxu0 %v1016
    %1800 = vmatpush.bf16.msra.mxu0 %v1012
    %1801 = vmatpush.bf16.msra.mxu0 %v1008
    %1802 = vmatpush.bf16.msra.mxu0 %v1004
    %1803 = vmatmul.bf16.gmra.mxu0 %v1766
    %v1804 = vpop.f32.mrf.mxu0
    %v1805 = vadd.f32 0.0, %v1804
    %v1806 = vpop.f32.mrf.mxu0
    %v1807 = vadd.f32 0.0, %v1806
    %1808 = vdwg.mxu0
    %1809 = vmatpush.bf16.msra.mxu0 %v1033
    %1810 = vmatpush.bf16.msra.mxu0 %v1029
    %1811 = vmatpush.bf16.msra.mxu0 %v1025
    %1812 = vmatpush.bf16.msra.mxu0 %v1021
    %1813 = vmatpush.bf16.msra.mxu0 %v1017
    %1814 = vmatpush.bf16.msra.mxu0 %v1013
    %1815 = vmatpush.bf16.msra.mxu0 %v1009
    %1816 = vmatpush.bf16.msra.mxu0 %v1005
    %1817 = vmatmul.bf16.gmra.mxu0 %v1766
    %v1818 = vpop.f32.mrf.mxu0
    %v1819 = vadd.f32 0.0, %v1818
    %v1820 = vpop.f32.mrf.mxu0
    %v1821 = vadd.f32 0.0, %v1820
    %1822 = vdwg.mxu0
    %v1823 = vadd.f32 %v1758, %v1777
    %v1824 = vadd.f32 %v1759, %v1791
    %v1825 = vadd.f32 %v1760, %v1805
    %v1826 = vadd.f32 %v1761, %v1819
    %v1827 = vadd.f32 %v1762, %v1779
    %v1828 = vadd.f32 %v1763, %v1793
    %v1829 = vadd.f32 %v1764, %v1807
    %v1830 = vadd.f32 %v1765, %v1821
    %v1831 = vmul.f32 %v1823, 0.5
    %v1832 = vmul.f32 %v1827, 0.5
    %v1833 = vtanh.pop %v1831
    %v1834 = vtanh.pop %v1832
    %v1835 = vadd.f32 %v1833, 1.0
    %v1836 = vadd.f32 %v1834, 1.0
    %v1837 = vmul.f32 %v1835, 0.5
    %v1838 = vmul.f32 %v1836, 0.5
    %v1839 = vmul.f32 %v1824, 0.5
    %v1840 = vmul.f32 %v1828, 0.5
    %v1841 = vtanh.pop %v1839
    %v1842 = vtanh.pop %v1840
    %v1843 = vadd.f32 %v1841, 1.0
    %v1844 = vadd.f32 %v1842, 1.0
    %v1845 = vmul.f32 %v1843, 0.5
    %v1846 = vmul.f32 %v1844, 0.5
    %v1847 = vtanh.pop %v1825
    %v1848 = vtanh.pop %v1829
    %v1849 = vmul.f32 %v1826, 0.5
    %v1850 = vmul.f32 %v1830, 0.5
    %v1851 = vtanh.pop %v1849
    %v1852 = vtanh.pop %v1850
    %v1853 = vadd.f32 %v1851, 1.0
    %v1854 = vadd.f32 %v1852, 1.0
    %v1855 = vmul.f32 %v1853, 0.5
    %v1856 = vmul.f32 %v1854, 0.5
    %v1857 = vmul.f32 %v1845, %v1744
    %v1858 = vmul.f32 %v1846, %v1745
    %v1859 = vmul.f32 %v1837, %v1847
    %v1860 = vmul.f32 %v1838, %v1848
    %v1861 = vadd.f32 %v1857, %v1859
    %v1862 = vadd.f32 %v1858, %v1860
    %v1863 = vtanh.pop %v1861
    %v1864 = vtanh.pop %v1862
    %v1865 = vmul.f32 %v1855, %v1863
    %v1866 = vmul.f32 %v1856, %v1864
    %s1867 = scalar_lea.vmem [#allocation5], 96
    %v1868 = vld [vmem:[%s1867] sm:$0xff]
    %v1869 = vld [vmem:[%s1867 + $0x8] sm:$0xff]
    %v1870 = vmul.f32 %v1865, %v1868
    %v1871 = vmul.f32 %v1866, %v1869
    %v1872 = vadd.f32 %v1755, %v1870
    %v1873 = vadd.f32 %v1756, %v1871
    %s1874 = scalar_lea.vmem [#allocation2], 448
    %v1875 = vld [vmem:[%s1874] sm:$0xff]
    %v1876 = vld [vmem:[%s1874 + $0x8] sm:$0xff]
    %v1877 = vld [vmem:[%s1874 + $0x10] sm:$0xff]
    %v1878 = vld [vmem:[%s1874 + $0x18] sm:$0xff]
    %v1879 = vld [vmem:[%s1874 + $0x20] sm:$0xff]
    %v1880 = vld [vmem:[%s1874 + $0x28] sm:$0xff]
    %v1881 = vld [vmem:[%s1874 + $0x30] sm:$0xff]
    %v1882 = vld [vmem:[%s1874 + $0x38] sm:$0xff]
    %v1883 = vpack.c.bf16 %v1866, %v1865
    %1884 = vmatpush.bf16.msra.mxu0 %v1030
    %1885 = vmatpush.bf16.msra.mxu0 %v1026
    %1886 = vmatpush.bf16.msra.mxu0 %v1022
    %1887 = vmatpush.bf16.msra.mxu0 %v1018
    %1888 = vmatpush.bf16.msra.mxu0 %v1014
    %1889 = vmatpush.bf16.msra.mxu0 %v1010
    %1890 = vmatpush.bf16.msra.mxu0 %v1006
    %1891 = vmatpush.bf16.msra.mxu0 %v1002
    %1892 = vmatmul.bf16.gmra.mxu0 %v1883
    %v1893 = vpop.f32.mrf.mxu0
    %v1894 = vadd.f32 0.0, %v1893
    %v1895 = vpop.f32.mrf.mxu0
    %v1896 = vadd.f32 0.0, %v1895
    %1897 = vdwg.mxu0
    %1898 = vmatpush.bf16.msra.mxu0 %v1031
    %1899 = vmatpush.bf16.msra.mxu0 %v1027
    %1900 = vmatpush.bf16.msra.mxu0 %v1023
    %1901 = vmatpush.bf16.msra.mxu0 %v1019
    %1902 = vmatpush.bf16.msra.mxu0 %v1015
    %1903 = vmatpush.bf16.msra.mxu0 %v1011
    %1904 = vmatpush.bf16.msra.mxu0 %v1007
    %1905 = vmatpush.bf16.msra.mxu0 %v1003
    %1906 = vmatmul.bf16.gmra.mxu0 %v1883
    %v1907 = vpop.f32.mrf.mxu0
    %v1908 = vadd.f32 0.0, %v1907
    %v1909 = vpop.f32.mrf.mxu0
    %v1910 = vadd.f32 0.0, %v1909
    %1911 = vdwg.mxu0
    %1912 = vmatpush.bf16.msra.mxu0 %v1032
    %1913 = vmatpush.bf16.msra.mxu0 %v1028
    %1914 = vmatpush.bf16.msra.mxu0 %v1024
    %1915 = vmatpush.bf16.msra.mxu0 %v1020
    %1916 = vmatpush.bf16.msra.mxu0 %v1016
    %1917 = vmatpush.bf16.msra.mxu0 %v1012
    %1918 = vmatpush.bf16.msra.mxu0 %v1008
    %1919 = vmatpush.bf16.msra.mxu0 %v1004
    %1920 = vmatmul.bf16.gmra.mxu0 %v1883
    %v1921 = vpop.f32.mrf.mxu0
    %v1922 = vadd.f32 0.0, %v1921
    %v1923 = vpop.f32.mrf.mxu0
    %v1924 = vadd.f32 0.0, %v1923
    %1925 = vdwg.mxu0
    %1926 = vmatpush.bf16.msra.mxu0 %v1033
    %1927 = vmatpush.bf16.msra.mxu0 %v1029
    %1928 = vmatpush.bf16.msra.mxu0 %v1025
    %1929 = vmatpush.bf16.msra.mxu0 %v1021
    %1930 = vmatpush.bf16.msra.mxu0 %v1017
    %1931 = vmatpush.bf16.msra.mxu0 %v1013
    %1932 = vmatpush.bf16.msra.mxu0 %v1009
    %1933 = vmatpush.bf16.msra.mxu0 %v1005
    %1934 = vmatmul.bf16.gmra.mxu0 %v1883
    %v1935 = vpop.f32.mrf.mxu0
    %v1936 = vadd.f32 0.0, %v1935
    %v1937 = vpop.f32.mrf.mxu0
    %v1938 = vadd.f32 0.0, %v1937
    %1939 = vdwg.mxu0
    %v1940 = vadd.f32 %v1875, %v1894
    %v1941 = vadd.f32 %v1876, %v1908
    %v1942 = vadd.f32 %v1877, %v1922
    %v1943 = vadd.f32 %v1878, %v1936
    %v1944 = vadd.f32 %v1879, %v1896
    %v1945 = vadd.f32 %v1880, %v1910
    %v1946 = vadd.f32 %v1881, %v1924
    %v1947 = vadd.f32 %v1882, %v1938
    %v1948 = vmul.f32 %v1940, 0.5
    %v1949 = vmul.f32 %v1944, 0.5
    %v1950 = vtanh.pop %v1948
    %v1951 = vtanh.pop %v1949
    %v1952 = vadd.f32 %v1950, 1.0
    %v1953 = vadd.f32 %v1951, 1.0
    %v1954 = vmul.f32 %v1952, 0.5
    %v1955 = vmul.f32 %v1953, 0.5
    %v1956 = vmul.f32 %v1941, 0.5
    %v1957 = vmul.f32 %v1945, 0.5
    %v1958 = vtanh.pop %v1956
    %v1959 = vtanh.pop %v1957
    %v1960 = vadd.f32 %v1958, 1.0
    %v1961 = vadd.f32 %v1959, 1.0
    %v1962 = vmul.f32 %v1960, 0.5
    %v1963 = vmul.f32 %v1961, 0.5
    %v1964 = vtanh.pop %v1942
    %v1965 = vtanh.pop %v1946
    %v1966 = vmul.f32 %v1943, 0.5
    %v1967 = vmul.f32 %v1947, 0.5
    %v1968 = vtanh.pop %v1966
    %v1969 = vtanh.pop %v1967
    %v1970 = vadd.f32 %v1968, 1.0
    %v1971 = vadd.f32 %v1969, 1.0
    %v1972 = vmul.f32 %v1970, 0.5
    %v1973 = vmul.f32 %v1971, 0.5
    %v1974 = vmul.f32 %v1962, %v1861
    %v1975 = vmul.f32 %v1963, %v1862
    %v1976 = vmul.f32 %v1954, %v1964
    %v1977 = vmul.f32 %v1955, %v1965
    %v1978 = vadd.f32 %v1974, %v1976
    %v1979 = vadd.f32 %v1975, %v1977
    %v1980 = vtanh.pop %v1978
    %v1981 = vtanh.pop %v1979
    %v1982 = vmul.f32 %v1972, %v1980
    %v1983 = vmul.f32 %v1973, %v1981
    %s1984 = scalar_lea.vmem [#allocation5], 112
    %v1985 = vld [vmem:[%s1984] sm:$0xff]
    %v1986 = vld [vmem:[%s1984 + $0x8] sm:$0xff]
    %v1987 = vmul.f32 %v1982, %v1985
    %v1988 = vmul.f32 %v1983, %v1986
    %v1989 = vadd.f32 %v1872, %v1987
    %v1990 = vadd.f32 %v1873, %v1988
    %v1991 = vpack.c.bf16 %v1990, %v1989
    %v1992 = vld [vmem:[#allocation15] sm:$0xf]
    %v1993 = vld [vmem:[#allocation15 + $0x4] sm:$0xf]
    %v1994 = vld [vmem:[#allocation15 + $0x8] sm:$0xf]
    %v1995 = vld [vmem:[#allocation15 + $0xc] sm:$0xf]
    %v1996 = vld [vmem:[#allocation15 + $0x10] sm:$0xf]
    %v1997 = vld [vmem:[#allocation15 + $0x14] sm:$0xf]
    %v1998 = vld [vmem:[#allocation15 + $0x18] sm:$0xf]
    %v1999 = vld [vmem:[#allocation15 + $0x1c] sm:$0xf]
    %v2000 = vld [vmem:[#allocation15 + $0x20] sm:$0xf]
    %v2001 = vld [vmem:[#allocation15 + $0x24] sm:$0xf]
    %v2002 = vld [vmem:[#allocation15 + $0x28] sm:$0xf]
    %v2003 = vld [vmem:[#allocation15 + $0x2c] sm:$0xf]
    %v2004 = vld [vmem:[#allocation15 + $0x30] sm:$0xf]
    %v2005 = vld [vmem:[#allocation15 + $0x34] sm:$0xf]
    %v2006 = vld [vmem:[#allocation15 + $0x38] sm:$0xf]
    %v2007 = vld [vmem:[#allocation15 + $0x3c] sm:$0xf]
    %v2024 = vunpack.c.l.b16 %v1992
    %v2025 = vunpack.c.l.b16 %v1993
    %v2026 = vunpack.c.l.b16 %v1994
    %v2027 = vunpack.c.l.b16 %v1995
    %v2028 = vunpack.c.l.b16 %v1996
    %v2029 = vunpack.c.l.b16 %v1997
    %v2030 = vunpack.c.l.b16 %v1998
    %v2031 = vunpack.c.l.b16 %v1999
    %v2032 = vunpack.c.l.b16 %v2000
    %v2033 = vunpack.c.l.b16 %v2001
    %v2034 = vunpack.c.l.b16 %v2002
    %v2035 = vunpack.c.l.b16 %v2003
    %v2036 = vunpack.c.l.b16 %v2004
    %v2037 = vunpack.c.l.b16 %v2005
    %v2038 = vunpack.c.l.b16 %v2006
    %v2039 = vunpack.c.l.b16 %v2007
    %v2040 = vpack.c.b16 %v2025, %v2024
    %v2041 = vpack.c.b16 %v2027, %v2026
    %v2042 = vpack.c.b16 %v2029, %v2028
    %v2043 = vpack.c.b16 %v2031, %v2030
    %v2044 = vpack.c.b16 %v2033, %v2032
    %v2045 = vpack.c.b16 %v2035, %v2034
    %v2046 = vpack.c.b16 %v2037, %v2036
    %v2047 = vpack.c.b16 %v2039, %v2038
    %2056 = vmatpush.bf16.msra.mxu0 %v2047
    %2057 = vmatpush.bf16.msra.mxu0 %v2046
    %2058 = vmatpush.bf16.msra.mxu0 %v2045
    %2059 = vmatpush.bf16.msra.mxu0 %v2044
    %2060 = vmatpush.bf16.msra.mxu0 %v2043
    %2061 = vmatpush.bf16.msra.mxu0 %v2042
    %2062 = vmatpush.bf16.msra.mxu0 %v2041
    %2063 = vmatpush.bf16.msra.mxu0 %v2040
    %2064 = vmatmul.bf16.gmra.mxu0 %v1991
    %v2065 = vpop.f32.mrf.mxu0
    %v2066 = vadd.f32 0.0, %v2065
    %v2067 = vpop.f32.mrf.mxu0
    %v2068 = vadd.f32 0.0, %v2067
    %2069 = vdwg.mxu0
    %v2070 = vld [vmem:[#allocation3] sm:$0xff]
    %v2071 = vld [vmem:[#allocation3 + $0x8] sm:$0xff]
    %v2072 = vld [vmem:[#allocation3 + $0x10] sm:$0xff]
    %v2073 = vld [vmem:[#allocation3 + $0x18] sm:$0xff]
    %v2074 = vld [vmem:[#allocation3 + $0x20] sm:$0xff]
    %v2075 = vld [vmem:[#allocation3 + $0x28] sm:$0xff]
    %v2076 = vld [vmem:[#allocation3 + $0x30] sm:$0xff]
    %v2077 = vld [vmem:[#allocation3 + $0x38] sm:$0xff]
    %v2078 = vld [vmem:[#allocation3 + $0x40] sm:$0xff]
    %v2079 = vld [vmem:[#allocation3 + $0x48] sm:$0xff]
    %v2080 = vld [vmem:[#allocation3 + $0x50] sm:$0xff]
    %v2081 = vld [vmem:[#allocation3 + $0x58] sm:$0xff]
    %v2082 = vld [vmem:[#allocation3 + $0x60] sm:$0xff]
    %v2083 = vld [vmem:[#allocation3 + $0x68] sm:$0xff]
    %v2084 = vld [vmem:[#allocation3 + $0x70] sm:$0xff]
    %v2085 = vld [vmem:[#allocation3 + $0x78] sm:$0xff]
    %v2086 = vadd.f32 %v2070, %v2066
    %v2087 = vadd.f32 %v2071, %v2068
    %v2088 = vadd.f32 %v2072, %v2066
    %v2089 = vadd.f32 %v2073, %v2068
    %v2090 = vadd.f32 %v2074, %v2066
    %v2091 = vadd.f32 %v2075, %v2068
    %v2092 = vadd.f32 %v2076, %v2066
    %v2093 = vadd.f32 %v2077, %v2068
    %v2094 = vadd.f32 %v2078, %v2066
    %v2095 = vadd.f32 %v2079, %v2068
    %v2096 = vadd.f32 %v2080, %v2066
    %v2097 = vadd.f32 %v2081, %v2068
    %v2098 = vadd.f32 %v2082, %v2066
    %v2099 = vadd.f32 %v2083, %v2068
    %v2100 = vadd.f32 %v2084, %v2066
    %v2101 = vadd.f32 %v2085, %v2068
    %v2102 = vld [vmem:[%s7] sm:$0x1]
    %v2104 = vperm.slane %v2102, 0
    %v2106 = vadd.f32 %v2086, %v2104
    %v2107 = vadd.f32 %v2087, %v2104
    %v2108 = vadd.f32 %v2088, %v2104
    %v2109 = vadd.f32 %v2089, %v2104
    %v2110 = vadd.f32 %v2090, %v2104
    %v2111 = vadd.f32 %v2091, %v2104
    %v2112 = vadd.f32 %v2092, %v2104
    %v2113 = vadd.f32 %v2093, %v2104
    %v2114 = vadd.f32 %v2094, %v2104
    %v2115 = vadd.f32 %v2095, %v2104
    %v2116 = vadd.f32 %v2096, %v2104
    %v2117 = vadd.f32 %v2097, %v2104
    %v2118 = vadd.f32 %v2098, %v2104
    %v2119 = vadd.f32 %v2099, %v2104
    %v2120 = vadd.f32 %v2100, %v2104
    %v2121 = vadd.f32 %v2101, %v2104
    %v2122 = vtanh.pop %v2106
    %v2123 = vtanh.pop %v2107
    %v2124 = vtanh.pop %v2108
    %v2125 = vtanh.pop %v2109
    %v2126 = vtanh.pop %v2110
    %v2127 = vtanh.pop %v2111
    %v2128 = vtanh.pop %v2112
    %v2129 = vtanh.pop %v2113
    %v2130 = vtanh.pop %v2114
    %v2131 = vtanh.pop %v2115
    %v2132 = vtanh.pop %v2116
    %v2133 = vtanh.pop %v2117
    %v2134 = vtanh.pop %v2118
    %v2135 = vtanh.pop %v2119
    %v2136 = vtanh.pop %v2120
    %v2137 = vtanh.pop %v2121
    %v2138 = vld [vmem:[%s8] sm:$0x1]
    %v2140 = vperm.slane %v2138, 0
    %v2142 = vmul.f32 %v2122, %v2140
    %v2143 = vmul.f32 %v2123, %v2140
    %v2144 = vmul.f32 %v2124, %v2140
    %v2145 = vmul.f32 %v2125, %v2140
    %v2146 = vmul.f32 %v2126, %v2140
    %v2147 = vmul.f32 %v2127, %v2140
    %v2148 = vmul.f32 %v2128, %v2140
    %v2149 = vmul.f32 %v2129, %v2140
    %v2150 = vmul.f32 %v2130, %v2140
    %v2151 = vmul.f32 %v2131, %v2140
    %v2152 = vmul.f32 %v2132, %v2140
    %v2153 = vmul.f32 %v2133, %v2140
    %v2154 = vmul.f32 %v2134, %v2140
    %v2155 = vmul.f32 %v2135, %v2140
    %v2156 = vmul.f32 %v2136, %v2140
    %v2157 = vmul.f32 %v2137, %v2140
    %2158 = vadd.xlane.f32.xlu0 %v2142
    %v2159 = vpop.xlane.xlu0 %2158
    %2160 = vadd.xlane.f32.xlu0 %v2143
    %v2161 = vpop.xlane.xlu0 %2160
    %2162 = vadd.xlane.f32.xlu0 %v2144
    %v2163 = vpop.xlane.xlu0 %2162
    %2164 = vadd.xlane.f32.xlu0 %v2145
    %v2165 = vpop.xlane.xlu0 %2164
    %2166 = vadd.xlane.f32.xlu0 %v2146
    %v2167 = vpop.xlane.xlu0 %2166
    %2168 = vadd.xlane.f32.xlu0 %v2147
    %v2169 = vpop.xlane.xlu0 %2168
    %2170 = vadd.xlane.f32.xlu0 %v2148
    %v2171 = vpop.xlane.xlu0 %2170
    %2172 = vadd.xlane.f32.xlu0 %v2149
    %v2173 = vpop.xlane.xlu0 %2172
    %2174 = vadd.xlane.f32.xlu0 %v2150
    %v2175 = vpop.xlane.xlu0 %2174
    %2176 = vadd.xlane.f32.xlu0 %v2151
    %v2177 = vpop.xlane.xlu0 %2176
    %2178 = vadd.xlane.f32.xlu0 %v2152
    %v2179 = vpop.xlane.xlu0 %2178
    %2180 = vadd.xlane.f32.xlu0 %v2153
    %v2181 = vpop.xlane.xlu0 %2180
    %2182 = vadd.xlane.f32.xlu0 %v2154
    %v2183 = vpop.xlane.xlu0 %2182
    %2184 = vadd.xlane.f32.xlu0 %v2155
    %v2185 = vpop.xlane.xlu0 %2184
    %2186 = vadd.xlane.f32.xlu0 %v2156
    %v2187 = vpop.xlane.xlu0 %2186
    %2188 = vadd.xlane.f32.xlu0 %v2157
    %v2189 = vpop.xlane.xlu0 %2188
    %v2190 = vld [vmem:[#allocation6] sm:$0x1]
    %v2192 = vperm.slane %v2190, 0
    %v2194 = vadd.f32 %v2159, %v2192
    %v2195 = vadd.f32 %v2161, %v2192
    %v2196 = vadd.f32 %v2163, %v2192
    %v2197 = vadd.f32 %v2165, %v2192
    %v2198 = vadd.f32 %v2167, %v2192
    %v2199 = vadd.f32 %v2169, %v2192
    %v2200 = vadd.f32 %v2171, %v2192
    %v2201 = vadd.f32 %v2173, %v2192
    %v2202 = vadd.f32 %v2175, %v2192
    %v2203 = vadd.f32 %v2177, %v2192
    %v2204 = vadd.f32 %v2179, %v2192
    %v2205 = vadd.f32 %v2181, %v2192
    %v2206 = vadd.f32 %v2183, %v2192
    %v2207 = vadd.f32 %v2185, %v2192
    %v2208 = vadd.f32 %v2187, %v2192
    %v2209 = vadd.f32 %v2189, %v2192
    %v2210 = vmul.f32 %v2194, 0.5
    %v2211 = vmul.f32 %v2195, 0.5
    %v2212 = vmul.f32 %v2196, 0.5
    %v2213 = vmul.f32 %v2197, 0.5
    %v2214 = vmul.f32 %v2198, 0.5
    %v2215 = vmul.f32 %v2199, 0.5
    %v2216 = vmul.f32 %v2200, 0.5
    %v2217 = vmul.f32 %v2201, 0.5
    %v2218 = vmul.f32 %v2202, 0.5
    %v2219 = vmul.f32 %v2203, 0.5
    %v2220 = vmul.f32 %v2204, 0.5
    %v2221 = vmul.f32 %v2205, 0.5
    %v2222 = vmul.f32 %v2206, 0.5
    %v2223 = vmul.f32 %v2207, 0.5
    %v2224 = vmul.f32 %v2208, 0.5
    %v2225 = vmul.f32 %v2209, 0.5
    %v2226 = vtanh.pop %v2210
    %v2227 = vtanh.pop %v2211
    %v2228 = vtanh.pop %v2212
    %v2229 = vtanh.pop %v2213
    %v2230 = vtanh.pop %v2214
    %v2231 = vtanh.pop %v2215
    %v2232 = vtanh.pop %v2216
    %v2233 = vtanh.pop %v2217
    %v2234 = vtanh.pop %v2218
    %v2235 = vtanh.pop %v2219
    %v2236 = vtanh.pop %v2220
    %v2237 = vtanh.pop %v2221
    %v2238 = vtanh.pop %v2222
    %v2239 = vtanh.pop %v2223
    %v2240 = vtanh.pop %v2224
    %v2241 = vtanh.pop %v2225
    %v2242 = vadd.f32 %v2226, 1.0
    %v2243 = vadd.f32 %v2227, 1.0
    %v2244 = vadd.f32 %v2228, 1.0
    %v2245 = vadd.f32 %v2229, 1.0
    %v2246 = vadd.f32 %v2230, 1.0
    %v2247 = vadd.f32 %v2231, 1.0
    %v2248 = vadd.f32 %v2232, 1.0
    %v2249 = vadd.f32 %v2233, 1.0
    %v2250 = vadd.f32 %v2234, 1.0
    %v2251 = vadd.f32 %v2235, 1.0
    %v2252 = vadd.f32 %v2236, 1.0
    %v2253 = vadd.f32 %v2237, 1.0
    %v2254 = vadd.f32 %v2238, 1.0
    %v2255 = vadd.f32 %v2239, 1.0
    %v2256 = vadd.f32 %v2240, 1.0
    %v2257 = vadd.f32 %v2241, 1.0
    %v2258 = vmul.f32 %v2242, 0.5
    %v2259 = vmul.f32 %v2243, 0.5
    %v2260 = vmul.f32 %v2244, 0.5
    %v2261 = vmul.f32 %v2245, 0.5
    %v2262 = vmul.f32 %v2246, 0.5
    %v2263 = vmul.f32 %v2247, 0.5
    %v2264 = vmul.f32 %v2248, 0.5
    %v2265 = vmul.f32 %v2249, 0.5
    %v2266 = vmul.f32 %v2250, 0.5
    %v2267 = vmul.f32 %v2251, 0.5
    %v2268 = vmul.f32 %v2252, 0.5
    %v2269 = vmul.f32 %v2253, 0.5
    %v2270 = vmul.f32 %v2254, 0.5
    %v2271 = vmul.f32 %v2255, 0.5
    %v2272 = vmul.f32 %v2256, 0.5
    %v2273 = vmul.f32 %v2257, 0.5
    %2275 = vset.pattern.permute.xlu0 0
    %2276 = vperm.xlu0 %2275, %v2258
    %v2277 = vpop.permute.xlu0 %2276
    %2280 = vset.pattern.permute.xlu0 0
    %2281 = vperm.xlu0 %2280, %v2259
    %v2282 = vpop.permute.xlu0 %2281
    %2285 = vset.pattern.permute.xlu0 0
    %2286 = vperm.xlu0 %2285, %v2260
    %v2287 = vpop.permute.xlu0 %2286
    %2290 = vset.pattern.permute.xlu0 0
    %2291 = vperm.xlu0 %2290, %v2261
    %v2292 = vpop.permute.xlu0 %2291
    %2295 = vset.pattern.permute.xlu0 0
    %2296 = vperm.xlu0 %2295, %v2262
    %v2297 = vpop.permute.xlu0 %2296
    %2300 = vset.pattern.permute.xlu0 0
    %2301 = vperm.xlu0 %2300, %v2263
    %v2302 = vpop.permute.xlu0 %2301
    %2305 = vset.pattern.permute.xlu0 0
    %2306 = vperm.xlu0 %2305, %v2264
    %v2307 = vpop.permute.xlu0 %2306
    %2310 = vset.pattern.permute.xlu0 0
    %2311 = vperm.xlu0 %2310, %v2265
    %v2312 = vpop.permute.xlu0 %2311
    %2315 = vset.pattern.permute.xlu0 0
    %2316 = vperm.xlu0 %2315, %v2266
    %v2317 = vpop.permute.xlu0 %2316
    %2320 = vset.pattern.permute.xlu0 0
    %2321 = vperm.xlu0 %2320, %v2267
    %v2322 = vpop.permute.xlu0 %2321
    %2325 = vset.pattern.permute.xlu0 0
    %2326 = vperm.xlu0 %2325, %v2268
    %v2327 = vpop.permute.xlu0 %2326
    %2330 = vset.pattern.permute.xlu0 0
    %2331 = vperm.xlu0 %2330, %v2269
    %v2332 = vpop.permute.xlu0 %2331
    %2335 = vset.pattern.permute.xlu0 0
    %2336 = vperm.xlu0 %2335, %v2270
    %v2337 = vpop.permute.xlu0 %2336
    %2340 = vset.pattern.permute.xlu0 0
    %2341 = vperm.xlu0 %2340, %v2271
    %v2342 = vpop.permute.xlu0 %2341
    %2345 = vset.pattern.permute.xlu0 0
    %2346 = vperm.xlu0 %2345, %v2272
    %v2347 = vpop.permute.xlu0 %2346
    %2350 = vset.pattern.permute.xlu0 0
    %2351 = vperm.xlu0 %2350, %v2273
    %v2352 = vpop.permute.xlu0 %2351
    %2354 = vst [vmem:[#allocation4] sm:$0xff] %v2277
    %2355 = vst [vmem:[#allocation4 + $0x8] sm:$0xff] %v2282
    %2356 = vst [vmem:[#allocation4 + $0x10] sm:$0xff] %v2287
    %2357 = vst [vmem:[#allocation4 + $0x18] sm:$0xff] %v2292
    %2358 = vst [vmem:[#allocation4 + $0x20] sm:$0xff] %v2297
    %2359 = vst [vmem:[#allocation4 + $0x28] sm:$0xff] %v2302
    %2360 = vst [vmem:[#allocation4 + $0x30] sm:$0xff] %v2307
    %2361 = vst [vmem:[#allocation4 + $0x38] sm:$0xff] %v2312
    %2362 = vst [vmem:[#allocation4 + $0x40] sm:$0xff] %v2317
    %2363 = vst [vmem:[#allocation4 + $0x48] sm:$0xff] %v2322
    %2364 = vst [vmem:[#allocation4 + $0x50] sm:$0xff] %v2327
    %2365 = vst [vmem:[#allocation4 + $0x58] sm:$0xff] %v2332
    %2366 = vst [vmem:[#allocation4 + $0x60] sm:$0xff] %v2337
    %2367 = vst [vmem:[#allocation4 + $0x68] sm:$0xff] %v2342
    %2368 = vst [vmem:[#allocation4 + $0x70] sm:$0xff] %v2347
    %2369 = vst [vmem:[#allocation4 + $0x78] sm:$0xff] %v2352
    %v2370 = vld [vmem:[#allocation4] sm:$0xff]
    %v2371 = vld [vmem:[#allocation4 + $0x8] sm:$0xff]
    %v2372 = vld [vmem:[#allocation2] sm:$0xff]
    %v2373 = vld [vmem:[#allocation2 + $0x8] sm:$0xff]
    %v2374 = vld [vmem:[#allocation2 + $0x10] sm:$0xff]
    %v2375 = vld [vmem:[#allocation2 + $0x18] sm:$0xff]
    %v2376 = vld [vmem:[#allocation2 + $0x20] sm:$0xff]
    %v2377 = vld [vmem:[#allocation2 + $0x28] sm:$0xff]
    %v2378 = vld [vmem:[#allocation2 + $0x30] sm:$0xff]
    %v2379 = vld [vmem:[#allocation2 + $0x38] sm:$0xff]
    %v2380 = vld [vmem:[#allocation12] sm:$0xff]
    %v2381 = vld [vmem:[#allocation12 + $0x8] sm:$0xff]
    %v2382 = vld [vmem:[#allocation12 + $0x10] sm:$0xff]
    %v2383 = vld [vmem:[#allocation12 + $0x18] sm:$0xff]
    %v2384 = vld [vmem:[#allocation12 + $0x20] sm:$0xff]
    %v2385 = vld [vmem:[#allocation12 + $0x28] sm:$0xff]
    %v2386 = vld [vmem:[#allocation12 + $0x30] sm:$0xff]
    %v2387 = vld [vmem:[#allocation12 + $0x38] sm:$0xff]
    %v2388 = vld [vmem:[#allocation12 + $0x40] sm:$0xff]
    %v2389 = vld [vmem:[#allocation12 + $0x48] sm:$0xff]
    %v2390 = vld [vmem:[#allocation12 + $0x50] sm:$0xff]
    %v2391 = vld [vmem:[#allocation12 + $0x58] sm:$0xff]
    %v2392 = vld [vmem:[#allocation12 + $0x60] sm:$0xff]
    %v2393 = vld [vmem:[#allocation12 + $0x68] sm:$0xff]
    %v2394 = vld [vmem:[#allocation12 + $0x70] sm:$0xff]
    %v2395 = vld [vmem:[#allocation12 + $0x78] sm:$0xff]
    %v2396 = vld [vmem:[#allocation12 + $0x80] sm:$0xff]
    %v2397 = vld [vmem:[#allocation12 + $0x88] sm:$0xff]
    %v2398 = vld [vmem:[#allocation12 + $0x90] sm:$0xff]
    %v2399 = vld [vmem:[#allocation12 + $0x98] sm:$0xff]
    %v2400 = vld [vmem:[#allocation12 + $0xa0] sm:$0xff]
    %v2401 = vld [vmem:[#allocation12 + $0xa8] sm:$0xff]
    %v2402 = vld [vmem:[#allocation12 + $0xb0] sm:$0xff]
    %v2403 = vld [vmem:[#allocation12 + $0xb8] sm:$0xff]
    %v2404 = vld [vmem:[#allocation12 + $0xc0] sm:$0xff]
    %v2405 = vld [vmem:[#allocation12 + $0xc8] sm:$0xff]
    %v2406 = vld [vmem:[#allocation12 + $0xd0] sm:$0xff]
    %v2407 = vld [vmem:[#allocation12 + $0xd8] sm:$0xff]
    %v2408 = vld [vmem:[#allocation12 + $0xe0] sm:$0xff]
    %v2409 = vld [vmem:[#allocation12 + $0xe8] sm:$0xff]
    %v2410 = vld [vmem:[#allocation12 + $0xf0] sm:$0xff]
    %v2411 = vld [vmem:[#allocation12 + $0xf8] sm:$0xff]
    %v2444 = vunpack.c.l.b16 %v2380
    %v2445 = vunpack.c.h.b16 %v2380
    %v2446 = vunpack.c.l.b16 %v2381
    %v2447 = vunpack.c.h.b16 %v2381
    %v2448 = vunpack.c.l.b16 %v2382
    %v2449 = vunpack.c.h.b16 %v2382
    %v2450 = vunpack.c.l.b16 %v2383
    %v2451 = vunpack.c.h.b16 %v2383
    %v2452 = vunpack.c.l.b16 %v2384
    %v2453 = vunpack.c.h.b16 %v2384
    %v2454 = vunpack.c.l.b16 %v2385
    %v2455 = vunpack.c.h.b16 %v2385
    %v2456 = vunpack.c.l.b16 %v2386
    %v2457 = vunpack.c.h.b16 %v2386
    %v2458 = vunpack.c.l.b16 %v2387
    %v2459 = vunpack.c.h.b16 %v2387
    %v2460 = vunpack.c.l.b16 %v2388
    %v2461 = vunpack.c.h.b16 %v2388
    %v2462 = vunpack.c.l.b16 %v2389
    %v2463 = vunpack.c.h.b16 %v2389
    %v2464 = vunpack.c.l.b16 %v2390
    %v2465 = vunpack.c.h.b16 %v2390
    %v2466 = vunpack.c.l.b16 %v2391
    %v2467 = vunpack.c.h.b16 %v2391
    %v2468 = vunpack.c.l.b16 %v2392
    %v2469 = vunpack.c.h.b16 %v2392
    %v2470 = vunpack.c.l.b16 %v2393
    %v2471 = vunpack.c.h.b16 %v2393
    %v2472 = vunpack.c.l.b16 %v2394
    %v2473 = vunpack.c.h.b16 %v2394
    %v2474 = vunpack.c.l.b16 %v2395
    %v2475 = vunpack.c.h.b16 %v2395
    %v2476 = vunpack.c.l.b16 %v2396
    %v2477 = vunpack.c.h.b16 %v2396
    %v2478 = vunpack.c.l.b16 %v2397
    %v2479 = vunpack.c.h.b16 %v2397
    %v2480 = vunpack.c.l.b16 %v2398
    %v2481 = vunpack.c.h.b16 %v2398
    %v2482 = vunpack.c.l.b16 %v2399
    %v2483 = vunpack.c.h.b16 %v2399
    %v2484 = vunpack.c.l.b16 %v2400
    %v2485 = vunpack.c.h.b16 %v2400
    %v2486 = vunpack.c.l.b16 %v2401
    %v2487 = vunpack.c.h.b16 %v2401
    %v2488 = vunpack.c.l.b16 %v2402
    %v2489 = vunpack.c.h.b16 %v2402
    %v2490 = vunpack.c.l.b16 %v2403
    %v2491 = vunpack.c.h.b16 %v2403
    %v2492 = vunpack.c.l.b16 %v2404
    %v2493 = vunpack.c.h.b16 %v2404
    %v2494 = vunpack.c.l.b16 %v2405
    %v2495 = vunpack.c.h.b16 %v2405
    %v2496 = vunpack.c.l.b16 %v2406
    %v2497 = vunpack.c.h.b16 %v2406
    %v2498 = vunpack.c.l.b16 %v2407
    %v2499 = vunpack.c.h.b16 %v2407
    %v2500 = vunpack.c.l.b16 %v2408
    %v2501 = vunpack.c.h.b16 %v2408
    %v2502 = vunpack.c.l.b16 %v2409
    %v2503 = vunpack.c.h.b16 %v2409
    %v2504 = vunpack.c.l.b16 %v2410
    %v2505 = vunpack.c.h.b16 %v2410
    %v2506 = vunpack.c.l.b16 %v2411
    %v2507 = vunpack.c.h.b16 %v2411
    %v2508 = vpack.c.b16 %v2448, %v2444
    %v2509 = vpack.c.b16 %v2449, %v2445
    %v2510 = vpack.c.b16 %v2450, %v2446
    %v2511 = vpack.c.b16 %v2451, %v2447
    %v2512 = vpack.c.b16 %v2456, %v2452
    %v2513 = vpack.c.b16 %v2457, %v2453
    %v2514 = vpack.c.b16 %v2458, %v2454
    %v2515 = vpack.c.b16 %v2459, %v2455
    %v2516 = vpack.c.b16 %v2464, %v2460
    %v2517 = vpack.c.b16 %v2465, %v2461
    %v2518 = vpack.c.b16 %v2466, %v2462
    %v2519 = vpack.c.b16 %v2467, %v2463
    %v2520 = vpack.c.b16 %v2472, %v2468
    %v2521 = vpack.c.b16 %v2473, %v2469
    %v2522 = vpack.c.b16 %v2474, %v2470
    %v2523 = vpack.c.b16 %v2475, %v2471
    %v2524 = vpack.c.b16 %v2480, %v2476
    %v2525 = vpack.c.b16 %v2481, %v2477
    %v2526 = vpack.c.b16 %v2482, %v2478
    %v2527 = vpack.c.b16 %v2483, %v2479
    %v2528 = vpack.c.b16 %v2488, %v2484
    %v2529 = vpack.c.b16 %v2489, %v2485
    %v2530 = vpack.c.b16 %v2490, %v2486
    %v2531 = vpack.c.b16 %v2491, %v2487
    %v2532 = vpack.c.b16 %v2496, %v2492
    %v2533 = vpack.c.b16 %v2497, %v2493
    %v2534 = vpack.c.b16 %v2498, %v2494
    %v2535 = vpack.c.b16 %v2499, %v2495
    %v2536 = vpack.c.b16 %v2504, %v2500
    %v2537 = vpack.c.b16 %v2505, %v2501
    %v2538 = vpack.c.b16 %v2506, %v2502
    %v2539 = vpack.c.b16 %v2507, %v2503
    %2572 = vmatpush.bf16.msra.mxu0 %v2536
    %2573 = vmatpush.bf16.msra.mxu0 %v2532
    %2574 = vmatpush.bf16.msra.mxu0 %v2528
    %2575 = vmatpush.bf16.msra.mxu0 %v2524
    %2576 = vmatpush.bf16.msra.mxu0 %v2520
    %2577 = vmatpush.bf16.msra.mxu0 %v2516
    %2578 = vmatpush.bf16.msra.mxu0 %v2512
    %2579 = vmatpush.bf16.msra.mxu0 %v2508
    %2580 = vmatmul.bf16.gmra.mxu0 %v1991
    %v2581 = vpop.f32.mrf.mxu0
    %v2582 = vadd.f32 0.0, %v2581
    %v2583 = vpop.f32.mrf.mxu0
    %v2584 = vadd.f32 0.0, %v2583
    %2585 = vdwg.mxu0
    %2586 = vmatpush.bf16.msra.mxu0 %v2537
    %2587 = vmatpush.bf16.msra.mxu0 %v2533
    %2588 = vmatpush.bf16.msra.mxu0 %v2529
    %2589 = vmatpush.bf16.msra.mxu0 %v2525
    %2590 = vmatpush.bf16.msra.mxu0 %v2521
    %2591 = vmatpush.bf16.msra.mxu0 %v2517
    %2592 = vmatpush.bf16.msra.mxu0 %v2513
    %2593 = vmatpush.bf16.msra.mxu0 %v2509
    %2594 = vmatmul.bf16.gmra.mxu0 %v1991
    %v2595 = vpop.f32.mrf.mxu0
    %v2596 = vadd.f32 0.0, %v2595
    %v2597 = vpop.f32.mrf.mxu0
    %v2598 = vadd.f32 0.0, %v2597
    %2599 = vdwg.mxu0
    %2600 = vmatpush.bf16.msra.mxu0 %v2538
    %2601 = vmatpush.bf16.msra.mxu0 %v2534
    %2602 = vmatpush.bf16.msra.mxu0 %v2530
    %2603 = vmatpush.bf16.msra.mxu0 %v2526
    %2604 = vmatpush.bf16.msra.mxu0 %v2522
    %2605 = vmatpush.bf16.msra.mxu0 %v2518
    %2606 = vmatpush.bf16.msra.mxu0 %v2514
    %2607 = vmatpush.bf16.msra.mxu0 %v2510
    %2608 = vmatmul.bf16.gmra.mxu0 %v1991
    %v2609 = vpop.f32.mrf.mxu0
    %v2610 = vadd.f32 0.0, %v2609
    %v2611 = vpop.f32.mrf.mxu0
    %v2612 = vadd.f32 0.0, %v2611
    %2613 = vdwg.mxu0
    %2614 = vmatpush.bf16.msra.mxu0 %v2539
    %2615 = vmatpush.bf16.msra.mxu0 %v2535
    %2616 = vmatpush.bf16.msra.mxu0 %v2531
    %2617 = vmatpush.bf16.msra.mxu0 %v2527
    %2618 = vmatpush.bf16.msra.mxu0 %v2523
    %2619 = vmatpush.bf16.msra.mxu0 %v2519
    %2620 = vmatpush.bf16.msra.mxu0 %v2515
    %2621 = vmatpush.bf16.msra.mxu0 %v2511
    %2622 = vmatmul.bf16.gmra.mxu0 %v1991
    %v2623 = vpop.f32.mrf.mxu0
    %v2624 = vadd.f32 0.0, %v2623
    %v2625 = vpop.f32.mrf.mxu0
    %v2626 = vadd.f32 0.0, %v2625
    %2627 = vdwg.mxu0
    %v2628 = vadd.f32 %v2372, %v2582
    %v2629 = vadd.f32 %v2373, %v2596
    %v2630 = vadd.f32 %v2374, %v2610
    %v2631 = vadd.f32 %v2375, %v2624
    %v2632 = vadd.f32 %v2376, %v2584
    %v2633 = vadd.f32 %v2377, %v2598
    %v2634 = vadd.f32 %v2378, %v2612
    %v2635 = vadd.f32 %v2379, %v2626
    %v2636 = vmul.f32 %v2628, 0.5
    %v2637 = vmul.f32 %v2632, 0.5
    %v2638 = vtanh.pop %v2636
    %v2639 = vtanh.pop %v2637
    %v2640 = vadd.f32 %v2638, 1.0
    %v2641 = vadd.f32 %v2639, 1.0
    %v2642 = vmul.f32 %v2640, 0.5
    %v2643 = vmul.f32 %v2641, 0.5
    %v2644 = vmul.f32 %v2629, 0.5
    %v2645 = vmul.f32 %v2633, 0.5
    %v2646 = vtanh.pop %v2644
    %v2647 = vtanh.pop %v2645
    %v2648 = vadd.f32 %v2646, 1.0
    %v2649 = vadd.f32 %v2647, 1.0
    %v2650 = vmul.f32 %v2648, 0.5
    %v2651 = vmul.f32 %v2649, 0.5
    %v2652 = vtanh.pop %v2630
    %v2653 = vtanh.pop %v2634
    %v2654 = vmul.f32 %v2631, 0.5
    %v2655 = vmul.f32 %v2635, 0.5
    %v2656 = vtanh.pop %v2654
    %v2657 = vtanh.pop %v2655
    %v2658 = vadd.f32 %v2656, 1.0
    %v2659 = vadd.f32 %v2657, 1.0
    %v2660 = vmul.f32 %v2658, 0.5
    %v2661 = vmul.f32 %v2659, 0.5
    %v2662 = vmul.f32 %v2650, 0.0
    %v2663 = vmul.f32 %v2651, 0.0
    %v2664 = vmul.f32 %v2642, %v2652
    %v2665 = vmul.f32 %v2643, %v2653
    %v2666 = vadd.f32 %v2662, %v2664
    %v2667 = vadd.f32 %v2663, %v2665
    %v2668 = vtanh.pop %v2666
    %v2669 = vtanh.pop %v2667
    %v2670 = vmul.f32 %v2660, %v2668
    %v2671 = vmul.f32 %v2661, %v2669
    %v2672 = vmul.f32 %v2370, %v2670
    %v2673 = vmul.f32 %v2371, %v2671
    %v2674 = vsub.f32 1.0, %v2370
    %v2675 = vsub.f32 1.0, %v2371
    %v2676 = vmul.f32 %v2674, %v1989
    %v2677 = vmul.f32 %v2675, %v1990
    %v2678 = vadd.f32 %v2672, %v2676
    %v2679 = vadd.f32 %v2673, %v2677
    %v2680 = vmul.f32 %v2370, %v2666
    %v2681 = vmul.f32 %v2371, %v2667
    %v2682 = vmul.f32 %v2674, 0.0
    %v2683 = vmul.f32 %v2675, 0.0
    %v2684 = vadd.f32 %v2680, %v2682
    %v2685 = vadd.f32 %v2681, %v2683
    %v2686 = vld [vmem:[#allocation5] sm:$0xff]
    %v2687 = vld [vmem:[#allocation5 + $0x8] sm:$0xff]
    %v2688 = vmul.f32 %v2678, %v2686
    %v2689 = vmul.f32 %v2679, %v2687
    %v2690 = vadd.f32 %v2688, 0.0
    %v2691 = vadd.f32 %v2689, 0.0
    %s2692 = scalar_lea.vmem [#allocation4], 16
    %v2693 = vld [vmem:[%s2692] sm:$0xff]
    %v2694 = vld [vmem:[%s2692 + $0x8] sm:$0xff]
    %v2695 = vld [vmem:[%s1172] sm:$0xff]
    %v2696 = vld [vmem:[%s1172 + $0x8] sm:$0xff]
    %v2697 = vld [vmem:[%s1172 + $0x10] sm:$0xff]
    %v2698 = vld [vmem:[%s1172 + $0x18] sm:$0xff]
    %v2699 = vld [vmem:[%s1172 + $0x20] sm:$0xff]
    %v2700 = vld [vmem:[%s1172 + $0x28] sm:$0xff]
    %v2701 = vld [vmem:[%s1172 + $0x30] sm:$0xff]
    %v2702 = vld [vmem:[%s1172 + $0x38] sm:$0xff]
    %v2703 = vpack.c.bf16 %v2679, %v2678
    %2704 = vmatpush.bf16.msra.mxu0 %v2536
    %2705 = vmatpush.bf16.msra.mxu0 %v2532
    %2706 = vmatpush.bf16.msra.mxu0 %v2528
    %2707 = vmatpush.bf16.msra.mxu0 %v2524
    %2708 = vmatpush.bf16.msra.mxu0 %v2520
    %2709 = vmatpush.bf16.msra.mxu0 %v2516
    %2710 = vmatpush.bf16.msra.mxu0 %v2512
    %2711 = vmatpush.bf16.msra.mxu0 %v2508
    %2712 = vmatmul.bf16.gmra.mxu0 %v2703
    %v2713 = vpop.f32.mrf.mxu0
    %v2714 = vadd.f32 0.0, %v2713
    %v2715 = vpop.f32.mrf.mxu0
    %v2716 = vadd.f32 0.0, %v2715
    %2717 = vdwg.mxu0
    %2718 = vmatpush.bf16.msra.mxu0 %v2537
    %2719 = vmatpush.bf16.msra.mxu0 %v2533
    %2720 = vmatpush.bf16.msra.mxu0 %v2529
    %2721 = vmatpush.bf16.msra.mxu0 %v2525
    %2722 = vmatpush.bf16.msra.mxu0 %v2521
    %2723 = vmatpush.bf16.msra.mxu0 %v2517
    %2724 = vmatpush.bf16.msra.mxu0 %v2513
    %2725 = vmatpush.bf16.msra.mxu0 %v2509
    %2726 = vmatmul.bf16.gmra.mxu0 %v2703
    %v2727 = vpop.f32.mrf.mxu0
    %v2728 = vadd.f32 0.0, %v2727
    %v2729 = vpop.f32.mrf.mxu0
    %v2730 = vadd.f32 0.0, %v2729
    %2731 = vdwg.mxu0
    %2732 = vmatpush.bf16.msra.mxu0 %v2538
    %2733 = vmatpush.bf16.msra.mxu0 %v2534
    %2734 = vmatpush.bf16.msra.mxu0 %v2530
    %2735 = vmatpush.bf16.msra.mxu0 %v2526
    %2736 = vmatpush.bf16.msra.mxu0 %v2522
    %2737 = vmatpush.bf16.msra.mxu0 %v2518
    %2738 = vmatpush.bf16.msra.mxu0 %v2514
    %2739 = vmatpush.bf16.msra.mxu0 %v2510
    %2740 = vmatmul.bf16.gmra.mxu0 %v2703
    %v2741 = vpop.f32.mrf.mxu0
    %v2742 = vadd.f32 0.0, %v2741
    %v2743 = vpop.f32.mrf.mxu0
    %v2744 = vadd.f32 0.0, %v2743
    %2745 = vdwg.mxu0
    %2746 = vmatpush.bf16.msra.mxu0 %v2539
    %2747 = vmatpush.bf16.msra.mxu0 %v2535
    %2748 = vmatpush.bf16.msra.mxu0 %v2531
    %2749 = vmatpush.bf16.msra.mxu0 %v2527
    %2750 = vmatpush.bf16.msra.mxu0 %v2523
    %2751 = vmatpush.bf16.msra.mxu0 %v2519
    %2752 = vmatpush.bf16.msra.mxu0 %v2515
    %2753 = vmatpush.bf16.msra.mxu0 %v2511
    %2754 = vmatmul.bf16.gmra.mxu0 %v2703
    %v2755 = vpop.f32.mrf.mxu0
    %v2756 = vadd.f32 0.0, %v2755
    %v2757 = vpop.f32.mrf.mxu0
    %v2758 = vadd.f32 0.0, %v2757
    %2759 = vdwg.mxu0
    %v2760 = vadd.f32 %v2695, %v2714
    %v2761 = vadd.f32 %v2696, %v2728
    %v2762 = vadd.f32 %v2697, %v2742
    %v2763 = vadd.f32 %v2698, %v2756
    %v2764 = vadd.f32 %v2699, %v2716
    %v2765 = vadd.f32 %v2700, %v2730
    %v2766 = vadd.f32 %v2701, %v2744
    %v2767 = vadd.f32 %v2702, %v2758
    %v2768 = vmul.f32 %v2760, 0.5
    %v2769 = vmul.f32 %v2764, 0.5
    %v2770 = vtanh.pop %v2768
    %v2771 = vtanh.pop %v2769
    %v2772 = vadd.f32 %v2770, 1.0
    %v2773 = vadd.f32 %v2771, 1.0
    %v2774 = vmul.f32 %v2772, 0.5
    %v2775 = vmul.f32 %v2773, 0.5
    %v2776 = vmul.f32 %v2761, 0.5
    %v2777 = vmul.f32 %v2765, 0.5
    %v2778 = vtanh.pop %v2776
    %v2779 = vtanh.pop %v2777
    %v2780 = vadd.f32 %v2778, 1.0
    %v2781 = vadd.f32 %v2779, 1.0
    %v2782 = vmul.f32 %v2780, 0.5
    %v2783 = vmul.f32 %v2781, 0.5
    %v2784 = vtanh.pop %v2762
    %v2785 = vtanh.pop %v2766
    %v2786 = vmul.f32 %v2763, 0.5
    %v2787 = vmul.f32 %v2767, 0.5
    %v2788 = vtanh.pop %v2786
    %v2789 = vtanh.pop %v2787
    %v2790 = vadd.f32 %v2788, 1.0
    %v2791 = vadd.f32 %v2789, 1.0
    %v2792 = vmul.f32 %v2790, 0.5
    %v2793 = vmul.f32 %v2791, 0.5
    %v2794 = vmul.f32 %v2782, %v2684
    %v2795 = vmul.f32 %v2783, %v2685
    %v2796 = vmul.f32 %v2774, %v2784
    %v2797 = vmul.f32 %v2775, %v2785
    %v2798 = vadd.f32 %v2794, %v2796
    %v2799 = vadd.f32 %v2795, %v2797
    %v2800 = vtanh.pop %v2798
    %v2801 = vtanh.pop %v2799
    %v2802 = vmul.f32 %v2792, %v2800
    %v2803 = vmul.f32 %v2793, %v2801
    %v2804 = vmul.f32 %v2693, %v2802
    %v2805 = vmul.f32 %v2694, %v2803
    %v2806 = vsub.f32 1.0, %v2693
    %v2807 = vsub.f32 1.0, %v2694
    %v2808 = vmul.f32 %v2806, %v2678
    %v2809 = vmul.f32 %v2807, %v2679
    %v2810 = vadd.f32 %v2804, %v2808
    %v2811 = vadd.f32 %v2805, %v2809
    %v2812 = vmul.f32 %v2693, %v2798
    %v2813 = vmul.f32 %v2694, %v2799
    %v2814 = vmul.f32 %v2806, %v2684
    %v2815 = vmul.f32 %v2807, %v2685
    %v2816 = vadd.f32 %v2812, %v2814
    %v2817 = vadd.f32 %v2813, %v2815
    %v2818 = vld [vmem:[%s1282] sm:$0xff]
    %v2819 = vld [vmem:[%s1282 + $0x8] sm:$0xff]
    %v2820 = vmul.f32 %v2810, %v2818
    %v2821 = vmul.f32 %v2811, %v2819
    %v2822 = vadd.f32 %v2690, %v2820
    %v2823 = vadd.f32 %v2691, %v2821
    %s2824 = scalar_lea.vmem [#allocation4], 32
    %v2825 = vld [vmem:[%s2824] sm:$0xff]
    %v2826 = vld [vmem:[%s2824 + $0x8] sm:$0xff]
    %v2827 = vld [vmem:[%s1289] sm:$0xff]
    %v2828 = vld [vmem:[%s1289 + $0x8] sm:$0xff]
    %v2829 = vld [vmem:[%s1289 + $0x10] sm:$0xff]
    %v2830 = vld [vmem:[%s1289 + $0x18] sm:$0xff]
    %v2831 = vld [vmem:[%s1289 + $0x20] sm:$0xff]
    %v2832 = vld [vmem:[%s1289 + $0x28] sm:$0xff]
    %v2833 = vld [vmem:[%s1289 + $0x30] sm:$0xff]
    %v2834 = vld [vmem:[%s1289 + $0x38] sm:$0xff]
    %v2835 = vpack.c.bf16 %v2811, %v2810
    %2836 = vmatpush.bf16.msra.mxu0 %v2536
    %2837 = vmatpush.bf16.msra.mxu0 %v2532
    %2838 = vmatpush.bf16.msra.mxu0 %v2528
    %2839 = vmatpush.bf16.msra.mxu0 %v2524
    %2840 = vmatpush.bf16.msra.mxu0 %v2520
    %2841 = vmatpush.bf16.msra.mxu0 %v2516
    %2842 = vmatpush.bf16.msra.mxu0 %v2512
    %2843 = vmatpush.bf16.msra.mxu0 %v2508
    %2844 = vmatmul.bf16.gmra.mxu0 %v2835
    %v2845 = vpop.f32.mrf.mxu0
    %v2846 = vadd.f32 0.0, %v2845
    %v2847 = vpop.f32.mrf.mxu0
    %v2848 = vadd.f32 0.0, %v2847
    %2849 = vdwg.mxu0
    %2850 = vmatpush.bf16.msra.mxu0 %v2537
    %2851 = vmatpush.bf16.msra.mxu0 %v2533
    %2852 = vmatpush.bf16.msra.mxu0 %v2529
    %2853 = vmatpush.bf16.msra.mxu0 %v2525
    %2854 = vmatpush.bf16.msra.mxu0 %v2521
    %2855 = vmatpush.bf16.msra.mxu0 %v2517
    %2856 = vmatpush.bf16.msra.mxu0 %v2513
    %2857 = vmatpush.bf16.msra.mxu0 %v2509
    %2858 = vmatmul.bf16.gmra.mxu0 %v2835
    %v2859 = vpop.f32.mrf.mxu0
    %v2860 = vadd.f32 0.0, %v2859
    %v2861 = vpop.f32.mrf.mxu0
    %v2862 = vadd.f32 0.0, %v2861
    %2863 = vdwg.mxu0
    %2864 = vmatpush.bf16.msra.mxu0 %v2538
    %2865 = vmatpush.bf16.msra.mxu0 %v2534
    %2866 = vmatpush.bf16.msra.mxu0 %v2530
    %2867 = vmatpush.bf16.msra.mxu0 %v2526
    %2868 = vmatpush.bf16.msra.mxu0 %v2522
    %2869 = vmatpush.bf16.msra.mxu0 %v2518
    %2870 = vmatpush.bf16.msra.mxu0 %v2514
    %2871 = vmatpush.bf16.msra.mxu0 %v2510
    %2872 = vmatmul.bf16.gmra.mxu0 %v2835
    %v2873 = vpop.f32.mrf.mxu0
    %v2874 = vadd.f32 0.0, %v2873
    %v2875 = vpop.f32.mrf.mxu0
    %v2876 = vadd.f32 0.0, %v2875
    %2877 = vdwg.mxu0
    %2878 = vmatpush.bf16.msra.mxu0 %v2539
    %2879 = vmatpush.bf16.msra.mxu0 %v2535
    %2880 = vmatpush.bf16.msra.mxu0 %v2531
    %2881 = vmatpush.bf16.msra.mxu0 %v2527
    %2882 = vmatpush.bf16.msra.mxu0 %v2523
    %2883 = vmatpush.bf16.msra.mxu0 %v2519
    %2884 = vmatpush.bf16.msra.mxu0 %v2515
    %2885 = vmatpush.bf16.msra.mxu0 %v2511
    %2886 = vmatmul.bf16.gmra.mxu0 %v2835
    %v2887 = vpop.f32.mrf.mxu0
    %v2888 = vadd.f32 0.0, %v2887
    %v2889 = vpop.f32.mrf.mxu0
    %v2890 = vadd.f32 0.0, %v2889
    %2891 = vdwg.mxu0
    %v2892 = vadd.f32 %v2827, %v2846
    %v2893 = vadd.f32 %v2828, %v2860
    %v2894 = vadd.f32 %v2829, %v2874
    %v2895 = vadd.f32 %v2830, %v2888
    %v2896 = vadd.f32 %v2831, %v2848
    %v2897 = vadd.f32 %v2832, %v2862
    %v2898 = vadd.f32 %v2833, %v2876
    %v2899 = vadd.f32 %v2834, %v2890
    %v2900 = vmul.f32 %v2892, 0.5
    %v2901 = vmul.f32 %v2896, 0.5
    %v2902 = vtanh.pop %v2900
    %v2903 = vtanh.pop %v2901
    %v2904 = vadd.f32 %v2902, 1.0
    %v2905 = vadd.f32 %v2903, 1.0
    %v2906 = vmul.f32 %v2904, 0.5
    %v2907 = vmul.f32 %v2905, 0.5
    %v2908 = vmul.f32 %v2893, 0.5
    %v2909 = vmul.f32 %v2897, 0.5
    %v2910 = vtanh.pop %v2908
    %v2911 = vtanh.pop %v2909
    %v2912 = vadd.f32 %v2910, 1.0
    %v2913 = vadd.f32 %v2911, 1.0
    %v2914 = vmul.f32 %v2912, 0.5
    %v2915 = vmul.f32 %v2913, 0.5
    %v2916 = vtanh.pop %v2894
    %v2917 = vtanh.pop %v2898
    %v2918 = vmul.f32 %v2895, 0.5
    %v2919 = vmul.f32 %v2899, 0.5
    %v2920 = vtanh.pop %v2918
    %v2921 = vtanh.pop %v2919
    %v2922 = vadd.f32 %v2920, 1.0
    %v2923 = vadd.f32 %v2921, 1.0
    %v2924 = vmul.f32 %v2922, 0.5
    %v2925 = vmul.f32 %v2923, 0.5
    %v2926 = vmul.f32 %v2914, %v2816
    %v2927 = vmul.f32 %v2915, %v2817
    %v2928 = vmul.f32 %v2906, %v2916
    %v2929 = vmul.f32 %v2907, %v2917
    %v2930 = vadd.f32 %v2926, %v2928
    %v2931 = vadd.f32 %v2927, %v2929
    %v2932 = vtanh.pop %v2930
    %v2933 = vtanh.pop %v2931
    %v2934 = vmul.f32 %v2924, %v2932
    %v2935 = vmul.f32 %v2925, %v2933
    %v2936 = vmul.f32 %v2825, %v2934
    %v2937 = vmul.f32 %v2826, %v2935
    %v2938 = vsub.f32 1.0, %v2825
    %v2939 = vsub.f32 1.0, %v2826
    %v2940 = vmul.f32 %v2938, %v2810
    %v2941 = vmul.f32 %v2939, %v2811
    %v2942 = vadd.f32 %v2936, %v2940
    %v2943 = vadd.f32 %v2937, %v2941
    %v2944 = vmul.f32 %v2825, %v2930
    %v2945 = vmul.f32 %v2826, %v2931
    %v2946 = vmul.f32 %v2938, %v2816
    %v2947 = vmul.f32 %v2939, %v2817
    %v2948 = vadd.f32 %v2944, %v2946
    %v2949 = vadd.f32 %v2945, %v2947
    %v2950 = vld [vmem:[%s1399] sm:$0xff]
    %v2951 = vld [vmem:[%s1399 + $0x8] sm:$0xff]
    %v2952 = vmul.f32 %v2942, %v2950
    %v2953 = vmul.f32 %v2943, %v2951
    %v2954 = vadd.f32 %v2822, %v2952
    %v2955 = vadd.f32 %v2823, %v2953
    %s2956 = scalar_lea.vmem [#allocation4], 48
    %v2957 = vld [vmem:[%s2956] sm:$0xff]
    %v2958 = vld [vmem:[%s2956 + $0x8] sm:$0xff]
    %v2959 = vld [vmem:[%s1406] sm:$0xff]
    %v2960 = vld [vmem:[%s1406 + $0x8] sm:$0xff]
    %v2961 = vld [vmem:[%s1406 + $0x10] sm:$0xff]
    %v2962 = vld [vmem:[%s1406 + $0x18] sm:$0xff]
    %v2963 = vld [vmem:[%s1406 + $0x20] sm:$0xff]
    %v2964 = vld [vmem:[%s1406 + $0x28] sm:$0xff]
    %v2965 = vld [vmem:[%s1406 + $0x30] sm:$0xff]
    %v2966 = vld [vmem:[%s1406 + $0x38] sm:$0xff]
    %v2967 = vpack.c.bf16 %v2943, %v2942
    %2968 = vmatpush.bf16.msra.mxu0 %v2536
    %2969 = vmatpush.bf16.msra.mxu0 %v2532
    %2970 = vmatpush.bf16.msra.mxu0 %v2528
    %2971 = vmatpush.bf16.msra.mxu0 %v2524
    %2972 = vmatpush.bf16.msra.mxu0 %v2520
    %2973 = vmatpush.bf16.msra.mxu0 %v2516
    %2974 = vmatpush.bf16.msra.mxu0 %v2512
    %2975 = vmatpush.bf16.msra.mxu0 %v2508
    %2976 = vmatmul.bf16.gmra.mxu0 %v2967
    %v2977 = vpop.f32.mrf.mxu0
    %v2978 = vadd.f32 0.0, %v2977
    %v2979 = vpop.f32.mrf.mxu0
    %v2980 = vadd.f32 0.0, %v2979
    %2981 = vdwg.mxu0
    %2982 = vmatpush.bf16.msra.mxu0 %v2537
    %2983 = vmatpush.bf16.msra.mxu0 %v2533
    %2984 = vmatpush.bf16.msra.mxu0 %v2529
    %2985 = vmatpush.bf16.msra.mxu0 %v2525
    %2986 = vmatpush.bf16.msra.mxu0 %v2521
    %2987 = vmatpush.bf16.msra.mxu0 %v2517
    %2988 = vmatpush.bf16.msra.mxu0 %v2513
    %2989 = vmatpush.bf16.msra.mxu0 %v2509
    %2990 = vmatmul.bf16.gmra.mxu0 %v2967
    %v2991 = vpop.f32.mrf.mxu0
    %v2992 = vadd.f32 0.0, %v2991
    %v2993 = vpop.f32.mrf.mxu0
    %v2994 = vadd.f32 0.0, %v2993
    %2995 = vdwg.mxu0
    %2996 = vmatpush.bf16.msra.mxu0 %v2538
    %2997 = vmatpush.bf16.msra.mxu0 %v2534
    %2998 = vmatpush.bf16.msra.mxu0 %v2530
    %2999 = vmatpush.bf16.msra.mxu0 %v2526
    %3000 = vmatpush.bf16.msra.mxu0 %v2522
    %3001 = vmatpush.bf16.msra.mxu0 %v2518
    %3002 = vmatpush.bf16.msra.mxu0 %v2514
    %3003 = vmatpush.bf16.msra.mxu0 %v2510
    %3004 = vmatmul.bf16.gmra.mxu0 %v2967
    %v3005 = vpop.f32.mrf.mxu0
    %v3006 = vadd.f32 0.0, %v3005
    %v3007 = vpop.f32.mrf.mxu0
    %v3008 = vadd.f32 0.0, %v3007
    %3009 = vdwg.mxu0
    %3010 = vmatpush.bf16.msra.mxu0 %v2539
    %3011 = vmatpush.bf16.msra.mxu0 %v2535
    %3012 = vmatpush.bf16.msra.mxu0 %v2531
    %3013 = vmatpush.bf16.msra.mxu0 %v2527
    %3014 = vmatpush.bf16.msra.mxu0 %v2523
    %3015 = vmatpush.bf16.msra.mxu0 %v2519
    %3016 = vmatpush.bf16.msra.mxu0 %v2515
    %3017 = vmatpush.bf16.msra.mxu0 %v2511
    %3018 = vmatmul.bf16.gmra.mxu0 %v2967
    %v3019 = vpop.f32.mrf.mxu0
    %v3020 = vadd.f32 0.0, %v3019
    %v3021 = vpop.f32.mrf.mxu0
    %v3022 = vadd.f32 0.0, %v3021
    %3023 = vdwg.mxu0
    %v3024 = vadd.f32 %v2959, %v2978
    %v3025 = vadd.f32 %v2960, %v2992
    %v3026 = vadd.f32 %v2961, %v3006
    %v3027 = vadd.f32 %v2962, %v3020
    %v3028 = vadd.f32 %v2963, %v2980
    %v3029 = vadd.f32 %v2964, %v2994
    %v3030 = vadd.f32 %v2965, %v3008
    %v3031 = vadd.f32 %v2966, %v3022
    %v3032 = vmul.f32 %v3024, 0.5
    %v3033 = vmul.f32 %v3028, 0.5
    %v3034 = vtanh.pop %v3032
    %v3035 = vtanh.pop %v3033
    %v3036 = vadd.f32 %v3034, 1.0
    %v3037 = vadd.f32 %v3035, 1.0
    %v3038 = vmul.f32 %v3036, 0.5
    %v3039 = vmul.f32 %v3037, 0.5
    %v3040 = vmul.f32 %v3025, 0.5
    %v3041 = vmul.f32 %v3029, 0.5
    %v3042 = vtanh.pop %v3040
    %v3043 = vtanh.pop %v3041
    %v3044 = vadd.f32 %v3042, 1.0
    %v3045 = vadd.f32 %v3043, 1.0
    %v3046 = vmul.f32 %v3044, 0.5
    %v3047 = vmul.f32 %v3045, 0.5
    %v3048 = vtanh.pop %v3026
    %v3049 = vtanh.pop %v3030
    %v3050 = vmul.f32 %v3027, 0.5
    %v3051 = vmul.f32 %v3031, 0.5
    %v3052 = vtanh.pop %v3050
    %v3053 = vtanh.pop %v3051
    %v3054 = vadd.f32 %v3052, 1.0
    %v3055 = vadd.f32 %v3053, 1.0
    %v3056 = vmul.f32 %v3054, 0.5
    %v3057 = vmul.f32 %v3055, 0.5
    %v3058 = vmul.f32 %v3046, %v2948
    %v3059 = vmul.f32 %v3047, %v2949
    %v3060 = vmul.f32 %v3038, %v3048
    %v3061 = vmul.f32 %v3039, %v3049
    %v3062 = vadd.f32 %v3058, %v3060
    %v3063 = vadd.f32 %v3059, %v3061
    %v3064 = vtanh.pop %v3062
    %v3065 = vtanh.pop %v3063
    %v3066 = vmul.f32 %v3056, %v3064
    %v3067 = vmul.f32 %v3057, %v3065
    %v3068 = vmul.f32 %v2957, %v3066
    %v3069 = vmul.f32 %v2958, %v3067
    %v3070 = vsub.f32 1.0, %v2957
    %v3071 = vsub.f32 1.0, %v2958
    %v3072 = vmul.f32 %v3070, %v2942
    %v3073 = vmul.f32 %v3071, %v2943
    %v3074 = vadd.f32 %v3068, %v3072
    %v3075 = vadd.f32 %v3069, %v3073
    %v3076 = vmul.f32 %v2957, %v3062
    %v3077 = vmul.f32 %v2958, %v3063
    %v3078 = vmul.f32 %v3070, %v2948
    %v3079 = vmul.f32 %v3071, %v2949
    %v3080 = vadd.f32 %v3076, %v3078
    %v3081 = vadd.f32 %v3077, %v3079
    %v3082 = vld [vmem:[%s1516] sm:$0xff]
    %v3083 = vld [vmem:[%s1516 + $0x8] sm:$0xff]
    %v3084 = vmul.f32 %v3074, %v3082
    %v3085 = vmul.f32 %v3075, %v3083
    %v3086 = vadd.f32 %v2954, %v3084
    %v3087 = vadd.f32 %v2955, %v3085
    %s3088 = scalar_lea.vmem [#allocation4], 64
    %v3089 = vld [vmem:[%s3088] sm:$0xff]
    %v3090 = vld [vmem:[%s3088 + $0x8] sm:$0xff]
    %v3091 = vld [vmem:[%s1523] sm:$0xff]
    %v3092 = vld [vmem:[%s1523 + $0x8] sm:$0xff]
    %v3093 = vld [vmem:[%s1523 + $0x10] sm:$0xff]
    %v3094 = vld [vmem:[%s1523 + $0x18] sm:$0xff]
    %v3095 = vld [vmem:[%s1523 + $0x20] sm:$0xff]
    %v3096 = vld [vmem:[%s1523 + $0x28] sm:$0xff]
    %v3097 = vld [vmem:[%s1523 + $0x30] sm:$0xff]
    %v3098 = vld [vmem:[%s1523 + $0x38] sm:$0xff]
    %v3099 = vpack.c.bf16 %v3075, %v3074
    %3100 = vmatpush.bf16.msra.mxu0 %v2536
    %3101 = vmatpush.bf16.msra.mxu0 %v2532
    %3102 = vmatpush.bf16.msra.mxu0 %v2528
    %3103 = vmatpush.bf16.msra.mxu0 %v2524
    %3104 = vmatpush.bf16.msra.mxu0 %v2520
    %3105 = vmatpush.bf16.msra.mxu0 %v2516
    %3106 = vmatpush.bf16.msra.mxu0 %v2512
    %3107 = vmatpush.bf16.msra.mxu0 %v2508
    %3108 = vmatmul.bf16.gmra.mxu0 %v3099
    %v3109 = vpop.f32.mrf.mxu0
    %v3110 = vadd.f32 0.0, %v3109
    %v3111 = vpop.f32.mrf.mxu0
    %v3112 = vadd.f32 0.0, %v3111
    %3113 = vdwg.mxu0
    %3114 = vmatpush.bf16.msra.mxu0 %v2537
    %3115 = vmatpush.bf16.msra.mxu0 %v2533
    %3116 = vmatpush.bf16.msra.mxu0 %v2529
    %3117 = vmatpush.bf16.msra.mxu0 %v2525
    %3118 = vmatpush.bf16.msra.mxu0 %v2521
    %3119 = vmatpush.bf16.msra.mxu0 %v2517
    %3120 = vmatpush.bf16.msra.mxu0 %v2513
    %3121 = vmatpush.bf16.msra.mxu0 %v2509
    %3122 = vmatmul.bf16.gmra.mxu0 %v3099
    %v3123 = vpop.f32.mrf.mxu0
    %v3124 = vadd.f32 0.0, %v3123
    %v3125 = vpop.f32.mrf.mxu0
    %v3126 = vadd.f32 0.0, %v3125
    %3127 = vdwg.mxu0
    %3128 = vmatpush.bf16.msra.mxu0 %v2538
    %3129 = vmatpush.bf16.msra.mxu0 %v2534
    %3130 = vmatpush.bf16.msra.mxu0 %v2530
    %3131 = vmatpush.bf16.msra.mxu0 %v2526
    %3132 = vmatpush.bf16.msra.mxu0 %v2522
    %3133 = vmatpush.bf16.msra.mxu0 %v2518
    %3134 = vmatpush.bf16.msra.mxu0 %v2514
    %3135 = vmatpush.bf16.msra.mxu0 %v2510
    %3136 = vmatmul.bf16.gmra.mxu0 %v3099
    %v3137 = vpop.f32.mrf.mxu0
    %v3138 = vadd.f32 0.0, %v3137
    %v3139 = vpop.f32.mrf.mxu0
    %v3140 = vadd.f32 0.0, %v3139
    %3141 = vdwg.mxu0
    %3142 = vmatpush.bf16.msra.mxu0 %v2539
    %3143 = vmatpush.bf16.msra.mxu0 %v2535
    %3144 = vmatpush.bf16.msra.mxu0 %v2531
    %3145 = vmatpush.bf16.msra.mxu0 %v2527
    %3146 = vmatpush.bf16.msra.mxu0 %v2523
    %3147 = vmatpush.bf16.msra.mxu0 %v2519
    %3148 = vmatpush.bf16.msra.mxu0 %v2515
    %3149 = vmatpush.bf16.msra.mxu0 %v2511
    %3150 = vmatmul.bf16.gmra.mxu0 %v3099
    %v3151 = vpop.f32.mrf.mxu0
    %v3152 = vadd.f32 0.0, %v3151
    %v3153 = vpop.f32.mrf.mxu0
    %v3154 = vadd.f32 0.0, %v3153
    %3155 = vdwg.mxu0
    %v3156 = vadd.f32 %v3091, %v3110
    %v3157 = vadd.f32 %v3092, %v3124
    %v3158 = vadd.f32 %v3093, %v3138
    %v3159 = vadd.f32 %v3094, %v3152
    %v3160 = vadd.f32 %v3095, %v3112
    %v3161 = vadd.f32 %v3096, %v3126
    %v3162 = vadd.f32 %v3097, %v3140
    %v3163 = vadd.f32 %v3098, %v3154
    %v3164 = vmul.f32 %v3156, 0.5
    %v3165 = vmul.f32 %v3160, 0.5
    %v3166 = vtanh.pop %v3164
    %v3167 = vtanh.pop %v3165
    %v3168 = vadd.f32 %v3166, 1.0
    %v3169 = vadd.f32 %v3167, 1.0
    %v3170 = vmul.f32 %v3168, 0.5
    %v3171 = vmul.f32 %v3169, 0.5
    %v3172 = vmul.f32 %v3157, 0.5
    %v3173 = vmul.f32 %v3161, 0.5
    %v3174 = vtanh.pop %v3172
    %v3175 = vtanh.pop %v3173
    %v3176 = vadd.f32 %v3174, 1.0
    %v3177 = vadd.f32 %v3175, 1.0
    %v3178 = vmul.f32 %v3176, 0.5
    %v3179 = vmul.f32 %v3177, 0.5
    %v3180 = vtanh.pop %v3158
    %v3181 = vtanh.pop %v3162
    %v3182 = vmul.f32 %v3159, 0.5
    %v3183 = vmul.f32 %v3163, 0.5
    %v3184 = vtanh.pop %v3182
    %v3185 = vtanh.pop %v3183
    %v3186 = vadd.f32 %v3184, 1.0
    %v3187 = vadd.f32 %v3185, 1.0
    %v3188 = vmul.f32 %v3186, 0.5
    %v3189 = vmul.f32 %v3187, 0.5
    %v3190 = vmul.f32 %v3178, %v3080
    %v3191 = vmul.f32 %v3179, %v3081
    %v3192 = vmul.f32 %v3170, %v3180
    %v3193 = vmul.f32 %v3171, %v3181
    %v3194 = vadd.f32 %v3190, %v3192
    %v3195 = vadd.f32 %v3191, %v3193
    %v3196 = vtanh.pop %v3194
    %v3197 = vtanh.pop %v3195
    %v3198 = vmul.f32 %v3188, %v3196
    %v3199 = vmul.f32 %v3189, %v3197
    %v3200 = vmul.f32 %v3089, %v3198
    %v3201 = vmul.f32 %v3090, %v3199
    %v3202 = vsub.f32 1.0, %v3089
    %v3203 = vsub.f32 1.0, %v3090
    %v3204 = vmul.f32 %v3202, %v3074
    %v3205 = vmul.f32 %v3203, %v3075
    %v3206 = vadd.f32 %v3200, %v3204
    %v3207 = vadd.f32 %v3201, %v3205
    %v3208 = vmul.f32 %v3089, %v3194
    %v3209 = vmul.f32 %v3090, %v3195
    %v3210 = vmul.f32 %v3202, %v3080
    %v3211 = vmul.f32 %v3203, %v3081
    %v3212 = vadd.f32 %v3208, %v3210
    %v3213 = vadd.f32 %v3209, %v3211
    %v3214 = vld [vmem:[%s1633] sm:$0xff]
    %v3215 = vld [vmem:[%s1633 + $0x8] sm:$0xff]
    %v3216 = vmul.f32 %v3206, %v3214
    %v3217 = vmul.f32 %v3207, %v3215
    %v3218 = vadd.f32 %v3086, %v3216
    %v3219 = vadd.f32 %v3087, %v3217
    %s3220 = scalar_lea.vmem [#allocation4], 80
    %v3221 = vld [vmem:[%s3220] sm:$0xff]
    %v3222 = vld [vmem:[%s3220 + $0x8] sm:$0xff]
    %v3223 = vld [vmem:[%s1640] sm:$0xff]
    %v3224 = vld [vmem:[%s1640 + $0x8] sm:$0xff]
    %v3225 = vld [vmem:[%s1640 + $0x10] sm:$0xff]
    %v3226 = vld [vmem:[%s1640 + $0x18] sm:$0xff]
    %v3227 = vld [vmem:[%s1640 + $0x20] sm:$0xff]
    %v3228 = vld [vmem:[%s1640 + $0x28] sm:$0xff]
    %v3229 = vld [vmem:[%s1640 + $0x30] sm:$0xff]
    %v3230 = vld [vmem:[%s1640 + $0x38] sm:$0xff]
    %v3231 = vpack.c.bf16 %v3207, %v3206
    %3232 = vmatpush.bf16.msra.mxu0 %v2536
    %3233 = vmatpush.bf16.msra.mxu0 %v2532
    %3234 = vmatpush.bf16.msra.mxu0 %v2528
    %3235 = vmatpush.bf16.msra.mxu0 %v2524
    %3236 = vmatpush.bf16.msra.mxu0 %v2520
    %3237 = vmatpush.bf16.msra.mxu0 %v2516
    %3238 = vmatpush.bf16.msra.mxu0 %v2512
    %3239 = vmatpush.bf16.msra.mxu0 %v2508
    %3240 = vmatmul.bf16.gmra.mxu0 %v3231
    %v3241 = vpop.f32.mrf.mxu0
    %v3242 = vadd.f32 0.0, %v3241
    %v3243 = vpop.f32.mrf.mxu0
    %v3244 = vadd.f32 0.0, %v3243
    %3245 = vdwg.mxu0
    %3246 = vmatpush.bf16.msra.mxu0 %v2537
    %3247 = vmatpush.bf16.msra.mxu0 %v2533
    %3248 = vmatpush.bf16.msra.mxu0 %v2529
    %3249 = vmatpush.bf16.msra.mxu0 %v2525
    %3250 = vmatpush.bf16.msra.mxu0 %v2521
    %3251 = vmatpush.bf16.msra.mxu0 %v2517
    %3252 = vmatpush.bf16.msra.mxu0 %v2513
    %3253 = vmatpush.bf16.msra.mxu0 %v2509
    %3254 = vmatmul.bf16.gmra.mxu0 %v3231
    %v3255 = vpop.f32.mrf.mxu0
    %v3256 = vadd.f32 0.0, %v3255
    %v3257 = vpop.f32.mrf.mxu0
    %v3258 = vadd.f32 0.0, %v3257
    %3259 = vdwg.mxu0
    %3260 = vmatpush.bf16.msra.mxu0 %v2538
    %3261 = vmatpush.bf16.msra.mxu0 %v2534
    %3262 = vmatpush.bf16.msra.mxu0 %v2530
    %3263 = vmatpush.bf16.msra.mxu0 %v2526
    %3264 = vmatpush.bf16.msra.mxu0 %v2522
    %3265 = vmatpush.bf16.msra.mxu0 %v2518
    %3266 = vmatpush.bf16.msra.mxu0 %v2514
    %3267 = vmatpush.bf16.msra.mxu0 %v2510
    %3268 = vmatmul.bf16.gmra.mxu0 %v3231
    %v3269 = vpop.f32.mrf.mxu0
    %v3270 = vadd.f32 0.0, %v3269
    %v3271 = vpop.f32.mrf.mxu0
    %v3272 = vadd.f32 0.0, %v3271
    %3273 = vdwg.mxu0
    %3274 = vmatpush.bf16.msra.mxu0 %v2539
    %3275 = vmatpush.bf16.msra.mxu0 %v2535
    %3276 = vmatpush.bf16.msra.mxu0 %v2531
    %3277 = vmatpush.bf16.msra.mxu0 %v2527
    %3278 = vmatpush.bf16.msra.mxu0 %v2523
    %3279 = vmatpush.bf16.msra.mxu0 %v2519
    %3280 = vmatpush.bf16.msra.mxu0 %v2515
    %3281 = vmatpush.bf16.msra.mxu0 %v2511
    %3282 = vmatmul.bf16.gmra.mxu0 %v3231
    %v3283 = vpop.f32.mrf.mxu0
    %v3284 = vadd.f32 0.0, %v3283
    %v3285 = vpop.f32.mrf.mxu0
    %v3286 = vadd.f32 0.0, %v3285
    %3287 = vdwg.mxu0
    %v3288 = vadd.f32 %v3223, %v3242
    %v3289 = vadd.f32 %v3224, %v3256
    %v3290 = vadd.f32 %v3225, %v3270
    %v3291 = vadd.f32 %v3226, %v3284
    %v3292 = vadd.f32 %v3227, %v3244
    %v3293 = vadd.f32 %v3228, %v3258
    %v3294 = vadd.f32 %v3229, %v3272
    %v3295 = vadd.f32 %v3230, %v3286
    %v3296 = vmul.f32 %v3288, 0.5
    %v3297 = vmul.f32 %v3292, 0.5
    %v3298 = vtanh.pop %v3296
    %v3299 = vtanh.pop %v3297
    %v3300 = vadd.f32 %v3298, 1.0
    %v3301 = vadd.f32 %v3299, 1.0
    %v3302 = vmul.f32 %v3300, 0.5
    %v3303 = vmul.f32 %v3301, 0.5
    %v3304 = vmul.f32 %v3289, 0.5
    %v3305 = vmul.f32 %v3293, 0.5
    %v3306 = vtanh.pop %v3304
    %v3307 = vtanh.pop %v3305
    %v3308 = vadd.f32 %v3306, 1.0
    %v3309 = vadd.f32 %v3307, 1.0
    %v3310 = vmul.f32 %v3308, 0.5
    %v3311 = vmul.f32 %v3309, 0.5
    %v3312 = vtanh.pop %v3290
    %v3313 = vtanh.pop %v3294
    %v3314 = vmul.f32 %v3291, 0.5
    %v3315 = vmul.f32 %v3295, 0.5
    %v3316 = vtanh.pop %v3314
    %v3317 = vtanh.pop %v3315
    %v3318 = vadd.f32 %v3316, 1.0
    %v3319 = vadd.f32 %v3317, 1.0
    %v3320 = vmul.f32 %v3318, 0.5
    %v3321 = vmul.f32 %v3319, 0.5
    %v3322 = vmul.f32 %v3310, %v3212
    %v3323 = vmul.f32 %v3311, %v3213
    %v3324 = vmul.f32 %v3302, %v3312
    %v3325 = vmul.f32 %v3303, %v3313
    %v3326 = vadd.f32 %v3322, %v3324
    %v3327 = vadd.f32 %v3323, %v3325
    %v3328 = vtanh.pop %v3326
    %v3329 = vtanh.pop %v3327
    %v3330 = vmul.f32 %v3320, %v3328
    %v3331 = vmul.f32 %v3321, %v3329
    %v3332 = vmul.f32 %v3221, %v3330
    %v3333 = vmul.f32 %v3222, %v3331
    %v3334 = vsub.f32 1.0, %v3221
    %v3335 = vsub.f32 1.0, %v3222
    %v3336 = vmul.f32 %v3334, %v3206
    %v3337 = vmul.f32 %v3335, %v3207
    %v3338 = vadd.f32 %v3332, %v3336
    %v3339 = vadd.f32 %v3333, %v3337
    %v3340 = vmul.f32 %v3221, %v3326
    %v3341 = vmul.f32 %v3222, %v3327
    %v3342 = vmul.f32 %v3334, %v3212
    %v3343 = vmul.f32 %v3335, %v3213
    %v3344 = vadd.f32 %v3340, %v3342
    %v3345 = vadd.f32 %v3341, %v3343
    %v3346 = vld [vmem:[%s1750] sm:$0xff]
    %v3347 = vld [vmem:[%s1750 + $0x8] sm:$0xff]
    %v3348 = vmul.f32 %v3338, %v3346
    %v3349 = vmul.f32 %v3339, %v3347
    %v3350 = vadd.f32 %v3218, %v3348
    %v3351 = vadd.f32 %v3219, %v3349
    %s3352 = scalar_lea.vmem [#allocation4], 96
    %v3353 = vld [vmem:[%s3352] sm:$0xff]
    %v3354 = vld [vmem:[%s3352 + $0x8] sm:$0xff]
    %v3355 = vld [vmem:[%s1757] sm:$0xff]
    %v3356 = vld [vmem:[%s1757 + $0x8] sm:$0xff]
    %v3357 = vld [vmem:[%s1757 + $0x10] sm:$0xff]
    %v3358 = vld [vmem:[%s1757 + $0x18] sm:$0xff]
    %v3359 = vld [vmem:[%s1757 + $0x20] sm:$0xff]
    %v3360 = vld [vmem:[%s1757 + $0x28] sm:$0xff]
    %v3361 = vld [vmem:[%s1757 + $0x30] sm:$0xff]
    %v3362 = vld [vmem:[%s1757 + $0x38] sm:$0xff]
    %v3363 = vpack.c.bf16 %v3339, %v3338
    %3364 = vmatpush.bf16.msra.mxu0 %v2536
    %3365 = vmatpush.bf16.msra.mxu0 %v2532
    %3366 = vmatpush.bf16.msra.mxu0 %v2528
    %3367 = vmatpush.bf16.msra.mxu0 %v2524
    %3368 = vmatpush.bf16.msra.mxu0 %v2520
    %3369 = vmatpush.bf16.msra.mxu0 %v2516
    %3370 = vmatpush.bf16.msra.mxu0 %v2512
    %3371 = vmatpush.bf16.msra.mxu0 %v2508
    %3372 = vmatmul.bf16.gmra.mxu0 %v3363
    %v3373 = vpop.f32.mrf.mxu0
    %v3374 = vadd.f32 0.0, %v3373
    %v3375 = vpop.f32.mrf.mxu0
    %v3376 = vadd.f32 0.0, %v3375
    %3377 = vdwg.mxu0
    %3378 = vmatpush.bf16.msra.mxu0 %v2537
    %3379 = vmatpush.bf16.msra.mxu0 %v2533
    %3380 = vmatpush.bf16.msra.mxu0 %v2529
    %3381 = vmatpush.bf16.msra.mxu0 %v2525
    %3382 = vmatpush.bf16.msra.mxu0 %v2521
    %3383 = vmatpush.bf16.msra.mxu0 %v2517
    %3384 = vmatpush.bf16.msra.mxu0 %v2513
    %3385 = vmatpush.bf16.msra.mxu0 %v2509
    %3386 = vmatmul.bf16.gmra.mxu0 %v3363
    %v3387 = vpop.f32.mrf.mxu0
    %v3388 = vadd.f32 0.0, %v3387
    %v3389 = vpop.f32.mrf.mxu0
    %v3390 = vadd.f32 0.0, %v3389
    %3391 = vdwg.mxu0
    %3392 = vmatpush.bf16.msra.mxu0 %v2538
    %3393 = vmatpush.bf16.msra.mxu0 %v2534
    %3394 = vmatpush.bf16.msra.mxu0 %v2530
    %3395 = vmatpush.bf16.msra.mxu0 %v2526
    %3396 = vmatpush.bf16.msra.mxu0 %v2522
    %3397 = vmatpush.bf16.msra.mxu0 %v2518
    %3398 = vmatpush.bf16.msra.mxu0 %v2514
    %3399 = vmatpush.bf16.msra.mxu0 %v2510
    %3400 = vmatmul.bf16.gmra.mxu0 %v3363
    %v3401 = vpop.f32.mrf.mxu0
    %v3402 = vadd.f32 0.0, %v3401
    %v3403 = vpop.f32.mrf.mxu0
    %v3404 = vadd.f32 0.0, %v3403
    %3405 = vdwg.mxu0
    %3406 = vmatpush.bf16.msra.mxu0 %v2539
    %3407 = vmatpush.bf16.msra.mxu0 %v2535
    %3408 = vmatpush.bf16.msra.mxu0 %v2531
    %3409 = vmatpush.bf16.msra.mxu0 %v2527
    %3410 = vmatpush.bf16.msra.mxu0 %v2523
    %3411 = vmatpush.bf16.msra.mxu0 %v2519
    %3412 = vmatpush.bf16.msra.mxu0 %v2515
    %3413 = vmatpush.bf16.msra.mxu0 %v2511
    %3414 = vmatmul.bf16.gmra.mxu0 %v3363
    %v3415 = vpop.f32.mrf.mxu0
    %v3416 = vadd.f32 0.0, %v3415
    %v3417 = vpop.f32.mrf.mxu0
    %v3418 = vadd.f32 0.0, %v3417
    %3419 = vdwg.mxu0
    %v3420 = vadd.f32 %v3355, %v3374
    %v3421 = vadd.f32 %v3356, %v3388
    %v3422 = vadd.f32 %v3357, %v3402
    %v3423 = vadd.f32 %v3358, %v3416
    %v3424 = vadd.f32 %v3359, %v3376
    %v3425 = vadd.f32 %v3360, %v3390
    %v3426 = vadd.f32 %v3361, %v3404
    %v3427 = vadd.f32 %v3362, %v3418
    %v3428 = vmul.f32 %v3420, 0.5
    %v3429 = vmul.f32 %v3424, 0.5
    %v3430 = vtanh.pop %v3428
    %v3431 = vtanh.pop %v3429
    %v3432 = vadd.f32 %v3430, 1.0
    %v3433 = vadd.f32 %v3431, 1.0
    %v3434 = vmul.f32 %v3432, 0.5
    %v3435 = vmul.f32 %v3433, 0.5
    %v3436 = vmul.f32 %v3421, 0.5
    %v3437 = vmul.f32 %v3425, 0.5
    %v3438 = vtanh.pop %v3436
    %v3439 = vtanh.pop %v3437
    %v3440 = vadd.f32 %v3438, 1.0
    %v3441 = vadd.f32 %v3439, 1.0
    %v3442 = vmul.f32 %v3440, 0.5
    %v3443 = vmul.f32 %v3441, 0.5
    %v3444 = vtanh.pop %v3422
    %v3445 = vtanh.pop %v3426
    %v3446 = vmul.f32 %v3423, 0.5
    %v3447 = vmul.f32 %v3427, 0.5
    %v3448 = vtanh.pop %v3446
    %v3449 = vtanh.pop %v3447
    %v3450 = vadd.f32 %v3448, 1.0
    %v3451 = vadd.f32 %v3449, 1.0
    %v3452 = vmul.f32 %v3450, 0.5
    %v3453 = vmul.f32 %v3451, 0.5
    %v3454 = vmul.f32 %v3442, %v3344
    %v3455 = vmul.f32 %v3443, %v3345
    %v3456 = vmul.f32 %v3434, %v3444
    %v3457 = vmul.f32 %v3435, %v3445
    %v3458 = vadd.f32 %v3454, %v3456
    %v3459 = vadd.f32 %v3455, %v3457
    %v3460 = vtanh.pop %v3458
    %v3461 = vtanh.pop %v3459
    %v3462 = vmul.f32 %v3452, %v3460
    %v3463 = vmul.f32 %v3453, %v3461
    %v3464 = vmul.f32 %v3353, %v3462
    %v3465 = vmul.f32 %v3354, %v3463
    %v3466 = vsub.f32 1.0, %v3353
    %v3467 = vsub.f32 1.0, %v3354
    %v3468 = vmul.f32 %v3466, %v3338
    %v3469 = vmul.f32 %v3467, %v3339
    %v3470 = vadd.f32 %v3464, %v3468
    %v3471 = vadd.f32 %v3465, %v3469
    %v3472 = vmul.f32 %v3353, %v3458
    %v3473 = vmul.f32 %v3354, %v3459
    %v3474 = vmul.f32 %v3466, %v3344
    %v3475 = vmul.f32 %v3467, %v3345
    %v3476 = vadd.f32 %v3472, %v3474
    %v3477 = vadd.f32 %v3473, %v3475
    %v3478 = vld [vmem:[%s1867] sm:$0xff]
    %v3479 = vld [vmem:[%s1867 + $0x8] sm:$0xff]
    %v3480 = vmul.f32 %v3470, %v3478
    %v3481 = vmul.f32 %v3471, %v3479
    %v3482 = vadd.f32 %v3350, %v3480
    %v3483 = vadd.f32 %v3351, %v3481
    %s3484 = scalar_lea.vmem [#allocation4], 112
    %v3485 = vld [vmem:[%s3484] sm:$0xff]
    %v3486 = vld [vmem:[%s3484 + $0x8] sm:$0xff]
    %v3487 = vld [vmem:[%s1874] sm:$0xff]
    %v3488 = vld [vmem:[%s1874 + $0x8] sm:$0xff]
    %v3489 = vld [vmem:[%s1874 + $0x10] sm:$0xff]
    %v3490 = vld [vmem:[%s1874 + $0x18] sm:$0xff]
    %v3491 = vld [vmem:[%s1874 + $0x20] sm:$0xff]
    %v3492 = vld [vmem:[%s1874 + $0x28] sm:$0xff]
    %v3493 = vld [vmem:[%s1874 + $0x30] sm:$0xff]
    %v3494 = vld [vmem:[%s1874 + $0x38] sm:$0xff]
    %v3495 = vpack.c.bf16 %v3471, %v3470
    %3496 = vmatpush.bf16.msra.mxu0 %v2536
    %3497 = vmatpush.bf16.msra.mxu0 %v2532
    %3498 = vmatpush.bf16.msra.mxu0 %v2528
    %3499 = vmatpush.bf16.msra.mxu0 %v2524
    %3500 = vmatpush.bf16.msra.mxu0 %v2520
    %3501 = vmatpush.bf16.msra.mxu0 %v2516
    %3502 = vmatpush.bf16.msra.mxu0 %v2512
    %3503 = vmatpush.bf16.msra.mxu0 %v2508
    %3504 = vmatmul.bf16.gmra.mxu0 %v3495
    %v3505 = vpop.f32.mrf.mxu0
    %v3506 = vadd.f32 0.0, %v3505
    %v3507 = vpop.f32.mrf.mxu0
    %v3508 = vadd.f32 0.0, %v3507
    %3509 = vdwg.mxu0
    %3510 = vmatpush.bf16.msra.mxu0 %v2537
    %3511 = vmatpush.bf16.msra.mxu0 %v2533
    %3512 = vmatpush.bf16.msra.mxu0 %v2529
    %3513 = vmatpush.bf16.msra.mxu0 %v2525
    %3514 = vmatpush.bf16.msra.mxu0 %v2521
    %3515 = vmatpush.bf16.msra.mxu0 %v2517
    %3516 = vmatpush.bf16.msra.mxu0 %v2513
    %3517 = vmatpush.bf16.msra.mxu0 %v2509
    %3518 = vmatmul.bf16.gmra.mxu0 %v3495
    %v3519 = vpop.f32.mrf.mxu0
    %v3520 = vadd.f32 0.0, %v3519
    %v3521 = vpop.f32.mrf.mxu0
    %v3522 = vadd.f32 0.0, %v3521
    %3523 = vdwg.mxu0
    %3524 = vmatpush.bf16.msra.mxu0 %v2538
    %3525 = vmatpush.bf16.msra.mxu0 %v2534
    %3526 = vmatpush.bf16.msra.mxu0 %v2530
    %3527 = vmatpush.bf16.msra.mxu0 %v2526
    %3528 = vmatpush.bf16.msra.mxu0 %v2522
    %3529 = vmatpush.bf16.msra.mxu0 %v2518
    %3530 = vmatpush.bf16.msra.mxu0 %v2514
    %3531 = vmatpush.bf16.msra.mxu0 %v2510
    %3532 = vmatmul.bf16.gmra.mxu0 %v3495
    %v3533 = vpop.f32.mrf.mxu0
    %v3534 = vadd.f32 0.0, %v3533
    %v3535 = vpop.f32.mrf.mxu0
    %v3536 = vadd.f32 0.0, %v3535
    %3537 = vdwg.mxu0
    %3538 = vmatpush.bf16.msra.mxu0 %v2539
    %3539 = vmatpush.bf16.msra.mxu0 %v2535
    %3540 = vmatpush.bf16.msra.mxu0 %v2531
    %3541 = vmatpush.bf16.msra.mxu0 %v2527
    %3542 = vmatpush.bf16.msra.mxu0 %v2523
    %3543 = vmatpush.bf16.msra.mxu0 %v2519
    %3544 = vmatpush.bf16.msra.mxu0 %v2515
    %3545 = vmatpush.bf16.msra.mxu0 %v2511
    %3546 = vmatmul.bf16.gmra.mxu0 %v3495
    %v3547 = vpop.f32.mrf.mxu0
    %v3548 = vadd.f32 0.0, %v3547
    %v3549 = vpop.f32.mrf.mxu0
    %v3550 = vadd.f32 0.0, %v3549
    %3551 = vdwg.mxu0
    %v3552 = vadd.f32 %v3487, %v3506
    %v3553 = vadd.f32 %v3488, %v3520
    %v3554 = vadd.f32 %v3489, %v3534
    %v3555 = vadd.f32 %v3490, %v3548
    %v3556 = vadd.f32 %v3491, %v3508
    %v3557 = vadd.f32 %v3492, %v3522
    %v3558 = vadd.f32 %v3493, %v3536
    %v3559 = vadd.f32 %v3494, %v3550
    %v3560 = vmul.f32 %v3552, 0.5
    %v3561 = vmul.f32 %v3556, 0.5
    %v3562 = vtanh.pop %v3560
    %v3563 = vtanh.pop %v3561
    %v3564 = vadd.f32 %v3562, 1.0
    %v3565 = vadd.f32 %v3563, 1.0
    %v3566 = vmul.f32 %v3564, 0.5
    %v3567 = vmul.f32 %v3565, 0.5
    %v3568 = vmul.f32 %v3553, 0.5
    %v3569 = vmul.f32 %v3557, 0.5
    %v3570 = vtanh.pop %v3568
    %v3571 = vtanh.pop %v3569
    %v3572 = vadd.f32 %v3570, 1.0
    %v3573 = vadd.f32 %v3571, 1.0
    %v3574 = vmul.f32 %v3572, 0.5
    %v3575 = vmul.f32 %v3573, 0.5
    %v3576 = vtanh.pop %v3554
    %v3577 = vtanh.pop %v3558
    %v3578 = vmul.f32 %v3555, 0.5
    %v3579 = vmul.f32 %v3559, 0.5
    %v3580 = vtanh.pop %v3578
    %v3581 = vtanh.pop %v3579
    %v3582 = vadd.f32 %v3580, 1.0
    %v3583 = vadd.f32 %v3581, 1.0
    %v3584 = vmul.f32 %v3582, 0.5
    %v3585 = vmul.f32 %v3583, 0.5
    %v3586 = vmul.f32 %v3574, %v3476
    %v3587 = vmul.f32 %v3575, %v3477
    %v3588 = vmul.f32 %v3566, %v3576
    %v3589 = vmul.f32 %v3567, %v3577
    %v3590 = vadd.f32 %v3586, %v3588
    %v3591 = vadd.f32 %v3587, %v3589
    %v3592 = vtanh.pop %v3590
    %v3593 = vtanh.pop %v3591
    %v3594 = vmul.f32 %v3584, %v3592
    %v3595 = vmul.f32 %v3585, %v3593
    %v3596 = vmul.f32 %v3485, %v3594
    %v3597 = vmul.f32 %v3486, %v3595
    %v3598 = vsub.f32 1.0, %v3485
    %v3599 = vsub.f32 1.0, %v3486
    %v3600 = vmul.f32 %v3598, %v3470
    %v3601 = vmul.f32 %v3599, %v3471
    %v3602 = vadd.f32 %v3596, %v3600
    %v3603 = vadd.f32 %v3597, %v3601
    %v3604 = vld [vmem:[%s1984] sm:$0xff]
    %v3605 = vld [vmem:[%s1984 + $0x8] sm:$0xff]
    %v3606 = vmul.f32 %v3602, %v3604
    %v3607 = vmul.f32 %v3603, %v3605
    %v3608 = vadd.f32 %v3482, %v3606
    %v3609 = vadd.f32 %v3483, %v3607
    %v3610 = vld [vmem:[#allocation16] sm:$0xff]
    %v3611 = vld [vmem:[#allocation16 + $0x8] sm:$0xff]
    %v3612 = vld [vmem:[#allocation16 + $0x10] sm:$0xff]
    %v3613 = vld [vmem:[#allocation16 + $0x18] sm:$0xff]
    %v3614 = vld [vmem:[#allocation16 + $0x20] sm:$0xff]
    %v3615 = vld [vmem:[#allocation16 + $0x28] sm:$0xff]
    %v3616 = vld [vmem:[#allocation16 + $0x30] sm:$0xff]
    %v3617 = vld [vmem:[#allocation16 + $0x38] sm:$0xff]
    %v3618 = vld [vmem:[#allocation16 + $0x40] sm:$0xff]
    %v3619 = vld [vmem:[#allocation16 + $0x48] sm:$0xff]
    %v3620 = vld [vmem:[#allocation16 + $0x50] sm:$0xff]
    %v3621 = vld [vmem:[#allocation16 + $0x58] sm:$0xff]
    %v3622 = vld [vmem:[#allocation16 + $0x60] sm:$0xff]
    %v3623 = vld [vmem:[#allocation16 + $0x68] sm:$0xff]
    %v3624 = vld [vmem:[#allocation16 + $0x70] sm:$0xff]
    %v3625 = vld [vmem:[#allocation16 + $0x78] sm:$0xff]
    %v3626 = vld [vmem:[%s11] sm:$0x1]
    %v3628 = vperm.slane %v3626, 0
    %3630 = vmatpush.msra.mxu0 %v3625
    %3631 = vmatpush.msra.mxu0 %v3624
    %3632 = vmatpush.msra.mxu0 %v3623
    %3633 = vmatpush.msra.mxu0 %v3622
    %3634 = vmatpush.msra.mxu0 %v3621
    %3635 = vmatpush.msra.mxu0 %v3620
    %3636 = vmatpush.msra.mxu0 %v3619
    %3637 = vmatpush.msra.mxu0 %v3618
    %3638 = vmatpush.msra.mxu0 %v3617
    %3639 = vmatpush.msra.mxu0 %v3616
    %3640 = vmatpush.msra.mxu0 %v3615
    %3641 = vmatpush.msra.mxu0 %v3614
    %3642 = vmatpush.msra.mxu0 %v3613
    %3643 = vmatpush.msra.mxu0 %v3612
    %3644 = vmatpush.msra.mxu0 %v3611
    %3645 = vmatpush.msra.mxu0 %v3610
    %3646 = vmatmul.f32.gmra.mxu0 %v3608
    %v3647 = vpop.f32.mrf.mxu0
    %v3648 = vadd.f32 %v3628, %v3647
    %3649 = vmatmul.f32.gmra.mxu0 %v3609
    %v3650 = vpop.f32.mrf.mxu0
    %v3651 = vadd.f32 %v3628, %v3650
    %3652 = vdwg.mxu0
    %3653 = vst [vmem:[#allocation18] sm:$0xff] %v3648
    %3654 = vst [vmem:[#allocation18 + $0x8] sm:$0xff] %v3651
    // Predicated region
    $region74: #{tpu_custom_call.1} parent=1 // pred_check
      _
    $region75: #{tpu_custom_call.1} parent=1 // pred_check_branch
      %3656 = sbr.rel (0) target = $region77
    $region76: #{tpu_custom_call.1} parent=1 // pred_region
      %3658 = vsyncadd [#allocation9], 0
      %s3659 = sshll.u32 [#allocation18], 4
      %s3660 = int_to_ptr.vmem [resolvable:$true] %s3659
      %s3661 = sshll.u32 %s12, 4
      %s3662 = int_to_ptr.hbm [resolvable:$true] %s3661
      %3667 = dma.vmem_to_hbm [thread:$0]  %s3660, 256, %s3662, [#allocation9], 128, 128, 8
    $region77: #{tpu_custom_call.1} parent=1 // pred_fallthru
      _
    // Predicated region
    $region78: #{tpu_custom_call.1} parent=1 // pred_check
      _
    $region79: #{tpu_custom_call.1} parent=1 // pred_check_branch
      %3669 = sbr.rel (0) target = $region81
    $region80: #{tpu_custom_call.1} parent=1 // pred_region
      %3671 = dma.done [#allocation9], 256
    $region81: #{tpu_custom_call.1} parent=1 // pred_fallthru
      _
    %3672 = vsyncpa [#allocation8], 1
    %3673 = vsyncpa [#allocation11], 1
    %3674 = vsyncpa [#allocation14], 1
    %3675 = vsyncpa [#allocation17], 1
    %3676 = vsyncpa [#allocation9], 1

</llo_original>
